<compile_context>
chip_gen: v6e
topology: v6e:2x2x1
jax: 0.10.0
libtpu: 0.0.40
codegen_flags: <defaults>
</compile_context>

<pallas_src>
import jax
import jax.numpy as jnp
from jax.experimental import pallas as pl
from jax.experimental.pallas import tpu as pltpu

EPS = 1e-5
NEG_SLOPE = 0.2  # act_fn = nn.LeakyReLU(0.2) as used in FusionNet


def _make_fused_kernel(H, W, Cin, Cout):
    inv_hw = 1.0 / float(H * W)

    def conv_in_stage(src_ref, m_ref, p_mat, apply_act):
        # src_ref: (H+2, W*Cs) H-padded, lane-dense activation buffer.
        # m_ref:   (3, W*Cs, W*Cout) banded weights (one matrix per kernel row).
        acc = jnp.dot(src_ref[pl.ds(0, H), :], m_ref[0],
                      preferred_element_type=jnp.float32)
        acc = acc + jnp.dot(src_ref[pl.ds(1, H), :], m_ref[1],
                            preferred_element_type=jnp.float32)
        acc = acc + jnp.dot(src_ref[pl.ds(2, H), :], m_ref[2],
                            preferred_element_type=jnp.float32)

        # InstanceNorm2d (affine=False, biased variance), per channel over H*W.
        # Channel-wise reduction/broadcast done lane-dense via projection P.
        mean_b = jnp.dot(jnp.sum(acc, axis=0, keepdims=True), p_mat,
                         preferred_element_type=jnp.float32) * inv_hw
        centered = acc - mean_b
        var_b = jnp.dot(jnp.sum(centered * centered, axis=0, keepdims=True),
                        p_mat, preferred_element_type=jnp.float32) * inv_hw
        y = centered * jax.lax.rsqrt(var_b + EPS)
        if apply_act:
            y = jnp.where(y > 0, y, NEG_SLOPE * y)  # LeakyReLU(0.2)
        return y

    def kernel(x_ref, m1_ref, m2a_ref, m2b_ref, m2c_ref, m3_ref, p_ref,
               o_ref, xbuf, c1buf, pbuf, qbuf):
        # Zero scratch so rows 0 and H+1 provide the zero padding along H.
        xbuf[...] = jnp.zeros_like(xbuf)
        c1buf[...] = jnp.zeros_like(c1buf)
        pbuf[...] = jnp.zeros_like(pbuf)
        qbuf[...] = jnp.zeros_like(qbuf)

        p_mat = p_ref[...]
        xbuf[pl.ds(1, H), :] = x_ref[0]

        # conv_1: conv + IN + act
        c1 = conv_in_stage(xbuf, m1_ref, p_mat, True)
        c1buf[pl.ds(1, H), :] = c1

        # conv_2: (conv+IN+act) x2, then conv + IN (no act)
        h = conv_in_stage(c1buf, m2a_ref, p_mat, True)
        pbuf[pl.ds(1, H), :] = h
        h = conv_in_stage(pbuf, m2b_ref, p_mat, True)
        qbuf[pl.ds(1, H), :] = h
        c2 = conv_in_stage(qbuf, m2c_ref, p_mat, False)

        # res = conv_1 + conv_2  (reuse pbuf as the padded residual buffer)
        pbuf[pl.ds(1, H), :] = c1 + c2

        # conv_3: conv + IN + act
        out = conv_in_stage(pbuf, m3_ref, p_mat, True)
        o_ref[0] = out.astype(o_ref.dtype)

    return kernel


def _band_weights(w, W):
    """w: (3, 3, Cin, Cout) -> (3, W*Cin, W*Cout) block-banded matrices.

    M[ky, wi*Cin + ci, wo*Cout + co] = w[ky, dx, ci, co] with wi = wo + dx - 1,
    and zero for out-of-range wi (this encodes the zero padding along W).
    """
    dx = jnp.arange(3)[:, None, None]
    wi = jnp.arange(W)[None, :, None]
    wo = jnp.arange(W)[None, None, :]
    sel = (wi == wo + dx - 1).astype(w.dtype)         # (3, W, W)
    m = jnp.einsum('xio,dxcf->dicof', sel, w)         # (3, W, Cin, W, Cout)
    Cin, Cout = w.shape[2], w.shape[3]
    return m.reshape(3, W * Cin, W * Cout)


def _channel_projection(W, Cout, dtype=jnp.float32):
    ch = jnp.arange(W * Cout) % Cout
    return (ch[:, None] == ch[None, :]).astype(dtype)  # (W*Cout, W*Cout)


@jax.jit
def conv_residual_conv(x_nchw, params):
    """Forward pass matching the PyTorch module. Input/output are NCHW."""
    N, Cin, H, W = x_nchw.shape
    Cout = params["w1"].shape[-1]

    # NCHW -> lane-dense (N, H, W*Cin)
    x2d = jnp.transpose(x_nchw, (0, 2, 3, 1)).reshape(N, H, W * Cin)

    m1 = _band_weights(params["w1"], W)
    m2a = _band_weights(params["w2a"], W)
    m2b = _band_weights(params["w2b"], W)
    m2c = _band_weights(params["w2c"], W)
    m3 = _band_weights(params["w3"], W)
    proj = _channel_projection(W, Cout)

    kernel = _make_fused_kernel(H, W, Cin, Cout)

    def wspec(cs):
        return pl.BlockSpec((3, W * cs, W * Cout), lambda n: (0, 0, 0))

    out2d = pl.pallas_call(
        kernel,
        out_shape=jax.ShapeDtypeStruct((N, H, W * Cout), jnp.float32),
        grid=(N,),
        in_specs=[
            pl.BlockSpec((1, H, W * Cin), lambda n: (n, 0, 0)),   # x (per sample)
            wspec(Cin), wspec(Cout), wspec(Cout), wspec(Cout), wspec(Cout),
            pl.BlockSpec((W * Cout, W * Cout), lambda n: (0, 0)),  # P
        ],
        out_specs=pl.BlockSpec((1, H, W * Cout), lambda n: (n, 0, 0)),
        scratch_shapes=[
            pltpu.VMEM((H + 2, W * Cin), jnp.float32),   # padded input
            pltpu.VMEM((H + 2, W * Cout), jnp.float32),  # conv_1 (residual src)
            pltpu.VMEM((H + 2, W * Cout), jnp.float32),  # ping
            pltpu.VMEM((H + 2, W * Cout), jnp.float32),  # pong
        ],
        compiler_params=pltpu.CompilerParams(
            dimension_semantics=("parallel",)),
    )(x2d, m1, m2a, m2b, m2c, m3, proj)

    out = out2d.reshape(N, H, W, Cout)
    return jnp.transpose(out, (0, 3, 1, 2))  # NHWC -> NCHW


def init_params(key, in_dim, out_dim):
    """Deterministic synthetic conv weights, stored as (ky, kx, Cin, Cout).

    Conv biases are omitted on purpose: InstanceNorm2d(affine=False) subtracts
    the per-channel mean, so a per-channel bias is exactly cancelled.
    """
    def conv(k, cin, cout):
        return jax.random.normal(k, (3, 3, cin, cout), jnp.float32) * 0.1

    keys = jax.random.split(key, 5)
    return {
        "w1": conv(keys[0], in_dim, out_dim),     # conv_1
        "w2a": conv(keys[1], out_dim, out_dim),   # conv_2 block 1
        "w2b": conv(keys[2], out_dim, out_dim),   # conv_2 block 2
        "w2c": conv(keys[3], out_dim, out_dim),   # conv_2 final conv + IN
        "w3": conv(keys[4], out_dim, out_dim),    # conv_3
    }


if __name__ == "__main__":
    key = jax.random.PRNGKey(0)
    k_x, k_p = jax.random.split(key)

    N, in_dim, out_dim, H, W = 2, 4, 8, 16, 16
    x = jax.random.normal(k_x, (N, in_dim, H, W), jnp.float32)
    params = init_params(k_p, in_dim, out_dim)

    y = conv_residual_conv(x, params)
    jax.block_until_ready(y)
    assert y.shape == (N, out_dim, H, W), y.shape
    print("KERNEL_OK")
</pallas_src>

<mosaic_0001>
module attributes {stable_mosaic.version = 11 : i64} {
  func.func @kernel(%arg0: i32, %arg1: memref<1x16x64xf32, #tpu.memory_space<vmem>>, %arg2: memref<3x64x128xf32, #tpu.memory_space<vmem>>, %arg3: memref<3x128x128xf32, #tpu.memory_space<vmem>>, %arg4: memref<3x128x128xf32, #tpu.memory_space<vmem>>, %arg5: memref<3x128x128xf32, #tpu.memory_space<vmem>>, %arg6: memref<3x128x128xf32, #tpu.memory_space<vmem>>, %arg7: memref<128x128xf32, #tpu.memory_space<vmem>>, %arg8: memref<1x16x128xf32, #tpu.memory_space<vmem>>, %arg9: memref<18x64xf32, #tpu.memory_space<vmem>>, %arg10: memref<18x128xf32, #tpu.memory_space<vmem>>, %arg11: memref<18x128xf32, #tpu.memory_space<vmem>>, %arg12: memref<18x128xf32, #tpu.memory_space<vmem>>) attributes {dimension_semantics = [#tpu.dimension_semantics<parallel>], iteration_bounds = array<i64: 2>, scalar_prefetch = 0 : i64, scratch_operands = 4 : i64, tpu.core_type = #tpu.core_type<tc>, window_params = [{transform_indices = @transform_0, window_bounds = array<i64: 1, 16, 64>}, {pipeline_mode = #tpu.pipeline_mode<synchronous>, transform_indices = @transform_1, window_bounds = array<i64: 3, 64, 128>}, {pipeline_mode = #tpu.pipeline_mode<synchronous>, transform_indices = @transform_2, window_bounds = array<i64: 3, 128, 128>}, {pipeline_mode = #tpu.pipeline_mode<synchronous>, transform_indices = @transform_3, window_bounds = array<i64: 3, 128, 128>}, {pipeline_mode = #tpu.pipeline_mode<synchronous>, transform_indices = @transform_4, window_bounds = array<i64: 3, 128, 128>}, {pipeline_mode = #tpu.pipeline_mode<synchronous>, transform_indices = @transform_5, window_bounds = array<i64: 3, 128, 128>}, {pipeline_mode = #tpu.pipeline_mode<synchronous>, transform_indices = @transform_6, window_bounds = array<i64: 128, 128>}, {transform_indices = @transform_7, window_bounds = array<i64: 1, 16, 128>}]} {
    %cst = arith.constant 0.000000e+00 : f32
    %0 = vector.broadcast %cst : f32 to vector<18x64xf32>
    %c0 = arith.constant 0 : index
    %c0_0 = arith.constant 0 : index
    %1 = vector.load %arg9[%c0, %c0_0] : memref<18x64xf32, #tpu.memory_space<vmem>>, vector<18x64xf32>
    tpu.vector_store %arg9[%c0, %c0_0], %0 {strides = array<i32>} : memref<18x64xf32, #tpu.memory_space<vmem>>, vector<18x64xf32>,
    %cst_1 = arith.constant 0.000000e+00 : f32
    %2 = vector.broadcast %cst_1 : f32 to vector<18x128xf32>
    %c0_2 = arith.constant 0 : index
    %c0_3 = arith.constant 0 : index
    %3 = vector.load %arg10[%c0_2, %c0_3] : memref<18x128xf32, #tpu.memory_space<vmem>>, vector<18x128xf32>
    tpu.vector_store %arg10[%c0_2, %c0_3], %2 {strides = array<i32>} : memref<18x128xf32, #tpu.memory_space<vmem>>, vector<18x128xf32>,
    %cst_4 = arith.constant 0.000000e+00 : f32
    %4 = vector.broadcast %cst_4 : f32 to vector<18x128xf32>
    %c0_5 = arith.constant 0 : index
    %c0_6 = arith.constant 0 : index
    %5 = vector.load %arg11[%c0_5, %c0_6] : memref<18x128xf32, #tpu.memory_space<vmem>>, vector<18x128xf32>
    tpu.vector_store %arg11[%c0_5, %c0_6], %4 {strides = array<i32>} : memref<18x128xf32, #tpu.memory_space<vmem>>, vector<18x128xf32>,
    %cst_7 = arith.constant 0.000000e+00 : f32
    %6 = vector.broadcast %cst_7 : f32 to vector<18x128xf32>
    %c0_8 = arith.constant 0 : index
    %c0_9 = arith.constant 0 : index
    %7 = vector.load %arg12[%c0_8, %c0_9] : memref<18x128xf32, #tpu.memory_space<vmem>>, vector<18x128xf32>
    tpu.vector_store %arg12[%c0_8, %c0_9], %6 {strides = array<i32>} : memref<18x128xf32, #tpu.memory_space<vmem>>, vector<18x128xf32>,
    %c0_10 = arith.constant 0 : index
    %c0_11 = arith.constant 0 : index
    %8 = vector.load %arg7[%c0_10, %c0_11] : memref<128x128xf32, #tpu.memory_space<vmem>>, vector<128x128xf32>
    %c0_12 = arith.constant 0 : index
    %c0_13 = arith.constant 0 : index
    %c0_14 = arith.constant 0 : index
    %9 = vector.load %arg1[%c0_12, %c0_13, %c0_14] : memref<1x16x64xf32, #tpu.memory_space<vmem>>, vector<1x16x64xf32>
    %10 = vector.shape_cast %9 : vector<1x16x64xf32> to vector<16x64xf32>
    %c1 = arith.constant 1 : index
    %c0_15 = arith.constant 0 : index
    %11 = vector.load %arg9[%c1, %c0_15] : memref<18x64xf32, #tpu.memory_space<vmem>>, vector<16x64xf32>
    tpu.vector_store %arg9[%c1, %c0_15], %10 {strides = array<i32>} : memref<18x64xf32, #tpu.memory_space<vmem>>, vector<16x64xf32>,
    %c0_16 = arith.constant 0 : index
    %c0_17 = arith.constant 0 : index
    %12 = vector.load %arg9[%c0_16, %c0_17] : memref<18x64xf32, #tpu.memory_space<vmem>>, vector<16x64xf32>
    %c0_18 = arith.constant 0 : index
    %c0_19 = arith.constant 0 : index
    %c0_20 = arith.constant 0 : index
    %13 = vector.load %arg2[%c0_18, %c0_19, %c0_20] : memref<3x64x128xf32, #tpu.memory_space<vmem>>, vector<1x64x128xf32>
    %14 = vector.shape_cast %13 : vector<1x64x128xf32> to vector<64x128xf32>
    %cst_21 = arith.constant dense<0.000000e+00> : vector<16x128xf32>
    %15 = tpu.matmul %12, %14, %cst_21 {dimension_numbers = #tpu.dot_dimension_numbers<[1], [0], [0], [1], [0, 0, 1, 1], [], []>} : vector<16x64xf32>, vector<64x128xf32>, vector<16x128xf32> -> vector<16x128xf32>
    %c1_22 = arith.constant 1 : index
    %c0_23 = arith.constant 0 : index
    %16 = vector.load %arg9[%c1_22, %c0_23] : memref<18x64xf32, #tpu.memory_space<vmem>>, vector<16x64xf32>
    %c1_24 = arith.constant 1 : index
    %c0_25 = arith.constant 0 : index
    %c0_26 = arith.constant 0 : index
    %17 = vector.load %arg2[%c1_24, %c0_25, %c0_26] : memref<3x64x128xf32, #tpu.memory_space<vmem>>, vector<1x64x128xf32>
    %18 = vector.shape_cast %17 : vector<1x64x128xf32> to vector<64x128xf32>
    %cst_27 = arith.constant dense<0.000000e+00> : vector<16x128xf32>
    %19 = tpu.matmul %16, %18, %cst_27 {dimension_numbers = #tpu.dot_dimension_numbers<[1], [0], [0], [1], [0, 0, 1, 1], [], []>} : vector<16x64xf32>, vector<64x128xf32>, vector<16x128xf32> -> vector<16x128xf32>
    %20 = arith.addf %15, %19 : vector<16x128xf32>
    %c2 = arith.constant 2 : index
    %c0_28 = arith.constant 0 : index
    %21 = vector.load %arg9[%c2, %c0_28] : memref<18x64xf32, #tpu.memory_space<vmem>>, vector<16x64xf32>
    %c2_29 = arith.constant 2 : index
    %c0_30 = arith.constant 0 : index
    %c0_31 = arith.constant 0 : index
    %22 = vector.load %arg2[%c2_29, %c0_30, %c0_31] : memref<3x64x128xf32, #tpu.memory_space<vmem>>, vector<1x64x128xf32>
    %23 = vector.shape_cast %22 : vector<1x64x128xf32> to vector<64x128xf32>
    %cst_32 = arith.constant dense<0.000000e+00> : vector<16x128xf32>
    %24 = tpu.matmul %21, %23, %cst_32 {dimension_numbers = #tpu.dot_dimension_numbers<[1], [0], [0], [1], [0, 0, 1, 1], [], []>} : vector<16x64xf32>, vector<64x128xf32>, vector<16x128xf32> -> vector<16x128xf32>
    %25 = arith.addf %20, %24 : vector<16x128xf32>
    %cst_33 = arith.constant dense<0.000000e+00> : vector<128xf32>
    %26 = vector.multi_reduction <add>, %25, %cst_33 [0] : vector<16x128xf32> to vector<128xf32>
    %27 = vector.shape_cast %26 : vector<128xf32> to vector<1x128xf32>
    %cst_34 = arith.constant dense<0.000000e+00> : vector<1x128xf32>
    %28 = tpu.matmul %27, %8, %cst_34 {dimension_numbers = #tpu.dot_dimension_numbers<[1], [0], [0], [1], [0, 0, 1, 1], [], []>} : vector<1x128xf32>, vector<128x128xf32>, vector<1x128xf32> -> vector<1x128xf32>
    %cst_35 = arith.constant 3.906250e-03 : f32
    %29 = vector.broadcast %cst_35 : f32 to vector<1x128xf32>
    %30 = arith.mulf %28, %29 : vector<1x128xf32>
    %31 = vector.broadcast %30 : vector<1x128xf32> to vector<16x128xf32>
    %32 = arith.subf %25, %31 : vector<16x128xf32>
    %33 = arith.mulf %32, %32 : vector<16x128xf32>
    %cst_36 = arith.constant dense<0.000000e+00> : vector<128xf32>
    %34 = vector.multi_reduction <add>, %33, %cst_36 [0] : vector<16x128xf32> to vector<128xf32>
    %35 = vector.shape_cast %34 : vector<128xf32> to vector<1x128xf32>
    %cst_37 = arith.constant dense<0.000000e+00> : vector<1x128xf32>
    %36 = tpu.matmul %35, %8, %cst_37 {dimension_numbers = #tpu.dot_dimension_numbers<[1], [0], [0], [1], [0, 0, 1, 1], [], []>} : vector<1x128xf32>, vector<128x128xf32>, vector<1x128xf32> -> vector<1x128xf32>
    %cst_38 = arith.constant 3.906250e-03 : f32
    %37 = vector.broadcast %cst_38 : f32 to vector<1x128xf32>
    %38 = arith.mulf %36, %37 : vector<1x128xf32>
    %cst_39 = arith.constant 9.99999974E-6 : f32
    %39 = vector.broadcast %cst_39 : f32 to vector<1x128xf32>
    %40 = arith.addf %38, %39 : vector<1x128xf32>
    %41 = math.rsqrt %40 : vector<1x128xf32>
    %42 = vector.broadcast %41 : vector<1x128xf32> to vector<16x128xf32>
    %43 = arith.mulf %32, %42 : vector<16x128xf32>
    %cst_40 = arith.constant 0.000000e+00 : f32
    %44 = vector.broadcast %cst_40 : f32 to vector<16x128xf32>
    %45 = arith.cmpf ogt, %43, %44 : vector<16x128xf32>
    %cst_41 = arith.constant 2.000000e-01 : f32
    %46 = vector.broadcast %cst_41 : f32 to vector<16x128xf32>
    %47 = arith.mulf %46, %43 : vector<16x128xf32>
    %48 = arith.select %45, %43, %47 : vector<16x128xi1>, vector<16x128xf32>
    %c1_42 = arith.constant 1 : index
    %c0_43 = arith.constant 0 : index
    %49 = vector.load %arg10[%c1_42, %c0_43] : memref<18x128xf32, #tpu.memory_space<vmem>>, vector<16x128xf32>
    tpu.vector_store %arg10[%c1_42, %c0_43], %48 {strides = array<i32>} : memref<18x128xf32, #tpu.memory_space<vmem>>, vector<16x128xf32>,
    %c0_44 = arith.constant 0 : index
    %c0_45 = arith.constant 0 : index
    %50 = vector.load %arg10[%c0_44, %c0_45] : memref<18x128xf32, #tpu.memory_space<vmem>>, vector<16x128xf32>
    %c0_46 = arith.constant 0 : index
    %c0_47 = arith.constant 0 : index
    %c0_48 = arith.constant 0 : index
    %51 = vector.load %arg3[%c0_46, %c0_47, %c0_48] : memref<3x128x128xf32, #tpu.memory_space<vmem>>, vector<1x128x128xf32>
    %52 = vector.shape_cast %51 : vector<1x128x128xf32> to vector<128x128xf32>
    %cst_49 = arith.constant dense<0.000000e+00> : vector<16x128xf32>
    %53 = tpu.matmul %50, %52, %cst_49 {dimension_numbers = #tpu.dot_dimension_numbers<[1], [0], [0], [1], [0, 0, 1, 1], [], []>} : vector<16x128xf32>, vector<128x128xf32>, vector<16x128xf32> -> vector<16x128xf32>
    %c1_50 = arith.constant 1 : index
    %c0_51 = arith.constant 0 : index
    %54 = vector.load %arg10[%c1_50, %c0_51] : memref<18x128xf32, #tpu.memory_space<vmem>>, vector<16x128xf32>
    %c1_52 = arith.constant 1 : index
    %c0_53 = arith.constant 0 : index
    %c0_54 = arith.constant 0 : index
    %55 = vector.load %arg3[%c1_52, %c0_53, %c0_54] : memref<3x128x128xf32, #tpu.memory_space<vmem>>, vector<1x128x128xf32>
    %56 = vector.shape_cast %55 : vector<1x128x128xf32> to vector<128x128xf32>
    %cst_55 = arith.constant dense<0.000000e+00> : vector<16x128xf32>
    %57 = tpu.matmul %54, %56, %cst_55 {dimension_numbers = #tpu.dot_dimension_numbers<[1], [0], [0], [1], [0, 0, 1, 1], [], []>} : vector<16x128xf32>, vector<128x128xf32>, vector<16x128xf32> -> vector<16x128xf32>
    %58 = arith.addf %53, %57 : vector<16x128xf32>
    %c2_56 = arith.constant 2 : index
    %c0_57 = arith.constant 0 : index
    %59 = vector.load %arg10[%c2_56, %c0_57] : memref<18x128xf32, #tpu.memory_space<vmem>>, vector<16x128xf32>
    %c2_58 = arith.constant 2 : index
    %c0_59 = arith.constant 0 : index
    %c0_60 = arith.constant 0 : index
    %60 = vector.load %arg3[%c2_58, %c0_59, %c0_60] : memref<3x128x128xf32, #tpu.memory_space<vmem>>, vector<1x128x128xf32>
    %61 = vector.shape_cast %60 : vector<1x128x128xf32> to vector<128x128xf32>
    %cst_61 = arith.constant dense<0.000000e+00> : vector<16x128xf32>
    %62 = tpu.matmul %59, %61, %cst_61 {dimension_numbers = #tpu.dot_dimension_numbers<[1], [0], [0], [1], [0, 0, 1, 1], [], []>} : vector<16x128xf32>, vector<128x128xf32>, vector<16x128xf32> -> vector<16x128xf32>
    %63 = arith.addf %58, %62 : vector<16x128xf32>
    %cst_62 = arith.constant dense<0.000000e+00> : vector<128xf32>
    %64 = vector.multi_reduction <add>, %63, %cst_62 [0] : vector<16x128xf32> to vector<128xf32>
    %65 = vector.shape_cast %64 : vector<128xf32> to vector<1x128xf32>
    %cst_63 = arith.constant dense<0.000000e+00> : vector<1x128xf32>
    %66 = tpu.matmul %65, %8, %cst_63 {dimension_numbers = #tpu.dot_dimension_numbers<[1], [0], [0], [1], [0, 0, 1, 1], [], []>} : vector<1x128xf32>, vector<128x128xf32>, vector<1x128xf32> -> vector<1x128xf32>
    %cst_64 = arith.constant 3.906250e-03 : f32
    %67 = vector.broadcast %cst_64 : f32 to vector<1x128xf32>
    %68 = arith.mulf %66, %67 : vector<1x128xf32>
    %69 = vector.broadcast %68 : vector<1x128xf32> to vector<16x128xf32>
    %70 = arith.subf %63, %69 : vector<16x128xf32>
    %71 = arith.mulf %70, %70 : vector<16x128xf32>
    %cst_65 = arith.constant dense<0.000000e+00> : vector<128xf32>
    %72 = vector.multi_reduction <add>, %71, %cst_65 [0] : vector<16x128xf32> to vector<128xf32>
    %73 = vector.shape_cast %72 : vector<128xf32> to vector<1x128xf32>
    %cst_66 = arith.constant dense<0.000000e+00> : vector<1x128xf32>
    %74 = tpu.matmul %73, %8, %cst_66 {dimension_numbers = #tpu.dot_dimension_numbers<[1], [0], [0], [1], [0, 0, 1, 1], [], []>} : vector<1x128xf32>, vector<128x128xf32>, vector<1x128xf32> -> vector<1x128xf32>
    %cst_67 = arith.constant 3.906250e-03 : f32
    %75 = vector.broadcast %cst_67 : f32 to vector<1x128xf32>
    %76 = arith.mulf %74, %75 : vector<1x128xf32>
    %cst_68 = arith.constant 9.99999974E-6 : f32
    %77 = vector.broadcast %cst_68 : f32 to vector<1x128xf32>
    %78 = arith.addf %76, %77 : vector<1x128xf32>
    %79 = math.rsqrt %78 : vector<1x128xf32>
    %80 = vector.broadcast %79 : vector<1x128xf32> to vector<16x128xf32>
    %81 = arith.mulf %70, %80 : vector<16x128xf32>
    %cst_69 = arith.constant 0.000000e+00 : f32
    %82 = vector.broadcast %cst_69 : f32 to vector<16x128xf32>
    %83 = arith.cmpf ogt, %81, %82 : vector<16x128xf32>
    %cst_70 = arith.constant 2.000000e-01 : f32
    %84 = vector.broadcast %cst_70 : f32 to vector<16x128xf32>
    %85 = arith.mulf %84, %81 : vector<16x128xf32>
    %86 = arith.select %83, %81, %85 : vector<16x128xi1>, vector<16x128xf32>
    %c1_71 = arith.constant 1 : index
    %c0_72 = arith.constant 0 : index
    %87 = vector.load %arg11[%c1_71, %c0_72] : memref<18x128xf32, #tpu.memory_space<vmem>>, vector<16x128xf32>
    tpu.vector_store %arg11[%c1_71, %c0_72], %86 {strides = array<i32>} : memref<18x128xf32, #tpu.memory_space<vmem>>, vector<16x128xf32>,
    %c0_73 = arith.constant 0 : index
    %c0_74 = arith.constant 0 : index
    %88 = vector.load %arg11[%c0_73, %c0_74] : memref<18x128xf32, #tpu.memory_space<vmem>>, vector<16x128xf32>
    %c0_75 = arith.constant 0 : index
    %c0_76 = arith.constant 0 : index
    %c0_77 = arith.constant 0 : index
    %89 = vector.load %arg4[%c0_75, %c0_76, %c0_77] : memref<3x128x128xf32, #tpu.memory_space<vmem>>, vector<1x128x128xf32>
    %90 = vector.shape_cast %89 : vector<1x128x128xf32> to vector<128x128xf32>
    %cst_78 = arith.constant dense<0.000000e+00> : vector<16x128xf32>
    %91 = tpu.matmul %88, %90, %cst_78 {dimension_numbers = #tpu.dot_dimension_numbers<[1], [0], [0], [1], [0, 0, 1, 1], [], []>} : vector<16x128xf32>, vector<128x128xf32>, vector<16x128xf32> -> vector<16x128xf32>
    %c1_79 = arith.constant 1 : index
    %c0_80 = arith.constant 0 : index
    %92 = vector.load %arg11[%c1_79, %c0_80] : memref<18x128xf32, #tpu.memory_space<vmem>>, vector<16x128xf32>
    %c1_81 = arith.constant 1 : index
    %c0_82 = arith.constant 0 : index
    %c0_83 = arith.constant 0 : index
    %93 = vector.load %arg4[%c1_81, %c0_82, %c0_83] : memref<3x128x128xf32, #tpu.memory_space<vmem>>, vector<1x128x128xf32>
    %94 = vector.shape_cast %93 : vector<1x128x128xf32> to vector<128x128xf32>
    %cst_84 = arith.constant dense<0.000000e+00> : vector<16x128xf32>
    %95 = tpu.matmul %92, %94, %cst_84 {dimension_numbers = #tpu.dot_dimension_numbers<[1], [0], [0], [1], [0, 0, 1, 1], [], []>} : vector<16x128xf32>, vector<128x128xf32>, vector<16x128xf32> -> vector<16x128xf32>
    %96 = arith.addf %91, %95 : vector<16x128xf32>
    %c2_85 = arith.constant 2 : index
    %c0_86 = arith.constant 0 : index
    %97 = vector.load %arg11[%c2_85, %c0_86] : memref<18x128xf32, #tpu.memory_space<vmem>>, vector<16x128xf32>
    %c2_87 = arith.constant 2 : index
    %c0_88 = arith.constant 0 : index
    %c0_89 = arith.constant 0 : index
    %98 = vector.load %arg4[%c2_87, %c0_88, %c0_89] : memref<3x128x128xf32, #tpu.memory_space<vmem>>, vector<1x128x128xf32>
    %99 = vector.shape_cast %98 : vector<1x128x128xf32> to vector<128x128xf32>
    %cst_90 = arith.constant dense<0.000000e+00> : vector<16x128xf32>
    %100 = tpu.matmul %97, %99, %cst_90 {dimension_numbers = #tpu.dot_dimension_numbers<[1], [0], [0], [1], [0, 0, 1, 1], [], []>} : vector<16x128xf32>, vector<128x128xf32>, vector<16x128xf32> -> vector<16x128xf32>
    %101 = arith.addf %96, %100 : vector<16x128xf32>
    %cst_91 = arith.constant dense<0.000000e+00> : vector<128xf32>
    %102 = vector.multi_reduction <add>, %101, %cst_91 [0] : vector<16x128xf32> to vector<128xf32>
    %103 = vector.shape_cast %102 : vector<128xf32> to vector<1x128xf32>
    %cst_92 = arith.constant dense<0.000000e+00> : vector<1x128xf32>
    %104 = tpu.matmul %103, %8, %cst_92 {dimension_numbers = #tpu.dot_dimension_numbers<[1], [0], [0], [1], [0, 0, 1, 1], [], []>} : vector<1x128xf32>, vector<128x128xf32>, vector<1x128xf32> -> vector<1x128xf32>
    %cst_93 = arith.constant 3.906250e-03 : f32
    %105 = vector.broadcast %cst_93 : f32 to vector<1x128xf32>
    %106 = arith.mulf %104, %105 : vector<1x128xf32>
    %107 = vector.broadcast %106 : vector<1x128xf32> to vector<16x128xf32>
    %108 = arith.subf %101, %107 : vector<16x128xf32>
    %109 = arith.mulf %108, %108 : vector<16x128xf32>
    %cst_94 = arith.constant dense<0.000000e+00> : vector<128xf32>
    %110 = vector.multi_reduction <add>, %109, %cst_94 [0] : vector<16x128xf32> to vector<128xf32>
    %111 = vector.shape_cast %110 : vector<128xf32> to vector<1x128xf32>
    %cst_95 = arith.constant dense<0.000000e+00> : vector<1x128xf32>
    %112 = tpu.matmul %111, %8, %cst_95 {dimension_numbers = #tpu.dot_dimension_numbers<[1], [0], [0], [1], [0, 0, 1, 1], [], []>} : vector<1x128xf32>, vector<128x128xf32>, vector<1x128xf32> -> vector<1x128xf32>
    %cst_96 = arith.constant 3.906250e-03 : f32
    %113 = vector.broadcast %cst_96 : f32 to vector<1x128xf32>
    %114 = arith.mulf %112, %113 : vector<1x128xf32>
    %cst_97 = arith.constant 9.99999974E-6 : f32
    %115 = vector.broadcast %cst_97 : f32 to vector<1x128xf32>
    %116 = arith.addf %114, %115 : vector<1x128xf32>
    %117 = math.rsqrt %116 : vector<1x128xf32>
    %118 = vector.broadcast %117 : vector<1x128xf32> to vector<16x128xf32>
    %119 = arith.mulf %108, %118 : vector<16x128xf32>
    %cst_98 = arith.constant 0.000000e+00 : f32
    %120 = vector.broadcast %cst_98 : f32 to vector<16x128xf32>
    %121 = arith.cmpf ogt, %119, %120 : vector<16x128xf32>
    %cst_99 = arith.constant 2.000000e-01 : f32
    %122 = vector.broadcast %cst_99 : f32 to vector<16x128xf32>
    %123 = arith.mulf %122, %119 : vector<16x128xf32>
    %124 = arith.select %121, %119, %123 : vector<16x128xi1>, vector<16x128xf32>
    %c1_100 = arith.constant 1 : index
    %c0_101 = arith.constant 0 : index
    %125 = vector.load %arg12[%c1_100, %c0_101] : memref<18x128xf32, #tpu.memory_space<vmem>>, vector<16x128xf32>
    tpu.vector_store %arg12[%c1_100, %c0_101], %124 {strides = array<i32>} : memref<18x128xf32, #tpu.memory_space<vmem>>, vector<16x128xf32>,
    %c0_102 = arith.constant 0 : index
    %c0_103 = arith.constant 0 : index
    %126 = vector.load %arg12[%c0_102, %c0_103] : memref<18x128xf32, #tpu.memory_space<vmem>>, vector<16x128xf32>
    %c0_104 = arith.constant 0 : index
    %c0_105 = arith.constant 0 : index
    %c0_106 = arith.constant 0 : index
    %127 = vector.load %arg5[%c0_104, %c0_105, %c0_106] : memref<3x128x128xf32, #tpu.memory_space<vmem>>, vector<1x128x128xf32>
    %128 = vector.shape_cast %127 : vector<1x128x128xf32> to vector<128x128xf32>
    %cst_107 = arith.constant dense<0.000000e+00> : vector<16x128xf32>
    %129 = tpu.matmul %126, %128, %cst_107 {dimension_numbers = #tpu.dot_dimension_numbers<[1], [0], [0], [1], [0, 0, 1, 1], [], []>} : vector<16x128xf32>, vector<128x128xf32>, vector<16x128xf32> -> vector<16x128xf32>
    %c1_108 = arith.constant 1 : index
    %c0_109 = arith.constant 0 : index
    %130 = vector.load %arg12[%c1_108, %c0_109] : memref<18x128xf32, #tpu.memory_space<vmem>>, vector<16x128xf32>
    %c1_110 = arith.constant 1 : index
    %c0_111 = arith.constant 0 : index
    %c0_112 = arith.constant 0 : index
    %131 = vector.load %arg5[%c1_110, %c0_111, %c0_112] : memref<3x128x128xf32, #tpu.memory_space<vmem>>, vector<1x128x128xf32>
    %132 = vector.shape_cast %131 : vector<1x128x128xf32> to vector<128x128xf32>
    %cst_113 = arith.constant dense<0.000000e+00> : vector<16x128xf32>
    %133 = tpu.matmul %130, %132, %cst_113 {dimension_numbers = #tpu.dot_dimension_numbers<[1], [0], [0], [1], [0, 0, 1, 1], [], []>} : vector<16x128xf32>, vector<128x128xf32>, vector<16x128xf32> -> vector<16x128xf32>
    %134 = arith.addf %129, %133 : vector<16x128xf32>
    %c2_114 = arith.constant 2 : index
    %c0_115 = arith.constant 0 : index
    %135 = vector.load %arg12[%c2_114, %c0_115] : memref<18x128xf32, #tpu.memory_space<vmem>>, vector<16x128xf32>
    %c2_116 = arith.constant 2 : index
    %c0_117 = arith.constant 0 : index
    %c0_118 = arith.constant 0 : index
    %136 = vector.load %arg5[%c2_116, %c0_117, %c0_118] : memref<3x128x128xf32, #tpu.memory_space<vmem>>, vector<1x128x128xf32>
    %137 = vector.shape_cast %136 : vector<1x128x128xf32> to vector<128x128xf32>
    %cst_119 = arith.constant dense<0.000000e+00> : vector<16x128xf32>
    %138 = tpu.matmul %135, %137, %cst_119 {dimension_numbers = #tpu.dot_dimension_numbers<[1], [0], [0], [1], [0, 0, 1, 1], [], []>} : vector<16x128xf32>, vector<128x128xf32>, vector<16x128xf32> -> vector<16x128xf32>
    %139 = arith.addf %134, %138 : vector<16x128xf32>
    %cst_120 = arith.constant dense<0.000000e+00> : vector<128xf32>
    %140 = vector.multi_reduction <add>, %139, %cst_120 [0] : vector<16x128xf32> to vector<128xf32>
    %141 = vector.shape_cast %140 : vector<128xf32> to vector<1x128xf32>
    %cst_121 = arith.constant dense<0.000000e+00> : vector<1x128xf32>
    %142 = tpu.matmul %141, %8, %cst_121 {dimension_numbers = #tpu.dot_dimension_numbers<[1], [0], [0], [1], [0, 0, 1, 1], [], []>} : vector<1x128xf32>, vector<128x128xf32>, vector<1x128xf32> -> vector<1x128xf32>
    %cst_122 = arith.constant 3.906250e-03 : f32
    %143 = vector.broadcast %cst_122 : f32 to vector<1x128xf32>
    %144 = arith.mulf %142, %143 : vector<1x128xf32>
    %145 = vector.broadcast %144 : vector<1x128xf32> to vector<16x128xf32>
    %146 = arith.subf %139, %145 : vector<16x128xf32>
    %147 = arith.mulf %146, %146 : vector<16x128xf32>
    %cst_123 = arith.constant dense<0.000000e+00> : vector<128xf32>
    %148 = vector.multi_reduction <add>, %147, %cst_123 [0] : vector<16x128xf32> to vector<128xf32>
    %149 = vector.shape_cast %148 : vector<128xf32> to vector<1x128xf32>
    %cst_124 = arith.constant dense<0.000000e+00> : vector<1x128xf32>
    %150 = tpu.matmul %149, %8, %cst_124 {dimension_numbers = #tpu.dot_dimension_numbers<[1], [0], [0], [1], [0, 0, 1, 1], [], []>} : vector<1x128xf32>, vector<128x128xf32>, vector<1x128xf32> -> vector<1x128xf32>
    %cst_125 = arith.constant 3.906250e-03 : f32
    %151 = vector.broadcast %cst_125 : f32 to vector<1x128xf32>
    %152 = arith.mulf %150, %151 : vector<1x128xf32>
    %cst_126 = arith.constant 9.99999974E-6 : f32
    %153 = vector.broadcast %cst_126 : f32 to vector<1x128xf32>
    %154 = arith.addf %152, %153 : vector<1x128xf32>
    %155 = math.rsqrt %154 : vector<1x128xf32>
    %156 = vector.broadcast %155 : vector<1x128xf32> to vector<16x128xf32>
    %157 = arith.mulf %146, %156 : vector<16x128xf32>
    %158 = arith.addf %48, %157 : vector<16x128xf32>
    %c1_127 = arith.constant 1 : index
    %c0_128 = arith.constant 0 : index
    %159 = vector.load %arg11[%c1_127, %c0_128] : memref<18x128xf32, #tpu.memory_space<vmem>>, vector<16x128xf32>
    tpu.vector_store %arg11[%c1_127, %c0_128], %158 {strides = array<i32>} : memref<18x128xf32, #tpu.memory_space<vmem>>, vector<16x128xf32>,
    %c0_129 = arith.constant 0 : index
    %c0_130 = arith.constant 0 : index
    %160 = vector.load %arg11[%c0_129, %c0_130] : memref<18x128xf32, #tpu.memory_space<vmem>>, vector<16x128xf32>
    %c0_131 = arith.constant 0 : index
    %c0_132 = arith.constant 0 : index
    %c0_133 = arith.constant 0 : index
    %161 = vector.load %arg6[%c0_131, %c0_132, %c0_133] : memref<3x128x128xf32, #tpu.memory_space<vmem>>, vector<1x128x128xf32>
    %162 = vector.shape_cast %161 : vector<1x128x128xf32> to vector<128x128xf32>
    %cst_134 = arith.constant dense<0.000000e+00> : vector<16x128xf32>
    %163 = tpu.matmul %160, %162, %cst_134 {dimension_numbers = #tpu.dot_dimension_numbers<[1], [0], [0], [1], [0, 0, 1, 1], [], []>} : vector<16x128xf32>, vector<128x128xf32>, vector<16x128xf32> -> vector<16x128xf32>
    %c1_135 = arith.constant 1 : index
    %c0_136 = arith.constant 0 : index
    %164 = vector.load %arg11[%c1_135, %c0_136] : memref<18x128xf32, #tpu.memory_space<vmem>>, vector<16x128xf32>
    %c1_137 = arith.constant 1 : index
    %c0_138 = arith.constant 0 : index
    %c0_139 = arith.constant 0 : index
    %165 = vector.load %arg6[%c1_137, %c0_138, %c0_139] : memref<3x128x128xf32, #tpu.memory_space<vmem>>, vector<1x128x128xf32>
    %166 = vector.shape_cast %165 : vector<1x128x128xf32> to vector<128x128xf32>
    %cst_140 = arith.constant dense<0.000000e+00> : vector<16x128xf32>
    %167 = tpu.matmul %164, %166, %cst_140 {dimension_numbers = #tpu.dot_dimension_numbers<[1], [0], [0], [1], [0, 0, 1, 1], [], []>} : vector<16x128xf32>, vector<128x128xf32>, vector<16x128xf32> -> vector<16x128xf32>
    %168 = arith.addf %163, %167 : vector<16x128xf32>
    %c2_141 = arith.constant 2 : index
    %c0_142 = arith.constant 0 : index
    %169 = vector.load %arg11[%c2_141, %c0_142] : memref<18x128xf32, #tpu.memory_space<vmem>>, vector<16x128xf32>
    %c2_143 = arith.constant 2 : index
    %c0_144 = arith.constant 0 : index
    %c0_145 = arith.constant 0 : index
    %170 = vector.load %arg6[%c2_143, %c0_144, %c0_145] : memref<3x128x128xf32, #tpu.memory_space<vmem>>, vector<1x128x128xf32>
    %171 = vector.shape_cast %170 : vector<1x128x128xf32> to vector<128x128xf32>
    %cst_146 = arith.constant dense<0.000000e+00> : vector<16x128xf32>
    %172 = tpu.matmul %169, %171, %cst_146 {dimension_numbers = #tpu.dot_dimension_numbers<[1], [0], [0], [1], [0, 0, 1, 1], [], []>} : vector<16x128xf32>, vector<128x128xf32>, vector<16x128xf32> -> vector<16x128xf32>
    %173 = arith.addf %168, %172 : vector<16x128xf32>
    %cst_147 = arith.constant dense<0.000000e+00> : vector<128xf32>
    %174 = vector.multi_reduction <add>, %173, %cst_147 [0] : vector<16x128xf32> to vector<128xf32>
    %175 = vector.shape_cast %174 : vector<128xf32> to vector<1x128xf32>
    %cst_148 = arith.constant dense<0.000000e+00> : vector<1x128xf32>
    %176 = tpu.matmul %175, %8, %cst_148 {dimension_numbers = #tpu.dot_dimension_numbers<[1], [0], [0], [1], [0, 0, 1, 1], [], []>} : vector<1x128xf32>, vector<128x128xf32>, vector<1x128xf32> -> vector<1x128xf32>
    %cst_149 = arith.constant 3.906250e-03 : f32
    %177 = vector.broadcast %cst_149 : f32 to vector<1x128xf32>
    %178 = arith.mulf %176, %177 : vector<1x128xf32>
    %179 = vector.broadcast %178 : vector<1x128xf32> to vector<16x128xf32>
    %180 = arith.subf %173, %179 : vector<16x128xf32>
    %181 = arith.mulf %180, %180 : vector<16x128xf32>
    %cst_150 = arith.constant dense<0.000000e+00> : vector<128xf32>
    %182 = vector.multi_reduction <add>, %181, %cst_150 [0] : vector<16x128xf32> to vector<128xf32>
    %183 = vector.shape_cast %182 : vector<128xf32> to vector<1x128xf32>
    %cst_151 = arith.constant dense<0.000000e+00> : vector<1x128xf32>
    %184 = tpu.matmul %183, %8, %cst_151 {dimension_numbers = #tpu.dot_dimension_numbers<[1], [0], [0], [1], [0, 0, 1, 1], [], []>} : vector<1x128xf32>, vector<128x128xf32>, vector<1x128xf32> -> vector<1x128xf32>
    %cst_152 = arith.constant 3.906250e-03 : f32
    %185 = vector.broadcast %cst_152 : f32 to vector<1x128xf32>
    %186 = arith.mulf %184, %185 : vector<1x128xf32>
    %cst_153 = arith.constant 9.99999974E-6 : f32
    %187 = vector.broadcast %cst_153 : f32 to vector<1x128xf32>
    %188 = arith.addf %186, %187 : vector<1x128xf32>
    %189 = math.rsqrt %188 : vector<1x128xf32>
    %190 = vector.broadcast %189 : vector<1x128xf32> to vector<16x128xf32>
    %191 = arith.mulf %180, %190 : vector<16x128xf32>
    %cst_154 = arith.constant 0.000000e+00 : f32
    %192 = vector.broadcast %cst_154 : f32 to vector<16x128xf32>
    %193 = arith.cmpf ogt, %191, %192 : vector<16x128xf32>
    %cst_155 = arith.constant 2.000000e-01 : f32
    %194 = vector.broadcast %cst_155 : f32 to vector<16x128xf32>
    %195 = arith.mulf %194, %191 : vector<16x128xf32>
    %196 = arith.select %193, %191, %195 : vector<16x128xi1>, vector<16x128xf32>
    %c0_156 = arith.constant 0 : index
    %c0_157 = arith.constant 0 : index
    %c0_158 = arith.constant 0 : index
    %197 = vector.load %arg8[%c0_156, %c0_157, %c0_158] : memref<1x16x128xf32, #tpu.memory_space<vmem>>, vector<1x16x128xf32>
    %198 = vector.shape_cast %197 : vector<1x16x128xf32> to vector<16x128xf32>
    %199 = vector.shape_cast %196 : vector<16x128xf32> to vector<1x16x128xf32>
    tpu.vector_store %arg8[%c0_156, %c0_157, %c0_158], %199 {strides = array<i32>} : memref<1x16x128xf32, #tpu.memory_space<vmem>>, vector<1x16x128xf32>,
    return
  }
  func.func @transform_0(%arg0: i32) -> (i32, i32, i32) {
    %c0_i32 = arith.constant 0 : i32
    %c0_i32_0 = arith.constant 0 : i32
    %c0_i32_1 = arith.constant 0 : i32
    return %arg0, %c0_i32, %c0_i32_0 : i32, i32, i32
  }
  func.func @transform_1(%arg0: i32) -> (i32, i32, i32) {
    %c0_i32 = arith.constant 0 : i32
    %c0_i32_0 = arith.constant 0 : i32
    %c0_i32_1 = arith.constant 0 : i32
    %c0_i32_2 = arith.constant 0 : i32
    return %c0_i32, %c0_i32_0, %c0_i32_1 : i32, i32, i32
  }
  func.func @transform_2(%arg0: i32) -> (i32, i32, i32) {
    %c0_i32 = arith.constant 0 : i32
    %c0_i32_0 = arith.constant 0 : i32
    %c0_i32_1 = arith.constant 0 : i32
    %c0_i32_2 = arith.constant 0 : i32
    return %c0_i32, %c0_i32_0, %c0_i32_1 : i32, i32, i32
  }
  func.func @transform_3(%arg0: i32) -> (i32, i32, i32) {
    %c0_i32 = arith.constant 0 : i32
    %c0_i32_0 = arith.constant 0 : i32
    %c0_i32_1 = arith.constant 0 : i32
    %c0_i32_2 = arith.constant 0 : i32
    return %c0_i32, %c0_i32_0, %c0_i32_1 : i32, i32, i32
  }
  func.func @transform_4(%arg0: i32) -> (i32, i32, i32) {
    %c0_i32 = arith.constant 0 : i32
    %c0_i32_0 = arith.constant 0 : i32
    %c0_i32_1 = arith.constant 0 : i32
    %c0_i32_2 = arith.constant 0 : i32
    return %c0_i32, %c0_i32_0, %c0_i32_1 : i32, i32, i32
  }
  func.func @transform_5(%arg0: i32) -> (i32, i32, i32) {
    %c0_i32 = arith.constant 0 : i32
    %c0_i32_0 = arith.constant 0 : i32
    %c0_i32_1 = arith.constant 0 : i32
    %c0_i32_2 = arith.constant 0 : i32
    return %c0_i32, %c0_i32_0, %c0_i32_1 : i32, i32, i32
  }
  func.func @transform_6(%arg0: i32) -> (i32, i32) {
    %c0_i32 = arith.constant 0 : i32
    %c0_i32_0 = arith.constant 0 : i32
    %c0_i32_1 = arith.constant 0 : i32
    return %c0_i32, %c0_i32_0 : i32, i32
  }
  func.func @transform_7(%arg0: i32) -> (i32, i32, i32) {
    %c0_i32 = arith.constant 0 : i32
    %c0_i32_0 = arith.constant 0 : i32
    %c0_i32_1 = arith.constant 0 : i32
    return %arg0, %c0_i32, %c0_i32_0 : i32, i32, i32
  }
}

</mosaic_0001>

<llo_original>
// kernel: conv_residual_conv.1
$region0: #{conv_residual_conv.1}
  #allocation0 [shape = 'u32[]', space=smem, size = 0x4, offset = 0x4, fixed_abs, tag = 'smem constant byte address 0x4 - core index']
  #allocation1 [shape = 'u32[144,128]{1,0:T(1,128)}', space=vmem, size = 0x12000, scoped, tag = 'internal scratch']
  #allocation2 [shape = 'f32[18,64]{1,0:T(8,128)}', space=vmem, size = 0x3000, scoped, tag = 'scratch operand']
  #allocation3 [shape = 'f32[18,128]{1,0:T(8,128)}', space=vmem, size = 0x3000, scoped, tag = 'scratch operand']
  #allocation4 [shape = 'f32[18,128]{1,0:T(8,128)}', space=vmem, size = 0x3000, scoped, tag = 'scratch operand']
  #allocation5 [shape = 'f32[18,128]{1,0:T(8,128)}', space=vmem, size = 0x3000, scoped, tag = 'scratch operand']
  %s0 = inlined_call_operand.vmem [shape: f32[2,16,64], index: 0, kind: input, shape index: {}]
  %s1 = inlined_call_operand.vmem [shape: f32[3,64,128], index: 1, kind: input, shape index: {}]
  %s2 = inlined_call_operand.vmem [shape: f32[3,128,128], index: 2, kind: input, shape index: {}]
  %s3 = inlined_call_operand.vmem [shape: f32[3,128,128], index: 3, kind: input, shape index: {}]
  %s4 = inlined_call_operand.vmem [shape: f32[3,128,128], index: 4, kind: input, shape index: {}]
  %s5 = inlined_call_operand.vmem [shape: f32[3,128,128], index: 5, kind: input, shape index: {}]
  %s6 = inlined_call_operand.vmem [shape: f32[128,128], index: 6, kind: input, shape index: {}]
  %s7 = inlined_call_operand.vmem [shape: f32[2,16,128], index: 7, kind: output, shape index: {}]
  %s8 = sld [smem:[#allocation0]]
  $region61: #{conv_residual_conv.1} parent=0
    _
  %s10 = ssub.s32 1, %s8
  %s11 = scalar_select 0, %s10, %s8
  loop: start=0, step=1, limit=4
  $region2: #{conv_residual_conv.1} parent=0 // loop_pre_header
    _
  $region3: #{conv_residual_conv.1} parent=0 // loop_header
    %s13 = sphi 0, %s17
    %p14 = scmp.ge.s32.totalorder %s13, 4
    %s23 = sphi 0, %s25
    %s26 = sphi 0, %s23
    %s27 = sphi 0, %s26
    %s43 = sphi 0, %s27
    %s47 = sphi 0, %s47
    %s49 = sphi 0, %s47
    %s50 = sphi 0, %s49
    %s64 = sphi 0, %s50
    %s68 = sphi 0, %s68
    %s70 = sphi 0, %s68
    %s71 = sphi 0, %s70
    %s85 = sphi 0, %s71
    %s89 = sphi 0, %s89
    %s91 = sphi 0, %s89
    %s92 = sphi 0, %s91
    %s106 = sphi 0, %s92
    %s110 = sphi 0, %s110
    %s112 = sphi 0, %s110
    %s113 = sphi 0, %s112
    %s127 = sphi 0, %s113
    %s131 = sphi 0, %s131
    %s133 = sphi 0, %s131
    %s134 = sphi 0, %s133
    %s148 = sphi 0, %s134
    %s152 = sphi 0, %s152
    %s154 = sphi 0, %s152
    %s155 = sphi 0, %s154
    %s169 = sphi 0, %s155
    %s175 = sphi 0, %s177
    %s178 = sphi 0, %s175
    %s179 = sphi 0, %s178
    %s195 = sphi 0, %s179
  $region4: #{conv_residual_conv.1} parent=0 // loop_header_branch
    %16 = sbr.rel (%p14) target = $region8
  $region5: #{conv_residual_conv.1} parent=0 // loop_body
    %s18 = ssub.s32 %s13, 1
    %s19 = ssub.s32 %s13, 2
    %s20 = sadd.s32 %s13, 1
    %s21 = ssub.s32 %s13, %s20
    %p22 = scmp.eq.s32.totalorder %s21, 0
    %s24 = sadd.s32 %s23, 1
    %s25 = scalar_select %p22, %s23, %s24
    %p28 = pneg %p22
    %p29 = scmp.eq.s32.totalorder %s13, 1
    %p30 = por %p28, %p29
    %p31 = scmp.ne.s32.totalorder %s23, %s26
    %p32 = scmp.eq.s32.totalorder %s13, 0
    %p33 = por %p31, %p32
    %p34 = scmp.ne.s32.totalorder %s23, %s26
    %p35 = scmp.eq.s32.totalorder %s18, 1
    %p36 = por %p34, %p35
    %p37 = scmp.ne.s32.totalorder %s26, %s27
    %p38 = scmp.eq.s32.totalorder %s18, 0
    %p39 = por %p37, %p38
    %p40 = scmp.ne.s32.totalorder %s26, %s27
    %p41 = scmp.eq.s32.totalorder %s19, 1
    %p42 = por %p40, %p41
    %p44 = scmp.ne.s32.totalorder %s27, %s43
    %p45 = scmp.eq.s32.totalorder %s19, 0
    %p46 = por %p44, %p45
    %s48 = sadd.s32 %s47, 1
    %p51 = scmp.eq.s32.totalorder %s13, 1
    %p52 = scmp.ne.s32.totalorder %s47, %s49
    %p53 = scmp.eq.s32.totalorder %s13, 0
    %p54 = por %p52, %p53
    %p55 = scmp.ne.s32.totalorder %s47, %s49
    %p56 = scmp.eq.s32.totalorder %s18, 1
    %p57 = por %p55, %p56
    %p58 = scmp.ne.s32.totalorder %s49, %s50
    %p59 = scmp.eq.s32.totalorder %s18, 0
    %p60 = por %p58, %p59
    %p61 = scmp.ne.s32.totalorder %s49, %s50
    %p62 = scmp.eq.s32.totalorder %s19, 1
    %p63 = por %p61, %p62
    %p65 = scmp.ne.s32.totalorder %s50, %s64
    %p66 = scmp.eq.s32.totalorder %s19, 0
    %p67 = por %p65, %p66
    %s69 = sadd.s32 %s68, 1
    %p72 = scmp.eq.s32.totalorder %s13, 1
    %p73 = scmp.ne.s32.totalorder %s68, %s70
    %p74 = scmp.eq.s32.totalorder %s13, 0
    %p75 = por %p73, %p74
    %p76 = scmp.ne.s32.totalorder %s68, %s70
    %p77 = scmp.eq.s32.totalorder %s18, 1
    %p78 = por %p76, %p77
    %p79 = scmp.ne.s32.totalorder %s70, %s71
    %p80 = scmp.eq.s32.totalorder %s18, 0
    %p81 = por %p79, %p80
    %p82 = scmp.ne.s32.totalorder %s70, %s71
    %p83 = scmp.eq.s32.totalorder %s19, 1
    %p84 = por %p82, %p83
    %p86 = scmp.ne.s32.totalorder %s71, %s85
    %p87 = scmp.eq.s32.totalorder %s19, 0
    %p88 = por %p86, %p87
    %s90 = sadd.s32 %s89, 1
    %p93 = scmp.eq.s32.totalorder %s13, 1
    %p94 = scmp.ne.s32.totalorder %s89, %s91
    %p95 = scmp.eq.s32.totalorder %s13, 0
    %p96 = por %p94, %p95
    %p97 = scmp.ne.s32.totalorder %s89, %s91
    %p98 = scmp.eq.s32.totalorder %s18, 1
    %p99 = por %p97, %p98
    %p100 = scmp.ne.s32.totalorder %s91, %s92
    %p101 = scmp.eq.s32.totalorder %s18, 0
    %p102 = por %p100, %p101
    %p103 = scmp.ne.s32.totalorder %s91, %s92
    %p104 = scmp.eq.s32.totalorder %s19, 1
    %p105 = por %p103, %p104
    %p107 = scmp.ne.s32.totalorder %s92, %s106
    %p108 = scmp.eq.s32.totalorder %s19, 0
    %p109 = por %p107, %p108
    %s111 = sadd.s32 %s110, 1
    %p114 = scmp.eq.s32.totalorder %s13, 1
    %p115 = scmp.ne.s32.totalorder %s110, %s112
    %p116 = scmp.eq.s32.totalorder %s13, 0
    %p117 = por %p115, %p116
    %p118 = scmp.ne.s32.totalorder %s110, %s112
    %p119 = scmp.eq.s32.totalorder %s18, 1
    %p120 = por %p118, %p119
    %p121 = scmp.ne.s32.totalorder %s112, %s113
    %p122 = scmp.eq.s32.totalorder %s18, 0
    %p123 = por %p121, %p122
    %p124 = scmp.ne.s32.totalorder %s112, %s113
    %p125 = scmp.eq.s32.totalorder %s19, 1
    %p126 = por %p124, %p125
    %p128 = scmp.ne.s32.totalorder %s113, %s127
    %p129 = scmp.eq.s32.totalorder %s19, 0
    %p130 = por %p128, %p129
    %s132 = sadd.s32 %s131, 1
    %p135 = scmp.eq.s32.totalorder %s13, 1
    %p136 = scmp.ne.s32.totalorder %s131, %s133
    %p137 = scmp.eq.s32.totalorder %s13, 0
    %p138 = por %p136, %p137
    %p139 = scmp.ne.s32.totalorder %s131, %s133
    %p140 = scmp.eq.s32.totalorder %s18, 1
    %p141 = por %p139, %p140
    %p142 = scmp.ne.s32.totalorder %s133, %s134
    %p143 = scmp.eq.s32.totalorder %s18, 0
    %p144 = por %p142, %p143
    %p145 = scmp.ne.s32.totalorder %s133, %s134
    %p146 = scmp.eq.s32.totalorder %s19, 1
    %p147 = por %p145, %p146
    %p149 = scmp.ne.s32.totalorder %s134, %s148
    %p150 = scmp.eq.s32.totalorder %s19, 0
    %p151 = por %p149, %p150
    %s153 = sadd.s32 %s152, 1
    %p156 = scmp.eq.s32.totalorder %s13, 1
    %p157 = scmp.ne.s32.totalorder %s152, %s154
    %p158 = scmp.eq.s32.totalorder %s13, 0
    %p159 = por %p157, %p158
    %p160 = scmp.ne.s32.totalorder %s152, %s154
    %p161 = scmp.eq.s32.totalorder %s18, 1
    %p162 = por %p160, %p161
    %p163 = scmp.ne.s32.totalorder %s154, %s155
    %p164 = scmp.eq.s32.totalorder %s18, 0
    %p165 = por %p163, %p164
    %p166 = scmp.ne.s32.totalorder %s154, %s155
    %p167 = scmp.eq.s32.totalorder %s19, 1
    %p168 = por %p166, %p167
    %p170 = scmp.ne.s32.totalorder %s155, %s169
    %p171 = scmp.eq.s32.totalorder %s19, 0
    %p172 = por %p170, %p171
    %s173 = ssub.s32 %s13, %s20
    %p174 = scmp.eq.s32.totalorder %s173, 0
    %s176 = sadd.s32 %s175, 1
    %s177 = scalar_select %p174, %s175, %s176
    %p180 = pneg %p174
    %p181 = scmp.eq.s32.totalorder %s13, 1
    %p182 = por %p180, %p181
    %p183 = scmp.ne.s32.totalorder %s175, %s178
    %p184 = scmp.eq.s32.totalorder %s13, 0
    %p185 = por %p183, %p184
    %p186 = scmp.ne.s32.totalorder %s175, %s178
    %p187 = scmp.eq.s32.totalorder %s18, 1
    %p188 = por %p186, %p187
    %p189 = scmp.ne.s32.totalorder %s178, %s179
    %p190 = scmp.eq.s32.totalorder %s18, 0
    %p191 = por %p189, %p190
    %p192 = scmp.ne.s32.totalorder %s178, %s179
    %p193 = scmp.eq.s32.totalorder %s19, 1
    %p194 = por %p192, %p193
    %p196 = scmp.ne.s32.totalorder %s179, %s195
    %p197 = scmp.eq.s32.totalorder %s19, 0
    %p198 = por %p196, %p197
    %p199 = scmp.le.s32.totalorder 1, %s13
    %p200 = scmp.lt.s32.totalorder %s13, 3
    %p201 = pnand %p199, %p200
    %p202 = pneg %p201
    // Predicated region
    $region9: #{conv_residual_conv.1} parent=5 // pred_check
      _
    $region10: #{conv_residual_conv.1} parent=5 // pred_check_branch
      %204 = sbr.rel (%p201) target = $region12
    $region11: #{conv_residual_conv.1} parent=5 // pred_region
      %s205 = ssub.s32 %s13, 1
      // Predicated region
      $region13: #{conv_residual_conv.1} parent=11 // pred_check
        %p206 = pneg %p60
      $region14: #{conv_residual_conv.1} parent=11 // pred_check_branch
        %208 = sbr.rel (%p206) target = $region16
      $region15: #{conv_residual_conv.1} parent=11 // pred_region
        _
      $region16: #{conv_residual_conv.1} parent=11 // pred_fallthru
        _
      // Predicated region
      $region17: #{conv_residual_conv.1} parent=11 // pred_check
        %p209 = pneg %p81
      $region18: #{conv_residual_conv.1} parent=11 // pred_check_branch
        %211 = sbr.rel (%p209) target = $region20
      $region19: #{conv_residual_conv.1} parent=11 // pred_region
        _
      $region20: #{conv_residual_conv.1} parent=11 // pred_fallthru
        _
      // Predicated region
      $region21: #{conv_residual_conv.1} parent=11 // pred_check
        %p212 = pneg %p102
      $region22: #{conv_residual_conv.1} parent=11 // pred_check_branch
        %214 = sbr.rel (%p212) target = $region24
      $region23: #{conv_residual_conv.1} parent=11 // pred_region
        _
      $region24: #{conv_residual_conv.1} parent=11 // pred_fallthru
        _
      // Predicated region
      $region25: #{conv_residual_conv.1} parent=11 // pred_check
        %p215 = pneg %p123
      $region26: #{conv_residual_conv.1} parent=11 // pred_check_branch
        %217 = sbr.rel (%p215) target = $region28
      $region27: #{conv_residual_conv.1} parent=11 // pred_region
        _
      $region28: #{conv_residual_conv.1} parent=11 // pred_fallthru
        _
      // Predicated region
      $region29: #{conv_residual_conv.1} parent=11 // pred_check
        %p218 = pneg %p144
      $region30: #{conv_residual_conv.1} parent=11 // pred_check_branch
        %220 = sbr.rel (%p218) target = $region32
      $region31: #{conv_residual_conv.1} parent=11 // pred_region
        _
      $region32: #{conv_residual_conv.1} parent=11 // pred_fallthru
        _
      // Predicated region
      $region33: #{conv_residual_conv.1} parent=11 // pred_check
        %p221 = pneg %p165
      $region34: #{conv_residual_conv.1} parent=11 // pred_check_branch
        %223 = sbr.rel (%p221) target = $region36
      $region35: #{conv_residual_conv.1} parent=11 // pred_region
        _
      $region36: #{conv_residual_conv.1} parent=11 // pred_fallthru
        _
    $region12: #{conv_residual_conv.1} parent=5 // pred_fallthru
      _
    %p224 = scmp.lt.s32.totalorder %s13, 2
    // Predicated region
    $region37: #{conv_residual_conv.1} parent=5 // pred_check
      %p225 = pneg %p224
    $region38: #{conv_residual_conv.1} parent=5 // pred_check_branch
      %227 = sbr.rel (%p225) target = $region40
    $region39: #{conv_residual_conv.1} parent=5 // pred_region
      // Predicated region
      $region41: #{conv_residual_conv.1} parent=39 // pred_check
        %p228 = pneg %p33
      $region42: #{conv_residual_conv.1} parent=39 // pred_check_branch
        %230 = sbr.rel (%p228) target = $region44
      $region43: #{conv_residual_conv.1} parent=39 // pred_region
        %p231 = scmp.lt.s32.totalorder %s13, 1
        %s232 = scalar_select %p231, %s13, 1
        %s233 = smul.addr %s232, 2
        %s234 = smul.addr %s233, 8
        %s235 = scalar_lea.vmem %s0, %s234
      $region44: #{conv_residual_conv.1} parent=39 // pred_fallthru
        _
    $region40: #{conv_residual_conv.1} parent=5 // pred_fallthru
      _
    %p236 = scmp.le.s32.totalorder 1, %s13
    %p237 = scmp.lt.s32.totalorder %s13, 3
    %p238 = pnand %p236, %p237
    %p239 = pneg %p238
    // Predicated region
    $region45: #{conv_residual_conv.1} parent=5 // pred_check
      _
    $region46: #{conv_residual_conv.1} parent=5 // pred_check_branch
      %241 = sbr.rel (%p238) target = $region48
    $region47: #{conv_residual_conv.1} parent=5 // pred_region
      %s242 = ssub.s32 %s13, 1
      %p243 = scmp.lt.s32.totalorder %s18, 1
      %s244 = scalar_select %p243, %s18, 1
      %s245 = smul.addr %s244, 2
      %s246 = smul.addr %s245, 8
      %s247 = scalar_lea.vmem %s0, %s246
      %p248 = pneg %p39
      %p249 = pneg %p36
      %p250 = pneg %p60
      %p251 = pneg %p57
      %p252 = pneg %p81
      %p253 = pneg %p78
      %p254 = pneg %p102
      %p255 = pneg %p99
      %p256 = pneg %p123
      %p257 = pneg %p120
      %p258 = pneg %p144
      %p259 = pneg %p141
      %p260 = pneg %p165
      %p261 = pneg %p162
      %p262 = pneg %p191
      %p263 = pneg %p188
      %p264 = scmp.lt.s32.totalorder %s18, 1
      %s265 = scalar_select %p264, %s18, 1
      %s266 = smul.addr %s265, 2
      %s267 = smul.addr %s266, 8
      %s268 = scalar_lea.vmem %s7, %s267
      %p269 = scmp.lt.s32.totalorder %s18, 1
      %s270 = scalar_select %p269, %s18, 1
      %s271 = smul.addr %s270, 2
      %s272 = smul.addr %s271, 8
      %s273 = scalar_lea.vmem %s0, %s272
      %p274 = scmp.lt.s32.totalorder %s18, 1
      %s275 = scalar_select %p274, %s18, 1
      %s276 = smul.addr %s275, 2
      %s277 = smul.addr %s276, 8
      %s278 = scalar_lea.vmem %s7, %s277
      %vm279 = vcmask 523264
      %280 = vst.msk [vmem:[#allocation2] sm:$0xff] %vm279, 0.0
      %281 = vst.msk [vmem:[#allocation2 + $0x8] sm:$0xff] %vm279, 0.0
      %vm282 = vcmask 517120
      %283 = vst.msk [vmem:[#allocation2 + $0x10] sm:$0x3] %vm282, 0.0
      %284 = vst [vmem:[#allocation3] sm:$0xff] 0.0
      %285 = vst [vmem:[#allocation3 + $0x8] sm:$0xff] 0.0
      %286 = vst [vmem:[#allocation3 + $0x10] sm:$0x3] 0.0
      %287 = vst [vmem:[#allocation4] sm:$0xff] 0.0
      %288 = vst [vmem:[#allocation4 + $0x8] sm:$0xff] 0.0
      %289 = vst [vmem:[#allocation4 + $0x10] sm:$0x3] 0.0
      %290 = vst [vmem:[#allocation5] sm:$0xff] 0.0
      %291 = vst [vmem:[#allocation5 + $0x8] sm:$0xff] 0.0
      %292 = vst [vmem:[#allocation5 + $0x10] sm:$0x3] 0.0
      %v293 = vld [vmem:[%s6] sm:$0xff]
      %v294 = vld [vmem:[%s6 + $0x8] sm:$0xff]
      %v295 = vld [vmem:[%s6 + $0x10] sm:$0xff]
      %v296 = vld [vmem:[%s6 + $0x18] sm:$0xff]
      %v297 = vld [vmem:[%s6 + $0x20] sm:$0xff]
      %v298 = vld [vmem:[%s6 + $0x28] sm:$0xff]
      %v299 = vld [vmem:[%s6 + $0x30] sm:$0xff]
      %v300 = vld [vmem:[%s6 + $0x38] sm:$0xff]
      %v301 = vld [vmem:[%s6 + $0x40] sm:$0xff]
      %v302 = vld [vmem:[%s6 + $0x48] sm:$0xff]
      %v303 = vld [vmem:[%s6 + $0x50] sm:$0xff]
      %v304 = vld [vmem:[%s6 + $0x58] sm:$0xff]
      %v305 = vld [vmem:[%s6 + $0x60] sm:$0xff]
      %v306 = vld [vmem:[%s6 + $0x68] sm:$0xff]
      %v307 = vld [vmem:[%s6 + $0x70] sm:$0xff]
      %v308 = vld [vmem:[%s6 + $0x78] sm:$0xff]
      %v309 = vld [vmem:[%s273] sm:$0xff]
      %v310 = vld [vmem:[%s273 + $0x8] sm:$0xff]
      %311 = vst.msk [vmem:[#allocation2 + $0x1] sm:$0xff] %vm279, %v309
      %312 = vst.msk [vmem:[#allocation2 + $0x9] sm:$0xff] %vm279, %v310
      %v313 = vld [vmem:[#allocation2] sm:$0xff]
      %v314 = vld [vmem:[#allocation2 + $0x8] sm:$0xff]
      %v315 = vld [vmem:[%s1] sm:$0xff]
      %v316 = vld [vmem:[%s1 + $0x8] sm:$0xff]
      %v317 = vld [vmem:[%s1 + $0x10] sm:$0xff]
      %v318 = vld [vmem:[%s1 + $0x18] sm:$0xff]
      %v319 = vld [vmem:[%s1 + $0x20] sm:$0xff]
      %v320 = vld [vmem:[%s1 + $0x28] sm:$0xff]
      %v321 = vld [vmem:[%s1 + $0x30] sm:$0xff]
      %v322 = vld [vmem:[%s1 + $0x38] sm:$0xff]
      %v323 = vld [vmem:[#allocation2 + $0x1] sm:$0xff]
      %v324 = vld [vmem:[#allocation2 + $0x9] sm:$0xff]
      %s325 = scalar_lea.vmem %s1, 64
      %v326 = vld [vmem:[%s325] sm:$0xff]
      %v327 = vld [vmem:[%s325 + $0x8] sm:$0xff]
      %v328 = vld [vmem:[%s325 + $0x10] sm:$0xff]
      %v329 = vld [vmem:[%s325 + $0x18] sm:$0xff]
      %v330 = vld [vmem:[%s325 + $0x20] sm:$0xff]
      %v331 = vld [vmem:[%s325 + $0x28] sm:$0xff]
      %v332 = vld [vmem:[%s325 + $0x30] sm:$0xff]
      %v333 = vld [vmem:[%s325 + $0x38] sm:$0xff]
      %v335 = vsel %vm279, %v323, 0
      %v338 = vsel %vm279, %v324, 0
      %340 = vmatprep.subr.mxu0 0.0
      %341 = vmatpush1.msra.mxu0 0.0
      %342 = vmatprep.subr.mxu0 0.0
      %343 = vmatpush1.msra.mxu0 0.0
      %344 = vmatprep.subr.mxu0 0.0
      %345 = vmatpush1.msra.mxu0 0.0
      %346 = vmatprep.subr.mxu0 0.0
      %347 = vmatpush1.msra.mxu0 0.0
      %348 = vmatprep.subr.mxu0 0.0
      %349 = vmatpush1.msra.mxu0 0.0
      %350 = vmatprep.subr.mxu0 0.0
      %351 = vmatpush1.msra.mxu0 0.0
      %352 = vmatprep.subr.mxu0 0.0
      %353 = vmatpush1.msra.mxu0 0.0
      %354 = vmatprep.subr.mxu0 0.0
      %355 = vmatpush1.msra.mxu0 0.0
      %356 = vmatprep.subr.mxu0 0.0
      %357 = vmatpush1.msra.mxu0 %v333
      %358 = vmatprep.subr.mxu0 0.0
      %359 = vmatpush1.msra.mxu0 %v332
      %360 = vmatprep.subr.mxu0 0.0
      %361 = vmatpush1.msra.mxu0 %v331
      %362 = vmatprep.subr.mxu0 0.0
      %363 = vmatpush1.msra.mxu0 %v330
      %364 = vmatprep.subr.mxu0 0.0
      %365 = vmatpush1.msra.mxu0 %v329
      %366 = vmatprep.subr.mxu0 0.0
      %367 = vmatpush1.msra.mxu0 %v328
      %368 = vmatprep.subr.mxu0 0.0
      %369 = vmatpush1.msra.mxu0 %v327
      %370 = vmatprep.subr.mxu0 0.0
      %371 = vmatpush1.msra.mxu0 %v326
      %372 = vmatprep.subr.mxu0 0.0
      %373 = vmatpush2.msra.mxu0 0.0
      %374 = vmatprep.subr.mxu0 0.0
      %375 = vmatpush2.msra.mxu0 0.0
      %376 = vmatprep.subr.mxu0 0.0
      %377 = vmatpush2.msra.mxu0 0.0
      %378 = vmatprep.subr.mxu0 0.0
      %379 = vmatpush2.msra.mxu0 0.0
      %380 = vmatprep.subr.mxu0 0.0
      %381 = vmatpush2.msra.mxu0 0.0
      %382 = vmatprep.subr.mxu0 0.0
      %383 = vmatpush2.msra.mxu0 0.0
      %384 = vmatprep.subr.mxu0 0.0
      %385 = vmatpush2.msra.mxu0 0.0
      %386 = vmatprep.subr.mxu0 0.0
      %387 = vmatpush2.msra.mxu0 0.0
      %388 = vmatprep.subr.mxu0 0.0
      %389 = vmatpush2.msra.mxu0 0.0
      %390 = vmatprep.subr.mxu0 0.0
      %391 = vmatpush2.msra.mxu0 0.0
      %392 = vmatprep.subr.mxu0 0.0
      %393 = vmatpush2.msra.mxu0 0.0
      %394 = vmatprep.subr.mxu0 0.0
      %395 = vmatpush2.msra.mxu0 0.0
      %396 = vmatprep.subr.mxu0 0.0
      %397 = vmatpush2.msra.mxu0 0.0
      %398 = vmatprep.subr.mxu0 0.0
      %399 = vmatpush2.msra.mxu0 0.0
      %400 = vmatprep.subr.mxu0 0.0
      %401 = vmatpush2.msra.mxu0 0.0
      %402 = vmatprep.subr.mxu0 0.0
      %403 = vmatpush2.msra.mxu0 0.0
      %404 = vmatprep.mubr.f32.mxu0 0.0
      %405 = vmatmul.mubr.f32.gmra.mxu0 %v335
      %v406 = vpop.f32.mrf.mxu0
      %v407 = vadd.f32 0.0, %v406
      %v408 = vpop.f32.mrf.mxu0
      %409 = vmatprep.mubr.f32.mxu0 0.0
      %410 = vmatmul.mubr.f32.gmra.mxu0 %v338
      %v411 = vpop.f32.mrf.mxu0
      %v412 = vadd.f32 0.0, %v411
      %v413 = vpop.f32.mrf.mxu0
      %414 = vdwg.mxu0
      %v416 = vsel %vm279, %v313, 0
      %v419 = vsel %vm279, %v314, 0
      %421 = vmatprep.subr.mxu0 0.0
      %422 = vmatpush1.msra.mxu0 0.0
      %423 = vmatprep.subr.mxu0 0.0
      %424 = vmatpush1.msra.mxu0 0.0
      %425 = vmatprep.subr.mxu0 0.0
      %426 = vmatpush1.msra.mxu0 0.0
      %427 = vmatprep.subr.mxu0 0.0
      %428 = vmatpush1.msra.mxu0 0.0
      %429 = vmatprep.subr.mxu0 0.0
      %430 = vmatpush1.msra.mxu0 0.0
      %431 = vmatprep.subr.mxu0 0.0
      %432 = vmatpush1.msra.mxu0 0.0
      %433 = vmatprep.subr.mxu0 0.0
      %434 = vmatpush1.msra.mxu0 0.0
      %435 = vmatprep.subr.mxu0 0.0
      %436 = vmatpush1.msra.mxu0 0.0
      %437 = vmatprep.subr.mxu0 0.0
      %438 = vmatpush1.msra.mxu0 %v322
      %439 = vmatprep.subr.mxu0 0.0
      %440 = vmatpush1.msra.mxu0 %v321
      %441 = vmatprep.subr.mxu0 0.0
      %442 = vmatpush1.msra.mxu0 %v320
      %443 = vmatprep.subr.mxu0 0.0
      %444 = vmatpush1.msra.mxu0 %v319
      %445 = vmatprep.subr.mxu0 0.0
      %446 = vmatpush1.msra.mxu0 %v318
      %447 = vmatprep.subr.mxu0 0.0
      %448 = vmatpush1.msra.mxu0 %v317
      %449 = vmatprep.subr.mxu0 0.0
      %450 = vmatpush1.msra.mxu0 %v316
      %451 = vmatprep.subr.mxu0 0.0
      %452 = vmatpush1.msra.mxu0 %v315
      %453 = vmatprep.subr.mxu0 0.0
      %454 = vmatpush2.msra.mxu0 0.0
      %455 = vmatprep.subr.mxu0 0.0
      %456 = vmatpush2.msra.mxu0 0.0
      %457 = vmatprep.subr.mxu0 0.0
      %458 = vmatpush2.msra.mxu0 0.0
      %459 = vmatprep.subr.mxu0 0.0
      %460 = vmatpush2.msra.mxu0 0.0
      %461 = vmatprep.subr.mxu0 0.0
      %462 = vmatpush2.msra.mxu0 0.0
      %463 = vmatprep.subr.mxu0 0.0
      %464 = vmatpush2.msra.mxu0 0.0
      %465 = vmatprep.subr.mxu0 0.0
      %466 = vmatpush2.msra.mxu0 0.0
      %467 = vmatprep.subr.mxu0 0.0
      %468 = vmatpush2.msra.mxu0 0.0
      %469 = vmatprep.subr.mxu0 0.0
      %470 = vmatpush2.msra.mxu0 0.0
      %471 = vmatprep.subr.mxu0 0.0
      %472 = vmatpush2.msra.mxu0 0.0
      %473 = vmatprep.subr.mxu0 0.0
      %474 = vmatpush2.msra.mxu0 0.0
      %475 = vmatprep.subr.mxu0 0.0
      %476 = vmatpush2.msra.mxu0 0.0
      %477 = vmatprep.subr.mxu0 0.0
      %478 = vmatpush2.msra.mxu0 0.0
      %479 = vmatprep.subr.mxu0 0.0
      %480 = vmatpush2.msra.mxu0 0.0
      %481 = vmatprep.subr.mxu0 0.0
      %482 = vmatpush2.msra.mxu0 0.0
      %483 = vmatprep.subr.mxu0 0.0
      %484 = vmatpush2.msra.mxu0 0.0
      %485 = vmatprep.mubr.f32.mxu0 0.0
      %486 = vmatmul.mubr.f32.gmra.mxu0 %v416
      %v487 = vpop.f32.mrf.mxu0
      %v488 = vadd.f32 %v407, %v487
      %v489 = vpop.f32.mrf.mxu0
      %490 = vmatprep.mubr.f32.mxu0 0.0
      %491 = vmatmul.mubr.f32.gmra.mxu0 %v419
      %v492 = vpop.f32.mrf.mxu0
      %v493 = vadd.f32 %v412, %v492
      %v494 = vpop.f32.mrf.mxu0
      %495 = vdwg.mxu0
      %v496 = vld [vmem:[#allocation2 + $0x2] sm:$0xff]
      %v497 = vld [vmem:[#allocation2 + $0xa] sm:$0xff]
      %s498 = scalar_lea.vmem %s1, 128
      %v499 = vld [vmem:[%s498] sm:$0xff]
      %v500 = vld [vmem:[%s498 + $0x8] sm:$0xff]
      %v501 = vld [vmem:[%s498 + $0x10] sm:$0xff]
      %v502 = vld [vmem:[%s498 + $0x18] sm:$0xff]
      %v503 = vld [vmem:[%s498 + $0x20] sm:$0xff]
      %v504 = vld [vmem:[%s498 + $0x28] sm:$0xff]
      %v505 = vld [vmem:[%s498 + $0x30] sm:$0xff]
      %v506 = vld [vmem:[%s498 + $0x38] sm:$0xff]
      %v508 = vsel %vm279, %v496, 0
      %v511 = vsel %vm279, %v497, 0
      %513 = vmatprep.subr.mxu0 0.0
      %514 = vmatpush1.msra.mxu0 0.0
      %515 = vmatprep.subr.mxu0 0.0
      %516 = vmatpush1.msra.mxu0 0.0
      %517 = vmatprep.subr.mxu0 0.0
      %518 = vmatpush1.msra.mxu0 0.0
      %519 = vmatprep.subr.mxu0 0.0
      %520 = vmatpush1.msra.mxu0 0.0
      %521 = vmatprep.subr.mxu0 0.0
      %522 = vmatpush1.msra.mxu0 0.0
      %523 = vmatprep.subr.mxu0 0.0
      %524 = vmatpush1.msra.mxu0 0.0
      %525 = vmatprep.subr.mxu0 0.0
      %526 = vmatpush1.msra.mxu0 0.0
      %527 = vmatprep.subr.mxu0 0.0
      %528 = vmatpush1.msra.mxu0 0.0
      %529 = vmatprep.subr.mxu0 0.0
      %530 = vmatpush1.msra.mxu0 %v506
      %531 = vmatprep.subr.mxu0 0.0
      %532 = vmatpush1.msra.mxu0 %v505
      %533 = vmatprep.subr.mxu0 0.0
      %534 = vmatpush1.msra.mxu0 %v504
      %535 = vmatprep.subr.mxu0 0.0
      %536 = vmatpush1.msra.mxu0 %v503
      %537 = vmatprep.subr.mxu0 0.0
      %538 = vmatpush1.msra.mxu0 %v502
      %539 = vmatprep.subr.mxu0 0.0
      %540 = vmatpush1.msra.mxu0 %v501
      %541 = vmatprep.subr.mxu0 0.0
      %542 = vmatpush1.msra.mxu0 %v500
      %543 = vmatprep.subr.mxu0 0.0
      %544 = vmatpush1.msra.mxu0 %v499
      %545 = vmatprep.subr.mxu0 0.0
      %546 = vmatpush2.msra.mxu0 0.0
      %547 = vmatprep.subr.mxu0 0.0
      %548 = vmatpush2.msra.mxu0 0.0
      %549 = vmatprep.subr.mxu0 0.0
      %550 = vmatpush2.msra.mxu0 0.0
      %551 = vmatprep.subr.mxu0 0.0
      %552 = vmatpush2.msra.mxu0 0.0
      %553 = vmatprep.subr.mxu0 0.0
      %554 = vmatpush2.msra.mxu0 0.0
      %555 = vmatprep.subr.mxu0 0.0
      %556 = vmatpush2.msra.mxu0 0.0
      %557 = vmatprep.subr.mxu0 0.0
      %558 = vmatpush2.msra.mxu0 0.0
      %559 = vmatprep.subr.mxu0 0.0
      %560 = vmatpush2.msra.mxu0 0.0
      %561 = vmatprep.subr.mxu0 0.0
      %562 = vmatpush2.msra.mxu0 0.0
      %563 = vmatprep.subr.mxu0 0.0
      %564 = vmatpush2.msra.mxu0 0.0
      %565 = vmatprep.subr.mxu0 0.0
      %566 = vmatpush2.msra.mxu0 0.0
      %567 = vmatprep.subr.mxu0 0.0
      %568 = vmatpush2.msra.mxu0 0.0
      %569 = vmatprep.subr.mxu0 0.0
      %570 = vmatpush2.msra.mxu0 0.0
      %571 = vmatprep.subr.mxu0 0.0
      %572 = vmatpush2.msra.mxu0 0.0
      %573 = vmatprep.subr.mxu0 0.0
      %574 = vmatpush2.msra.mxu0 0.0
      %575 = vmatprep.subr.mxu0 0.0
      %576 = vmatpush2.msra.mxu0 0.0
      %577 = vmatprep.mubr.f32.mxu0 0.0
      %578 = vmatmul.mubr.f32.gmra.mxu0 %v508
      %v579 = vpop.f32.mrf.mxu0
      %v580 = vadd.f32 0.0, %v579
      %v581 = vpop.f32.mrf.mxu0
      %582 = vmatprep.mubr.f32.mxu0 0.0
      %583 = vmatmul.mubr.f32.gmra.mxu0 %v511
      %v584 = vpop.f32.mrf.mxu0
      %v585 = vadd.f32 0.0, %v584
      %v586 = vpop.f32.mrf.mxu0
      %587 = vdwg.mxu0
      %v588 = vadd.f32 %v488, %v580
      %v589 = vadd.f32 %v493, %v585
      %v590 = vadd.f32 %v588, %v589
      %v591 = vrot.slane %v590, 4
      %v592 = vadd.f32 %v590, %v591
      %v593 = vrot.slane %v592, 2
      %v594 = vadd.f32 %v592, %v593
      %v595 = vrot.slane %v594, 1
      %v596 = vadd.f32 %v594, %v595
      %597 = vmatprep.subr.mxu0 0.0
      %598 = vmatpush1.msra.mxu0 %v308
      %599 = vmatprep.subr.mxu0 0.0
      %600 = vmatpush1.msra.mxu0 %v307
      %601 = vmatprep.subr.mxu0 0.0
      %602 = vmatpush1.msra.mxu0 %v306
      %603 = vmatprep.subr.mxu0 0.0
      %604 = vmatpush1.msra.mxu0 %v305
      %605 = vmatprep.subr.mxu0 0.0
      %606 = vmatpush1.msra.mxu0 %v304
      %607 = vmatprep.subr.mxu0 0.0
      %608 = vmatpush1.msra.mxu0 %v303
      %609 = vmatprep.subr.mxu0 0.0
      %610 = vmatpush1.msra.mxu0 %v302
      %611 = vmatprep.subr.mxu0 0.0
      %612 = vmatpush1.msra.mxu0 %v301
      %613 = vmatprep.subr.mxu0 0.0
      %614 = vmatpush1.msra.mxu0 %v300
      %615 = vmatprep.subr.mxu0 0.0
      %616 = vmatpush1.msra.mxu0 %v299
      %617 = vmatprep.subr.mxu0 0.0
      %618 = vmatpush1.msra.mxu0 %v298
      %619 = vmatprep.subr.mxu0 0.0
      %620 = vmatpush1.msra.mxu0 %v297
      %621 = vmatprep.subr.mxu0 0.0
      %622 = vmatpush1.msra.mxu0 %v296
      %623 = vmatprep.subr.mxu0 0.0
      %624 = vmatpush1.msra.mxu0 %v295
      %625 = vmatprep.subr.mxu0 0.0
      %626 = vmatpush1.msra.mxu0 %v294
      %627 = vmatprep.subr.mxu0 0.0
      %628 = vmatpush1.msra.mxu0 %v293
      %629 = vmatprep.subr.mxu0 0.0
      %630 = vmatpush2.msra.mxu0 0.0
      %631 = vmatprep.subr.mxu0 0.0
      %632 = vmatpush2.msra.mxu0 0.0
      %633 = vmatprep.subr.mxu0 0.0
      %634 = vmatpush2.msra.mxu0 0.0
      %635 = vmatprep.subr.mxu0 0.0
      %636 = vmatpush2.msra.mxu0 0.0
      %637 = vmatprep.subr.mxu0 0.0
      %638 = vmatpush2.msra.mxu0 0.0
      %639 = vmatprep.subr.mxu0 0.0
      %640 = vmatpush2.msra.mxu0 0.0
      %641 = vmatprep.subr.mxu0 0.0
      %642 = vmatpush2.msra.mxu0 0.0
      %643 = vmatprep.subr.mxu0 0.0
      %644 = vmatpush2.msra.mxu0 0.0
      %645 = vmatprep.subr.mxu0 0.0
      %646 = vmatpush2.msra.mxu0 0.0
      %647 = vmatprep.subr.mxu0 0.0
      %648 = vmatpush2.msra.mxu0 0.0
      %649 = vmatprep.subr.mxu0 0.0
      %650 = vmatpush2.msra.mxu0 0.0
      %651 = vmatprep.subr.mxu0 0.0
      %652 = vmatpush2.msra.mxu0 0.0
      %653 = vmatprep.subr.mxu0 0.0
      %654 = vmatpush2.msra.mxu0 0.0
      %655 = vmatprep.subr.mxu0 0.0
      %656 = vmatpush2.msra.mxu0 0.0
      %657 = vmatprep.subr.mxu0 0.0
      %658 = vmatpush2.msra.mxu0 0.0
      %659 = vmatprep.subr.mxu0 0.0
      %660 = vmatpush2.msra.mxu0 0.0
      %661 = vmatprep.mubr.f32.mxu0 0.0
      %662 = vmatmul.mubr.f32.gmra.mxu0 %v596
      %v663 = vpop.f32.mrf.mxu0
      %v664 = vadd.f32 0.0, %v663
      %v665 = vpop.f32.mrf.mxu0
      %666 = vdwg.mxu0
      %v667 = vmul.f32 %v664, 0.00390625
      %v668 = vlaneseq
      %v669 = vshrl.u32 %v668, 7
      %v670 = vsub.s32 0, %v669
      %v671 = vrot.slane %v667, %v670
      %v672 = vsub.f32 %v588, %v671
      %v673 = vsub.f32 %v589, %v671
      %v674 = vmul.f32 %v672, %v672
      %v675 = vmul.f32 %v673, %v673
      %v676 = vadd.f32 %v674, %v675
      %v677 = vrot.slane %v676, 4
      %v678 = vadd.f32 %v676, %v677
      %v679 = vrot.slane %v678, 2
      %v680 = vadd.f32 %v678, %v679
      %v681 = vrot.slane %v680, 1
      %v682 = vadd.f32 %v680, %v681
      %683 = vmatprep.subr.mxu0 0.0
      %684 = vmatpush1.msra.mxu0 %v308
      %685 = vmatprep.subr.mxu0 0.0
      %686 = vmatpush1.msra.mxu0 %v307
      %687 = vmatprep.subr.mxu0 0.0
      %688 = vmatpush1.msra.mxu0 %v306
      %689 = vmatprep.subr.mxu0 0.0
      %690 = vmatpush1.msra.mxu0 %v305
      %691 = vmatprep.subr.mxu0 0.0
      %692 = vmatpush1.msra.mxu0 %v304
      %693 = vmatprep.subr.mxu0 0.0
      %694 = vmatpush1.msra.mxu0 %v303
      %695 = vmatprep.subr.mxu0 0.0
      %696 = vmatpush1.msra.mxu0 %v302
      %697 = vmatprep.subr.mxu0 0.0
      %698 = vmatpush1.msra.mxu0 %v301
      %699 = vmatprep.subr.mxu0 0.0
      %700 = vmatpush1.msra.mxu0 %v300
      %701 = vmatprep.subr.mxu0 0.0
      %702 = vmatpush1.msra.mxu0 %v299
      %703 = vmatprep.subr.mxu0 0.0
      %704 = vmatpush1.msra.mxu0 %v298
      %705 = vmatprep.subr.mxu0 0.0
      %706 = vmatpush1.msra.mxu0 %v297
      %707 = vmatprep.subr.mxu0 0.0
      %708 = vmatpush1.msra.mxu0 %v296
      %709 = vmatprep.subr.mxu0 0.0
      %710 = vmatpush1.msra.mxu0 %v295
      %711 = vmatprep.subr.mxu0 0.0
      %712 = vmatpush1.msra.mxu0 %v294
      %713 = vmatprep.subr.mxu0 0.0
      %714 = vmatpush1.msra.mxu0 %v293
      %715 = vmatprep.subr.mxu0 0.0
      %716 = vmatpush2.msra.mxu0 0.0
      %717 = vmatprep.subr.mxu0 0.0
      %718 = vmatpush2.msra.mxu0 0.0
      %719 = vmatprep.subr.mxu0 0.0
      %720 = vmatpush2.msra.mxu0 0.0
      %721 = vmatprep.subr.mxu0 0.0
      %722 = vmatpush2.msra.mxu0 0.0
      %723 = vmatprep.subr.mxu0 0.0
      %724 = vmatpush2.msra.mxu0 0.0
      %725 = vmatprep.subr.mxu0 0.0
      %726 = vmatpush2.msra.mxu0 0.0
      %727 = vmatprep.subr.mxu0 0.0
      %728 = vmatpush2.msra.mxu0 0.0
      %729 = vmatprep.subr.mxu0 0.0
      %730 = vmatpush2.msra.mxu0 0.0
      %731 = vmatprep.subr.mxu0 0.0
      %732 = vmatpush2.msra.mxu0 0.0
      %733 = vmatprep.subr.mxu0 0.0
      %734 = vmatpush2.msra.mxu0 0.0
      %735 = vmatprep.subr.mxu0 0.0
      %736 = vmatpush2.msra.mxu0 0.0
      %737 = vmatprep.subr.mxu0 0.0
      %738 = vmatpush2.msra.mxu0 0.0
      %739 = vmatprep.subr.mxu0 0.0
      %740 = vmatpush2.msra.mxu0 0.0
      %741 = vmatprep.subr.mxu0 0.0
      %742 = vmatpush2.msra.mxu0 0.0
      %743 = vmatprep.subr.mxu0 0.0
      %744 = vmatpush2.msra.mxu0 0.0
      %745 = vmatprep.subr.mxu0 0.0
      %746 = vmatpush2.msra.mxu0 0.0
      %747 = vmatprep.mubr.f32.mxu0 0.0
      %748 = vmatmul.mubr.f32.gmra.mxu0 %v682
      %v749 = vpop.f32.mrf.mxu0
      %v750 = vadd.f32 0.0, %v749
      %v751 = vpop.f32.mrf.mxu0
      %752 = vdwg.mxu0
      %v753 = vmul.f32 %v750, 0.00390625
      %v754 = vadd.f32 %v753, 1e-05
      %v755 = vrsqrt.pop %v754
      %v756 = vlaneseq
      %v757 = vshrl.u32 %v756, 7
      %v758 = vsub.s32 0, %v757
      %v759 = vrot.slane %v755, %v758
      %v760 = vmul.f32 %v672, %v759
      %v761 = vmul.f32 %v673, %v759
      %vm762 = vcmp.gt.f32.partialorder %v760, 0.0
      %vm763 = vcmp.gt.f32.partialorder %v761, 0.0
      %v764 = vmul.f32 %v760, 0.2
      %v765 = vmul.f32 %v761, 0.2
      %v766 = vsel %vm762, %v760, %v764
      %v767 = vsel %vm763, %v761, %v765
      %768 = vst [vmem:[#allocation3 + $0x1] sm:$0xff] %v766
      %769 = vst [vmem:[#allocation3 + $0x9] sm:$0xff] %v767
      %v770 = vld [vmem:[#allocation3] sm:$0xff]
      %v771 = vld [vmem:[#allocation3 + $0x8] sm:$0xff]
      %v772 = vld [vmem:[%s2] sm:$0xff]
      %v773 = vld [vmem:[%s2 + $0x8] sm:$0xff]
      %v774 = vld [vmem:[%s2 + $0x10] sm:$0xff]
      %v775 = vld [vmem:[%s2 + $0x18] sm:$0xff]
      %v776 = vld [vmem:[%s2 + $0x20] sm:$0xff]
      %v777 = vld [vmem:[%s2 + $0x28] sm:$0xff]
      %v778 = vld [vmem:[%s2 + $0x30] sm:$0xff]
      %v779 = vld [vmem:[%s2 + $0x38] sm:$0xff]
      %v780 = vld [vmem:[%s2 + $0x40] sm:$0xff]
      %v781 = vld [vmem:[%s2 + $0x48] sm:$0xff]
      %v782 = vld [vmem:[%s2 + $0x50] sm:$0xff]
      %v783 = vld [vmem:[%s2 + $0x58] sm:$0xff]
      %v784 = vld [vmem:[%s2 + $0x60] sm:$0xff]
      %v785 = vld [vmem:[%s2 + $0x68] sm:$0xff]
      %v786 = vld [vmem:[%s2 + $0x70] sm:$0xff]
      %v787 = vld [vmem:[%s2 + $0x78] sm:$0xff]
      %v788 = vld [vmem:[#allocation3 + $0x1] sm:$0xff]
      %v789 = vld [vmem:[#allocation3 + $0x9] sm:$0xff]
      %s790 = scalar_lea.vmem %s2, 128
      %v791 = vld [vmem:[%s790] sm:$0xff]
      %v792 = vld [vmem:[%s790 + $0x8] sm:$0xff]
      %v793 = vld [vmem:[%s790 + $0x10] sm:$0xff]
      %v794 = vld [vmem:[%s790 + $0x18] sm:$0xff]
      %v795 = vld [vmem:[%s790 + $0x20] sm:$0xff]
      %v796 = vld [vmem:[%s790 + $0x28] sm:$0xff]
      %v797 = vld [vmem:[%s790 + $0x30] sm:$0xff]
      %v798 = vld [vmem:[%s790 + $0x38] sm:$0xff]
      %v799 = vld [vmem:[%s790 + $0x40] sm:$0xff]
      %v800 = vld [vmem:[%s790 + $0x48] sm:$0xff]
      %v801 = vld [vmem:[%s790 + $0x50] sm:$0xff]
      %v802 = vld [vmem:[%s790 + $0x58] sm:$0xff]
      %v803 = vld [vmem:[%s790 + $0x60] sm:$0xff]
      %v804 = vld [vmem:[%s790 + $0x68] sm:$0xff]
      %v805 = vld [vmem:[%s790 + $0x70] sm:$0xff]
      %v806 = vld [vmem:[%s790 + $0x78] sm:$0xff]
      %807 = vmatprep.subr.mxu0 0.0
      %808 = vmatpush1.msra.mxu0 %v806
      %809 = vmatprep.subr.mxu0 0.0
      %810 = vmatpush1.msra.mxu0 %v805
      %811 = vmatprep.subr.mxu0 0.0
      %812 = vmatpush1.msra.mxu0 %v804
      %813 = vmatprep.subr.mxu0 0.0
      %814 = vmatpush1.msra.mxu0 %v803
      %815 = vmatprep.subr.mxu0 0.0
      %816 = vmatpush1.msra.mxu0 %v802
      %817 = vmatprep.subr.mxu0 0.0
      %818 = vmatpush1.msra.mxu0 %v801
      %819 = vmatprep.subr.mxu0 0.0
      %820 = vmatpush1.msra.mxu0 %v800
      %821 = vmatprep.subr.mxu0 0.0
      %822 = vmatpush1.msra.mxu0 %v799
      %823 = vmatprep.subr.mxu0 0.0
      %824 = vmatpush1.msra.mxu0 %v798
      %825 = vmatprep.subr.mxu0 0.0
      %826 = vmatpush1.msra.mxu0 %v797
      %827 = vmatprep.subr.mxu0 0.0
      %828 = vmatpush1.msra.mxu0 %v796
      %829 = vmatprep.subr.mxu0 0.0
      %830 = vmatpush1.msra.mxu0 %v795
      %831 = vmatprep.subr.mxu0 0.0
      %832 = vmatpush1.msra.mxu0 %v794
      %833 = vmatprep.subr.mxu0 0.0
      %834 = vmatpush1.msra.mxu0 %v793
      %835 = vmatprep.subr.mxu0 0.0
      %836 = vmatpush1.msra.mxu0 %v792
      %837 = vmatprep.subr.mxu0 0.0
      %838 = vmatpush1.msra.mxu0 %v791
      %839 = vmatprep.subr.mxu0 0.0
      %840 = vmatpush2.msra.mxu0 0.0
      %841 = vmatprep.subr.mxu0 0.0
      %842 = vmatpush2.msra.mxu0 0.0
      %843 = vmatprep.subr.mxu0 0.0
      %844 = vmatpush2.msra.mxu0 0.0
      %845 = vmatprep.subr.mxu0 0.0
      %846 = vmatpush2.msra.mxu0 0.0
      %847 = vmatprep.subr.mxu0 0.0
      %848 = vmatpush2.msra.mxu0 0.0
      %849 = vmatprep.subr.mxu0 0.0
      %850 = vmatpush2.msra.mxu0 0.0
      %851 = vmatprep.subr.mxu0 0.0
      %852 = vmatpush2.msra.mxu0 0.0
      %853 = vmatprep.subr.mxu0 0.0
      %854 = vmatpush2.msra.mxu0 0.0
      %855 = vmatprep.subr.mxu0 0.0
      %856 = vmatpush2.msra.mxu0 0.0
      %857 = vmatprep.subr.mxu0 0.0
      %858 = vmatpush2.msra.mxu0 0.0
      %859 = vmatprep.subr.mxu0 0.0
      %860 = vmatpush2.msra.mxu0 0.0
      %861 = vmatprep.subr.mxu0 0.0
      %862 = vmatpush2.msra.mxu0 0.0
      %863 = vmatprep.subr.mxu0 0.0
      %864 = vmatpush2.msra.mxu0 0.0
      %865 = vmatprep.subr.mxu0 0.0
      %866 = vmatpush2.msra.mxu0 0.0
      %867 = vmatprep.subr.mxu0 0.0
      %868 = vmatpush2.msra.mxu0 0.0
      %869 = vmatprep.subr.mxu0 0.0
      %870 = vmatpush2.msra.mxu0 0.0
      %871 = vmatprep.mubr.f32.mxu0 0.0
      %872 = vmatmul.mubr.f32.gmra.mxu0 %v788
      %v873 = vpop.f32.mrf.mxu0
      %v874 = vadd.f32 0.0, %v873
      %v875 = vpop.f32.mrf.mxu0
      %876 = vmatprep.mubr.f32.mxu0 0.0
      %877 = vmatmul.mubr.f32.gmra.mxu0 %v789
      %v878 = vpop.f32.mrf.mxu0
      %v879 = vadd.f32 0.0, %v878
      %v880 = vpop.f32.mrf.mxu0
      %881 = vdwg.mxu0
      %882 = vmatprep.subr.mxu0 0.0
      %883 = vmatpush1.msra.mxu0 %v787
      %884 = vmatprep.subr.mxu0 0.0
      %885 = vmatpush1.msra.mxu0 %v786
      %886 = vmatprep.subr.mxu0 0.0
      %887 = vmatpush1.msra.mxu0 %v785
      %888 = vmatprep.subr.mxu0 0.0
      %889 = vmatpush1.msra.mxu0 %v784
      %890 = vmatprep.subr.mxu0 0.0
      %891 = vmatpush1.msra.mxu0 %v783
      %892 = vmatprep.subr.mxu0 0.0
      %893 = vmatpush1.msra.mxu0 %v782
      %894 = vmatprep.subr.mxu0 0.0
      %895 = vmatpush1.msra.mxu0 %v781
      %896 = vmatprep.subr.mxu0 0.0
      %897 = vmatpush1.msra.mxu0 %v780
      %898 = vmatprep.subr.mxu0 0.0
      %899 = vmatpush1.msra.mxu0 %v779
      %900 = vmatprep.subr.mxu0 0.0
      %901 = vmatpush1.msra.mxu0 %v778
      %902 = vmatprep.subr.mxu0 0.0
      %903 = vmatpush1.msra.mxu0 %v777
      %904 = vmatprep.subr.mxu0 0.0
      %905 = vmatpush1.msra.mxu0 %v776
      %906 = vmatprep.subr.mxu0 0.0
      %907 = vmatpush1.msra.mxu0 %v775
      %908 = vmatprep.subr.mxu0 0.0
      %909 = vmatpush1.msra.mxu0 %v774
      %910 = vmatprep.subr.mxu0 0.0
      %911 = vmatpush1.msra.mxu0 %v773
      %912 = vmatprep.subr.mxu0 0.0
      %913 = vmatpush1.msra.mxu0 %v772
      %914 = vmatprep.subr.mxu0 0.0
      %915 = vmatpush2.msra.mxu0 0.0
      %916 = vmatprep.subr.mxu0 0.0
      %917 = vmatpush2.msra.mxu0 0.0
      %918 = vmatprep.subr.mxu0 0.0
      %919 = vmatpush2.msra.mxu0 0.0
      %920 = vmatprep.subr.mxu0 0.0
      %921 = vmatpush2.msra.mxu0 0.0
      %922 = vmatprep.subr.mxu0 0.0
      %923 = vmatpush2.msra.mxu0 0.0
      %924 = vmatprep.subr.mxu0 0.0
      %925 = vmatpush2.msra.mxu0 0.0
      %926 = vmatprep.subr.mxu0 0.0
      %927 = vmatpush2.msra.mxu0 0.0
      %928 = vmatprep.subr.mxu0 0.0
      %929 = vmatpush2.msra.mxu0 0.0
      %930 = vmatprep.subr.mxu0 0.0
      %931 = vmatpush2.msra.mxu0 0.0
      %932 = vmatprep.subr.mxu0 0.0
      %933 = vmatpush2.msra.mxu0 0.0
      %934 = vmatprep.subr.mxu0 0.0
      %935 = vmatpush2.msra.mxu0 0.0
      %936 = vmatprep.subr.mxu0 0.0
      %937 = vmatpush2.msra.mxu0 0.0
      %938 = vmatprep.subr.mxu0 0.0
      %939 = vmatpush2.msra.mxu0 0.0
      %940 = vmatprep.subr.mxu0 0.0
      %941 = vmatpush2.msra.mxu0 0.0
      %942 = vmatprep.subr.mxu0 0.0
      %943 = vmatpush2.msra.mxu0 0.0
      %944 = vmatprep.subr.mxu0 0.0
      %945 = vmatpush2.msra.mxu0 0.0
      %946 = vmatprep.mubr.f32.mxu0 0.0
      %947 = vmatmul.mubr.f32.gmra.mxu0 %v770
      %v948 = vpop.f32.mrf.mxu0
      %v949 = vadd.f32 %v874, %v948
      %v950 = vpop.f32.mrf.mxu0
      %951 = vmatprep.mubr.f32.mxu0 0.0
      %952 = vmatmul.mubr.f32.gmra.mxu0 %v771
      %v953 = vpop.f32.mrf.mxu0
      %v954 = vadd.f32 %v879, %v953
      %v955 = vpop.f32.mrf.mxu0
      %956 = vdwg.mxu0
      %v957 = vld [vmem:[#allocation3 + $0x2] sm:$0xff]
      %v958 = vld [vmem:[#allocation3 + $0xa] sm:$0xff]
      %s959 = scalar_lea.vmem %s2, 256
      %v960 = vld [vmem:[%s959] sm:$0xff]
      %v961 = vld [vmem:[%s959 + $0x8] sm:$0xff]
      %v962 = vld [vmem:[%s959 + $0x10] sm:$0xff]
      %v963 = vld [vmem:[%s959 + $0x18] sm:$0xff]
      %v964 = vld [vmem:[%s959 + $0x20] sm:$0xff]
      %v965 = vld [vmem:[%s959 + $0x28] sm:$0xff]
      %v966 = vld [vmem:[%s959 + $0x30] sm:$0xff]
      %v967 = vld [vmem:[%s959 + $0x38] sm:$0xff]
      %v968 = vld [vmem:[%s959 + $0x40] sm:$0xff]
      %v969 = vld [vmem:[%s959 + $0x48] sm:$0xff]
      %v970 = vld [vmem:[%s959 + $0x50] sm:$0xff]
      %v971 = vld [vmem:[%s959 + $0x58] sm:$0xff]
      %v972 = vld [vmem:[%s959 + $0x60] sm:$0xff]
      %v973 = vld [vmem:[%s959 + $0x68] sm:$0xff]
      %v974 = vld [vmem:[%s959 + $0x70] sm:$0xff]
      %v975 = vld [vmem:[%s959 + $0x78] sm:$0xff]
      %976 = vmatprep.subr.mxu0 0.0
      %977 = vmatpush1.msra.mxu0 %v975
      %978 = vmatprep.subr.mxu0 0.0
      %979 = vmatpush1.msra.mxu0 %v974
      %980 = vmatprep.subr.mxu0 0.0
      %981 = vmatpush1.msra.mxu0 %v973
      %982 = vmatprep.subr.mxu0 0.0
      %983 = vmatpush1.msra.mxu0 %v972
      %984 = vmatprep.subr.mxu0 0.0
      %985 = vmatpush1.msra.mxu0 %v971
      %986 = vmatprep.subr.mxu0 0.0
      %987 = vmatpush1.msra.mxu0 %v970
      %988 = vmatprep.subr.mxu0 0.0
      %989 = vmatpush1.msra.mxu0 %v969
      %990 = vmatprep.subr.mxu0 0.0
      %991 = vmatpush1.msra.mxu0 %v968
      %992 = vmatprep.subr.mxu0 0.0
      %993 = vmatpush1.msra.mxu0 %v967
      %994 = vmatprep.subr.mxu0 0.0
      %995 = vmatpush1.msra.mxu0 %v966
      %996 = vmatprep.subr.mxu0 0.0
      %997 = vmatpush1.msra.mxu0 %v965
      %998 = vmatprep.subr.mxu0 0.0
      %999 = vmatpush1.msra.mxu0 %v964
      %1000 = vmatprep.subr.mxu0 0.0
      %1001 = vmatpush1.msra.mxu0 %v963
      %1002 = vmatprep.subr.mxu0 0.0
      %1003 = vmatpush1.msra.mxu0 %v962
      %1004 = vmatprep.subr.mxu0 0.0
      %1005 = vmatpush1.msra.mxu0 %v961
      %1006 = vmatprep.subr.mxu0 0.0
      %1007 = vmatpush1.msra.mxu0 %v960
      %1008 = vmatprep.subr.mxu0 0.0
      %1009 = vmatpush2.msra.mxu0 0.0
      %1010 = vmatprep.subr.mxu0 0.0
      %1011 = vmatpush2.msra.mxu0 0.0
      %1012 = vmatprep.subr.mxu0 0.0
      %1013 = vmatpush2.msra.mxu0 0.0
      %1014 = vmatprep.subr.mxu0 0.0
      %1015 = vmatpush2.msra.mxu0 0.0
      %1016 = vmatprep.subr.mxu0 0.0
      %1017 = vmatpush2.msra.mxu0 0.0
      %1018 = vmatprep.subr.mxu0 0.0
      %1019 = vmatpush2.msra.mxu0 0.0
      %1020 = vmatprep.subr.mxu0 0.0
      %1021 = vmatpush2.msra.mxu0 0.0
      %1022 = vmatprep.subr.mxu0 0.0
      %1023 = vmatpush2.msra.mxu0 0.0
      %1024 = vmatprep.subr.mxu0 0.0
      %1025 = vmatpush2.msra.mxu0 0.0
      %1026 = vmatprep.subr.mxu0 0.0
      %1027 = vmatpush2.msra.mxu0 0.0
      %1028 = vmatprep.subr.mxu0 0.0
      %1029 = vmatpush2.msra.mxu0 0.0
      %1030 = vmatprep.subr.mxu0 0.0
      %1031 = vmatpush2.msra.mxu0 0.0
      %1032 = vmatprep.subr.mxu0 0.0
      %1033 = vmatpush2.msra.mxu0 0.0
      %1034 = vmatprep.subr.mxu0 0.0
      %1035 = vmatpush2.msra.mxu0 0.0
      %1036 = vmatprep.subr.mxu0 0.0
      %1037 = vmatpush2.msra.mxu0 0.0
      %1038 = vmatprep.subr.mxu0 0.0
      %1039 = vmatpush2.msra.mxu0 0.0
      %1040 = vmatprep.mubr.f32.mxu0 0.0
      %1041 = vmatmul.mubr.f32.gmra.mxu0 %v957
      %v1042 = vpop.f32.mrf.mxu0
      %v1043 = vadd.f32 0.0, %v1042
      %v1044 = vpop.f32.mrf.mxu0
      %1045 = vmatprep.mubr.f32.mxu0 0.0
      %1046 = vmatmul.mubr.f32.gmra.mxu0 %v958
      %v1047 = vpop.f32.mrf.mxu0
      %v1048 = vadd.f32 0.0, %v1047
      %v1049 = vpop.f32.mrf.mxu0
      %1050 = vdwg.mxu0
      %v1051 = vadd.f32 %v949, %v1043
      %v1052 = vadd.f32 %v954, %v1048
      %v1053 = vadd.f32 %v1051, %v1052
      %v1054 = vrot.slane %v1053, 4
      %v1055 = vadd.f32 %v1053, %v1054
      %v1056 = vrot.slane %v1055, 2
      %v1057 = vadd.f32 %v1055, %v1056
      %v1058 = vrot.slane %v1057, 1
      %v1059 = vadd.f32 %v1057, %v1058
      %1060 = vmatprep.subr.mxu0 0.0
      %1061 = vmatpush1.msra.mxu0 %v308
      %1062 = vmatprep.subr.mxu0 0.0
      %1063 = vmatpush1.msra.mxu0 %v307
      %1064 = vmatprep.subr.mxu0 0.0
      %1065 = vmatpush1.msra.mxu0 %v306
      %1066 = vmatprep.subr.mxu0 0.0
      %1067 = vmatpush1.msra.mxu0 %v305
      %1068 = vmatprep.subr.mxu0 0.0
      %1069 = vmatpush1.msra.mxu0 %v304
      %1070 = vmatprep.subr.mxu0 0.0
      %1071 = vmatpush1.msra.mxu0 %v303
      %1072 = vmatprep.subr.mxu0 0.0
      %1073 = vmatpush1.msra.mxu0 %v302
      %1074 = vmatprep.subr.mxu0 0.0
      %1075 = vmatpush1.msra.mxu0 %v301
      %1076 = vmatprep.subr.mxu0 0.0
      %1077 = vmatpush1.msra.mxu0 %v300
      %1078 = vmatprep.subr.mxu0 0.0
      %1079 = vmatpush1.msra.mxu0 %v299
      %1080 = vmatprep.subr.mxu0 0.0
      %1081 = vmatpush1.msra.mxu0 %v298
      %1082 = vmatprep.subr.mxu0 0.0
      %1083 = vmatpush1.msra.mxu0 %v297
      %1084 = vmatprep.subr.mxu0 0.0
      %1085 = vmatpush1.msra.mxu0 %v296
      %1086 = vmatprep.subr.mxu0 0.0
      %1087 = vmatpush1.msra.mxu0 %v295
      %1088 = vmatprep.subr.mxu0 0.0
      %1089 = vmatpush1.msra.mxu0 %v294
      %1090 = vmatprep.subr.mxu0 0.0
      %1091 = vmatpush1.msra.mxu0 %v293
      %1092 = vmatprep.subr.mxu0 0.0
      %1093 = vmatpush2.msra.mxu0 0.0
      %1094 = vmatprep.subr.mxu0 0.0
      %1095 = vmatpush2.msra.mxu0 0.0
      %1096 = vmatprep.subr.mxu0 0.0
      %1097 = vmatpush2.msra.mxu0 0.0
      %1098 = vmatprep.subr.mxu0 0.0
      %1099 = vmatpush2.msra.mxu0 0.0
      %1100 = vmatprep.subr.mxu0 0.0
      %1101 = vmatpush2.msra.mxu0 0.0
      %1102 = vmatprep.subr.mxu0 0.0
      %1103 = vmatpush2.msra.mxu0 0.0
      %1104 = vmatprep.subr.mxu0 0.0
      %1105 = vmatpush2.msra.mxu0 0.0
      %1106 = vmatprep.subr.mxu0 0.0
      %1107 = vmatpush2.msra.mxu0 0.0
      %1108 = vmatprep.subr.mxu0 0.0
      %1109 = vmatpush2.msra.mxu0 0.0
      %1110 = vmatprep.subr.mxu0 0.0
      %1111 = vmatpush2.msra.mxu0 0.0
      %1112 = vmatprep.subr.mxu0 0.0
      %1113 = vmatpush2.msra.mxu0 0.0
      %1114 = vmatprep.subr.mxu0 0.0
      %1115 = vmatpush2.msra.mxu0 0.0
      %1116 = vmatprep.subr.mxu0 0.0
      %1117 = vmatpush2.msra.mxu0 0.0
      %1118 = vmatprep.subr.mxu0 0.0
      %1119 = vmatpush2.msra.mxu0 0.0
      %1120 = vmatprep.subr.mxu0 0.0
      %1121 = vmatpush2.msra.mxu0 0.0
      %1122 = vmatprep.subr.mxu0 0.0
      %1123 = vmatpush2.msra.mxu0 0.0
      %1124 = vmatprep.mubr.f32.mxu0 0.0
      %1125 = vmatmul.mubr.f32.gmra.mxu0 %v1059
      %v1126 = vpop.f32.mrf.mxu0
      %v1127 = vadd.f32 0.0, %v1126
      %v1128 = vpop.f32.mrf.mxu0
      %1129 = vdwg.mxu0
      %v1130 = vmul.f32 %v1127, 0.00390625
      %v1131 = vlaneseq
      %v1132 = vshrl.u32 %v1131, 7
      %v1133 = vsub.s32 0, %v1132
      %v1134 = vrot.slane %v1130, %v1133
      %v1135 = vsub.f32 %v1051, %v1134
      %v1136 = vsub.f32 %v1052, %v1134
      %v1137 = vmul.f32 %v1135, %v1135
      %v1138 = vmul.f32 %v1136, %v1136
      %v1139 = vadd.f32 %v1137, %v1138
      %v1140 = vrot.slane %v1139, 4
      %v1141 = vadd.f32 %v1139, %v1140
      %v1142 = vrot.slane %v1141, 2
      %v1143 = vadd.f32 %v1141, %v1142
      %v1144 = vrot.slane %v1143, 1
      %v1145 = vadd.f32 %v1143, %v1144
      %1146 = vmatprep.subr.mxu0 0.0
      %1147 = vmatpush1.msra.mxu0 %v308
      %1148 = vmatprep.subr.mxu0 0.0
      %1149 = vmatpush1.msra.mxu0 %v307
      %1150 = vmatprep.subr.mxu0 0.0
      %1151 = vmatpush1.msra.mxu0 %v306
      %1152 = vmatprep.subr.mxu0 0.0
      %1153 = vmatpush1.msra.mxu0 %v305
      %1154 = vmatprep.subr.mxu0 0.0
      %1155 = vmatpush1.msra.mxu0 %v304
      %1156 = vmatprep.subr.mxu0 0.0
      %1157 = vmatpush1.msra.mxu0 %v303
      %1158 = vmatprep.subr.mxu0 0.0
      %1159 = vmatpush1.msra.mxu0 %v302
      %1160 = vmatprep.subr.mxu0 0.0
      %1161 = vmatpush1.msra.mxu0 %v301
      %1162 = vmatprep.subr.mxu0 0.0
      %1163 = vmatpush1.msra.mxu0 %v300
      %1164 = vmatprep.subr.mxu0 0.0
      %1165 = vmatpush1.msra.mxu0 %v299
      %1166 = vmatprep.subr.mxu0 0.0
      %1167 = vmatpush1.msra.mxu0 %v298
      %1168 = vmatprep.subr.mxu0 0.0
      %1169 = vmatpush1.msra.mxu0 %v297
      %1170 = vmatprep.subr.mxu0 0.0
      %1171 = vmatpush1.msra.mxu0 %v296
      %1172 = vmatprep.subr.mxu0 0.0
      %1173 = vmatpush1.msra.mxu0 %v295
      %1174 = vmatprep.subr.mxu0 0.0
      %1175 = vmatpush1.msra.mxu0 %v294
      %1176 = vmatprep.subr.mxu0 0.0
      %1177 = vmatpush1.msra.mxu0 %v293
      %1178 = vmatprep.subr.mxu0 0.0
      %1179 = vmatpush2.msra.mxu0 0.0
      %1180 = vmatprep.subr.mxu0 0.0
      %1181 = vmatpush2.msra.mxu0 0.0
      %1182 = vmatprep.subr.mxu0 0.0
      %1183 = vmatpush2.msra.mxu0 0.0
      %1184 = vmatprep.subr.mxu0 0.0
      %1185 = vmatpush2.msra.mxu0 0.0
      %1186 = vmatprep.subr.mxu0 0.0
      %1187 = vmatpush2.msra.mxu0 0.0
      %1188 = vmatprep.subr.mxu0 0.0
      %1189 = vmatpush2.msra.mxu0 0.0
      %1190 = vmatprep.subr.mxu0 0.0
      %1191 = vmatpush2.msra.mxu0 0.0
      %1192 = vmatprep.subr.mxu0 0.0
      %1193 = vmatpush2.msra.mxu0 0.0
      %1194 = vmatprep.subr.mxu0 0.0
      %1195 = vmatpush2.msra.mxu0 0.0
      %1196 = vmatprep.subr.mxu0 0.0
      %1197 = vmatpush2.msra.mxu0 0.0
      %1198 = vmatprep.subr.mxu0 0.0
      %1199 = vmatpush2.msra.mxu0 0.0
      %1200 = vmatprep.subr.mxu0 0.0
      %1201 = vmatpush2.msra.mxu0 0.0
      %1202 = vmatprep.subr.mxu0 0.0
      %1203 = vmatpush2.msra.mxu0 0.0
      %1204 = vmatprep.subr.mxu0 0.0
      %1205 = vmatpush2.msra.mxu0 0.0
      %1206 = vmatprep.subr.mxu0 0.0
      %1207 = vmatpush2.msra.mxu0 0.0
      %1208 = vmatprep.subr.mxu0 0.0
      %1209 = vmatpush2.msra.mxu0 0.0
      %1210 = vmatprep.mubr.f32.mxu0 0.0
      %1211 = vmatmul.mubr.f32.gmra.mxu0 %v1145
      %v1212 = vpop.f32.mrf.mxu0
      %v1213 = vadd.f32 0.0, %v1212
      %v1214 = vpop.f32.mrf.mxu0
      %1215 = vdwg.mxu0
      %v1216 = vmul.f32 %v1213, 0.00390625
      %v1217 = vadd.f32 %v1216, 1e-05
      %v1218 = vrsqrt.pop %v1217
      %v1219 = vlaneseq
      %v1220 = vshrl.u32 %v1219, 7
      %v1221 = vsub.s32 0, %v1220
      %v1222 = vrot.slane %v1218, %v1221
      %v1223 = vmul.f32 %v1135, %v1222
      %v1224 = vmul.f32 %v1136, %v1222
      %vm1225 = vcmp.gt.f32.partialorder %v1223, 0.0
      %vm1226 = vcmp.gt.f32.partialorder %v1224, 0.0
      %v1227 = vmul.f32 %v1223, 0.2
      %v1228 = vmul.f32 %v1224, 0.2
      %v1229 = vsel %vm1225, %v1223, %v1227
      %v1230 = vsel %vm1226, %v1224, %v1228
      %1231 = vst [vmem:[#allocation4 + $0x1] sm:$0xff] %v1229
      %1232 = vst [vmem:[#allocation4 + $0x9] sm:$0xff] %v1230
      %v1233 = vld [vmem:[#allocation4] sm:$0xff]
      %v1234 = vld [vmem:[#allocation4 + $0x8] sm:$0xff]
      %v1235 = vld [vmem:[%s3] sm:$0xff]
      %v1236 = vld [vmem:[%s3 + $0x8] sm:$0xff]
      %v1237 = vld [vmem:[%s3 + $0x10] sm:$0xff]
      %v1238 = vld [vmem:[%s3 + $0x18] sm:$0xff]
      %v1239 = vld [vmem:[%s3 + $0x20] sm:$0xff]
      %v1240 = vld [vmem:[%s3 + $0x28] sm:$0xff]
      %v1241 = vld [vmem:[%s3 + $0x30] sm:$0xff]
      %v1242 = vld [vmem:[%s3 + $0x38] sm:$0xff]
      %v1243 = vld [vmem:[%s3 + $0x40] sm:$0xff]
      %v1244 = vld [vmem:[%s3 + $0x48] sm:$0xff]
      %v1245 = vld [vmem:[%s3 + $0x50] sm:$0xff]
      %v1246 = vld [vmem:[%s3 + $0x58] sm:$0xff]
      %v1247 = vld [vmem:[%s3 + $0x60] sm:$0xff]
      %v1248 = vld [vmem:[%s3 + $0x68] sm:$0xff]
      %v1249 = vld [vmem:[%s3 + $0x70] sm:$0xff]
      %v1250 = vld [vmem:[%s3 + $0x78] sm:$0xff]
      %v1251 = vld [vmem:[#allocation4 + $0x1] sm:$0xff]
      %v1252 = vld [vmem:[#allocation4 + $0x9] sm:$0xff]
      %s1253 = scalar_lea.vmem %s3, 128
      %v1254 = vld [vmem:[%s1253] sm:$0xff]
      %v1255 = vld [vmem:[%s1253 + $0x8] sm:$0xff]
      %v1256 = vld [vmem:[%s1253 + $0x10] sm:$0xff]
      %v1257 = vld [vmem:[%s1253 + $0x18] sm:$0xff]
      %v1258 = vld [vmem:[%s1253 + $0x20] sm:$0xff]
      %v1259 = vld [vmem:[%s1253 + $0x28] sm:$0xff]
      %v1260 = vld [vmem:[%s1253 + $0x30] sm:$0xff]
      %v1261 = vld [vmem:[%s1253 + $0x38] sm:$0xff]
      %v1262 = vld [vmem:[%s1253 + $0x40] sm:$0xff]
      %v1263 = vld [vmem:[%s1253 + $0x48] sm:$0xff]
      %v1264 = vld [vmem:[%s1253 + $0x50] sm:$0xff]
      %v1265 = vld [vmem:[%s1253 + $0x58] sm:$0xff]
      %v1266 = vld [vmem:[%s1253 + $0x60] sm:$0xff]
      %v1267 = vld [vmem:[%s1253 + $0x68] sm:$0xff]
      %v1268 = vld [vmem:[%s1253 + $0x70] sm:$0xff]
      %v1269 = vld [vmem:[%s1253 + $0x78] sm:$0xff]
      %1270 = vmatprep.subr.mxu0 0.0
      %1271 = vmatpush1.msra.mxu0 %v1269
      %1272 = vmatprep.subr.mxu0 0.0
      %1273 = vmatpush1.msra.mxu0 %v1268
      %1274 = vmatprep.subr.mxu0 0.0
      %1275 = vmatpush1.msra.mxu0 %v1267
      %1276 = vmatprep.subr.mxu0 0.0
      %1277 = vmatpush1.msra.mxu0 %v1266
      %1278 = vmatprep.subr.mxu0 0.0
      %1279 = vmatpush1.msra.mxu0 %v1265
      %1280 = vmatprep.subr.mxu0 0.0
      %1281 = vmatpush1.msra.mxu0 %v1264
      %1282 = vmatprep.subr.mxu0 0.0
      %1283 = vmatpush1.msra.mxu0 %v1263
      %1284 = vmatprep.subr.mxu0 0.0
      %1285 = vmatpush1.msra.mxu0 %v1262
      %1286 = vmatprep.subr.mxu0 0.0
      %1287 = vmatpush1.msra.mxu0 %v1261
      %1288 = vmatprep.subr.mxu0 0.0
      %1289 = vmatpush1.msra.mxu0 %v1260
      %1290 = vmatprep.subr.mxu0 0.0
      %1291 = vmatpush1.msra.mxu0 %v1259
      %1292 = vmatprep.subr.mxu0 0.0
      %1293 = vmatpush1.msra.mxu0 %v1258
      %1294 = vmatprep.subr.mxu0 0.0
      %1295 = vmatpush1.msra.mxu0 %v1257
      %1296 = vmatprep.subr.mxu0 0.0
      %1297 = vmatpush1.msra.mxu0 %v1256
      %1298 = vmatprep.subr.mxu0 0.0
      %1299 = vmatpush1.msra.mxu0 %v1255
      %1300 = vmatprep.subr.mxu0 0.0
      %1301 = vmatpush1.msra.mxu0 %v1254
      %1302 = vmatprep.subr.mxu0 0.0
      %1303 = vmatpush2.msra.mxu0 0.0
      %1304 = vmatprep.subr.mxu0 0.0
      %1305 = vmatpush2.msra.mxu0 0.0
      %1306 = vmatprep.subr.mxu0 0.0
      %1307 = vmatpush2.msra.mxu0 0.0
      %1308 = vmatprep.subr.mxu0 0.0
      %1309 = vmatpush2.msra.mxu0 0.0
      %1310 = vmatprep.subr.mxu0 0.0
      %1311 = vmatpush2.msra.mxu0 0.0
      %1312 = vmatprep.subr.mxu0 0.0
      %1313 = vmatpush2.msra.mxu0 0.0
      %1314 = vmatprep.subr.mxu0 0.0
      %1315 = vmatpush2.msra.mxu0 0.0
      %1316 = vmatprep.subr.mxu0 0.0
      %1317 = vmatpush2.msra.mxu0 0.0
      %1318 = vmatprep.subr.mxu0 0.0
      %1319 = vmatpush2.msra.mxu0 0.0
      %1320 = vmatprep.subr.mxu0 0.0
      %1321 = vmatpush2.msra.mxu0 0.0
      %1322 = vmatprep.subr.mxu0 0.0
      %1323 = vmatpush2.msra.mxu0 0.0
      %1324 = vmatprep.subr.mxu0 0.0
      %1325 = vmatpush2.msra.mxu0 0.0
      %1326 = vmatprep.subr.mxu0 0.0
      %1327 = vmatpush2.msra.mxu0 0.0
      %1328 = vmatprep.subr.mxu0 0.0
      %1329 = vmatpush2.msra.mxu0 0.0
      %1330 = vmatprep.subr.mxu0 0.0
      %1331 = vmatpush2.msra.mxu0 0.0
      %1332 = vmatprep.subr.mxu0 0.0
      %1333 = vmatpush2.msra.mxu0 0.0
      %1334 = vmatprep.mubr.f32.mxu0 0.0
      %1335 = vmatmul.mubr.f32.gmra.mxu0 %v1251
      %v1336 = vpop.f32.mrf.mxu0
      %v1337 = vadd.f32 0.0, %v1336
      %v1338 = vpop.f32.mrf.mxu0
      %1339 = vmatprep.mubr.f32.mxu0 0.0
      %1340 = vmatmul.mubr.f32.gmra.mxu0 %v1252
      %v1341 = vpop.f32.mrf.mxu0
      %v1342 = vadd.f32 0.0, %v1341
      %v1343 = vpop.f32.mrf.mxu0
      %1344 = vdwg.mxu0
      %1345 = vmatprep.subr.mxu0 0.0
      %1346 = vmatpush1.msra.mxu0 %v1250
      %1347 = vmatprep.subr.mxu0 0.0
      %1348 = vmatpush1.msra.mxu0 %v1249
      %1349 = vmatprep.subr.mxu0 0.0
      %1350 = vmatpush1.msra.mxu0 %v1248
      %1351 = vmatprep.subr.mxu0 0.0
      %1352 = vmatpush1.msra.mxu0 %v1247
      %1353 = vmatprep.subr.mxu0 0.0
      %1354 = vmatpush1.msra.mxu0 %v1246
      %1355 = vmatprep.subr.mxu0 0.0
      %1356 = vmatpush1.msra.mxu0 %v1245
      %1357 = vmatprep.subr.mxu0 0.0
      %1358 = vmatpush1.msra.mxu0 %v1244
      %1359 = vmatprep.subr.mxu0 0.0
      %1360 = vmatpush1.msra.mxu0 %v1243
      %1361 = vmatprep.subr.mxu0 0.0
      %1362 = vmatpush1.msra.mxu0 %v1242
      %1363 = vmatprep.subr.mxu0 0.0
      %1364 = vmatpush1.msra.mxu0 %v1241
      %1365 = vmatprep.subr.mxu0 0.0
      %1366 = vmatpush1.msra.mxu0 %v1240
      %1367 = vmatprep.subr.mxu0 0.0
      %1368 = vmatpush1.msra.mxu0 %v1239
      %1369 = vmatprep.subr.mxu0 0.0
      %1370 = vmatpush1.msra.mxu0 %v1238
      %1371 = vmatprep.subr.mxu0 0.0
      %1372 = vmatpush1.msra.mxu0 %v1237
      %1373 = vmatprep.subr.mxu0 0.0
      %1374 = vmatpush1.msra.mxu0 %v1236
      %1375 = vmatprep.subr.mxu0 0.0
      %1376 = vmatpush1.msra.mxu0 %v1235
      %1377 = vmatprep.subr.mxu0 0.0
      %1378 = vmatpush2.msra.mxu0 0.0
      %1379 = vmatprep.subr.mxu0 0.0
      %1380 = vmatpush2.msra.mxu0 0.0
      %1381 = vmatprep.subr.mxu0 0.0
      %1382 = vmatpush2.msra.mxu0 0.0
      %1383 = vmatprep.subr.mxu0 0.0
      %1384 = vmatpush2.msra.mxu0 0.0
      %1385 = vmatprep.subr.mxu0 0.0
      %1386 = vmatpush2.msra.mxu0 0.0
      %1387 = vmatprep.subr.mxu0 0.0
      %1388 = vmatpush2.msra.mxu0 0.0
      %1389 = vmatprep.subr.mxu0 0.0
      %1390 = vmatpush2.msra.mxu0 0.0
      %1391 = vmatprep.subr.mxu0 0.0
      %1392 = vmatpush2.msra.mxu0 0.0
      %1393 = vmatprep.subr.mxu0 0.0
      %1394 = vmatpush2.msra.mxu0 0.0
      %1395 = vmatprep.subr.mxu0 0.0
      %1396 = vmatpush2.msra.mxu0 0.0
      %1397 = vmatprep.subr.mxu0 0.0
      %1398 = vmatpush2.msra.mxu0 0.0
      %1399 = vmatprep.subr.mxu0 0.0
      %1400 = vmatpush2.msra.mxu0 0.0
      %1401 = vmatprep.subr.mxu0 0.0
      %1402 = vmatpush2.msra.mxu0 0.0
      %1403 = vmatprep.subr.mxu0 0.0
      %1404 = vmatpush2.msra.mxu0 0.0
      %1405 = vmatprep.subr.mxu0 0.0
      %1406 = vmatpush2.msra.mxu0 0.0
      %1407 = vmatprep.subr.mxu0 0.0
      %1408 = vmatpush2.msra.mxu0 0.0
      %1409 = vmatprep.mubr.f32.mxu0 0.0
      %1410 = vmatmul.mubr.f32.gmra.mxu0 %v1233
      %v1411 = vpop.f32.mrf.mxu0
      %v1412 = vadd.f32 %v1337, %v1411
      %v1413 = vpop.f32.mrf.mxu0
      %1414 = vmatprep.mubr.f32.mxu0 0.0
      %1415 = vmatmul.mubr.f32.gmra.mxu0 %v1234
      %v1416 = vpop.f32.mrf.mxu0
      %v1417 = vadd.f32 %v1342, %v1416
      %v1418 = vpop.f32.mrf.mxu0
      %1419 = vdwg.mxu0
      %v1420 = vld [vmem:[#allocation4 + $0x2] sm:$0xff]
      %v1421 = vld [vmem:[#allocation4 + $0xa] sm:$0xff]
      %s1422 = scalar_lea.vmem %s3, 256
      %v1423 = vld [vmem:[%s1422] sm:$0xff]
      %v1424 = vld [vmem:[%s1422 + $0x8] sm:$0xff]
      %v1425 = vld [vmem:[%s1422 + $0x10] sm:$0xff]
      %v1426 = vld [vmem:[%s1422 + $0x18] sm:$0xff]
      %v1427 = vld [vmem:[%s1422 + $0x20] sm:$0xff]
      %v1428 = vld [vmem:[%s1422 + $0x28] sm:$0xff]
      %v1429 = vld [vmem:[%s1422 + $0x30] sm:$0xff]
      %v1430 = vld [vmem:[%s1422 + $0x38] sm:$0xff]
      %v1431 = vld [vmem:[%s1422 + $0x40] sm:$0xff]
      %v1432 = vld [vmem:[%s1422 + $0x48] sm:$0xff]
      %v1433 = vld [vmem:[%s1422 + $0x50] sm:$0xff]
      %v1434 = vld [vmem:[%s1422 + $0x58] sm:$0xff]
      %v1435 = vld [vmem:[%s1422 + $0x60] sm:$0xff]
      %v1436 = vld [vmem:[%s1422 + $0x68] sm:$0xff]
      %v1437 = vld [vmem:[%s1422 + $0x70] sm:$0xff]
      %v1438 = vld [vmem:[%s1422 + $0x78] sm:$0xff]
      %1439 = vmatprep.subr.mxu0 0.0
      %1440 = vmatpush1.msra.mxu0 %v1438
      %1441 = vmatprep.subr.mxu0 0.0
      %1442 = vmatpush1.msra.mxu0 %v1437
      %1443 = vmatprep.subr.mxu0 0.0
      %1444 = vmatpush1.msra.mxu0 %v1436
      %1445 = vmatprep.subr.mxu0 0.0
      %1446 = vmatpush1.msra.mxu0 %v1435
      %1447 = vmatprep.subr.mxu0 0.0
      %1448 = vmatpush1.msra.mxu0 %v1434
      %1449 = vmatprep.subr.mxu0 0.0
      %1450 = vmatpush1.msra.mxu0 %v1433
      %1451 = vmatprep.subr.mxu0 0.0
      %1452 = vmatpush1.msra.mxu0 %v1432
      %1453 = vmatprep.subr.mxu0 0.0
      %1454 = vmatpush1.msra.mxu0 %v1431
      %1455 = vmatprep.subr.mxu0 0.0
      %1456 = vmatpush1.msra.mxu0 %v1430
      %1457 = vmatprep.subr.mxu0 0.0
      %1458 = vmatpush1.msra.mxu0 %v1429
      %1459 = vmatprep.subr.mxu0 0.0
      %1460 = vmatpush1.msra.mxu0 %v1428
      %1461 = vmatprep.subr.mxu0 0.0
      %1462 = vmatpush1.msra.mxu0 %v1427
      %1463 = vmatprep.subr.mxu0 0.0
      %1464 = vmatpush1.msra.mxu0 %v1426
      %1465 = vmatprep.subr.mxu0 0.0
      %1466 = vmatpush1.msra.mxu0 %v1425
      %1467 = vmatprep.subr.mxu0 0.0
      %1468 = vmatpush1.msra.mxu0 %v1424
      %1469 = vmatprep.subr.mxu0 0.0
      %1470 = vmatpush1.msra.mxu0 %v1423
      %1471 = vmatprep.subr.mxu0 0.0
      %1472 = vmatpush2.msra.mxu0 0.0
      %1473 = vmatprep.subr.mxu0 0.0
      %1474 = vmatpush2.msra.mxu0 0.0
      %1475 = vmatprep.subr.mxu0 0.0
      %1476 = vmatpush2.msra.mxu0 0.0
      %1477 = vmatprep.subr.mxu0 0.0
      %1478 = vmatpush2.msra.mxu0 0.0
      %1479 = vmatprep.subr.mxu0 0.0
      %1480 = vmatpush2.msra.mxu0 0.0
      %1481 = vmatprep.subr.mxu0 0.0
      %1482 = vmatpush2.msra.mxu0 0.0
      %1483 = vmatprep.subr.mxu0 0.0
      %1484 = vmatpush2.msra.mxu0 0.0
      %1485 = vmatprep.subr.mxu0 0.0
      %1486 = vmatpush2.msra.mxu0 0.0
      %1487 = vmatprep.subr.mxu0 0.0
      %1488 = vmatpush2.msra.mxu0 0.0
      %1489 = vmatprep.subr.mxu0 0.0
      %1490 = vmatpush2.msra.mxu0 0.0
      %1491 = vmatprep.subr.mxu0 0.0
      %1492 = vmatpush2.msra.mxu0 0.0
      %1493 = vmatprep.subr.mxu0 0.0
      %1494 = vmatpush2.msra.mxu0 0.0
      %1495 = vmatprep.subr.mxu0 0.0
      %1496 = vmatpush2.msra.mxu0 0.0
      %1497 = vmatprep.subr.mxu0 0.0
      %1498 = vmatpush2.msra.mxu0 0.0
      %1499 = vmatprep.subr.mxu0 0.0
      %1500 = vmatpush2.msra.mxu0 0.0
      %1501 = vmatprep.subr.mxu0 0.0
      %1502 = vmatpush2.msra.mxu0 0.0
      %1503 = vmatprep.mubr.f32.mxu0 0.0
      %1504 = vmatmul.mubr.f32.gmra.mxu0 %v1420
      %v1505 = vpop.f32.mrf.mxu0
      %v1506 = vadd.f32 0.0, %v1505
      %v1507 = vpop.f32.mrf.mxu0
      %1508 = vmatprep.mubr.f32.mxu0 0.0
      %1509 = vmatmul.mubr.f32.gmra.mxu0 %v1421
      %v1510 = vpop.f32.mrf.mxu0
      %v1511 = vadd.f32 0.0, %v1510
      %v1512 = vpop.f32.mrf.mxu0
      %1513 = vdwg.mxu0
      %v1514 = vadd.f32 %v1412, %v1506
      %v1515 = vadd.f32 %v1417, %v1511
      %v1516 = vadd.f32 %v1514, %v1515
      %v1517 = vrot.slane %v1516, 4
      %v1518 = vadd.f32 %v1516, %v1517
      %v1519 = vrot.slane %v1518, 2
      %v1520 = vadd.f32 %v1518, %v1519
      %v1521 = vrot.slane %v1520, 1
      %v1522 = vadd.f32 %v1520, %v1521
      %1523 = vmatprep.subr.mxu0 0.0
      %1524 = vmatpush1.msra.mxu0 %v308
      %1525 = vmatprep.subr.mxu0 0.0
      %1526 = vmatpush1.msra.mxu0 %v307
      %1527 = vmatprep.subr.mxu0 0.0
      %1528 = vmatpush1.msra.mxu0 %v306
      %1529 = vmatprep.subr.mxu0 0.0
      %1530 = vmatpush1.msra.mxu0 %v305
      %1531 = vmatprep.subr.mxu0 0.0
      %1532 = vmatpush1.msra.mxu0 %v304
      %1533 = vmatprep.subr.mxu0 0.0
      %1534 = vmatpush1.msra.mxu0 %v303
      %1535 = vmatprep.subr.mxu0 0.0
      %1536 = vmatpush1.msra.mxu0 %v302
      %1537 = vmatprep.subr.mxu0 0.0
      %1538 = vmatpush1.msra.mxu0 %v301
      %1539 = vmatprep.subr.mxu0 0.0
      %1540 = vmatpush1.msra.mxu0 %v300
      %1541 = vmatprep.subr.mxu0 0.0
      %1542 = vmatpush1.msra.mxu0 %v299
      %1543 = vmatprep.subr.mxu0 0.0
      %1544 = vmatpush1.msra.mxu0 %v298
      %1545 = vmatprep.subr.mxu0 0.0
      %1546 = vmatpush1.msra.mxu0 %v297
      %1547 = vmatprep.subr.mxu0 0.0
      %1548 = vmatpush1.msra.mxu0 %v296
      %1549 = vmatprep.subr.mxu0 0.0
      %1550 = vmatpush1.msra.mxu0 %v295
      %1551 = vmatprep.subr.mxu0 0.0
      %1552 = vmatpush1.msra.mxu0 %v294
      %1553 = vmatprep.subr.mxu0 0.0
      %1554 = vmatpush1.msra.mxu0 %v293
      %1555 = vmatprep.subr.mxu0 0.0
      %1556 = vmatpush2.msra.mxu0 0.0
      %1557 = vmatprep.subr.mxu0 0.0
      %1558 = vmatpush2.msra.mxu0 0.0
      %1559 = vmatprep.subr.mxu0 0.0
      %1560 = vmatpush2.msra.mxu0 0.0
      %1561 = vmatprep.subr.mxu0 0.0
      %1562 = vmatpush2.msra.mxu0 0.0
      %1563 = vmatprep.subr.mxu0 0.0
      %1564 = vmatpush2.msra.mxu0 0.0
      %1565 = vmatprep.subr.mxu0 0.0
      %1566 = vmatpush2.msra.mxu0 0.0
      %1567 = vmatprep.subr.mxu0 0.0
      %1568 = vmatpush2.msra.mxu0 0.0
      %1569 = vmatprep.subr.mxu0 0.0
      %1570 = vmatpush2.msra.mxu0 0.0
      %1571 = vmatprep.subr.mxu0 0.0
      %1572 = vmatpush2.msra.mxu0 0.0
      %1573 = vmatprep.subr.mxu0 0.0
      %1574 = vmatpush2.msra.mxu0 0.0
      %1575 = vmatprep.subr.mxu0 0.0
      %1576 = vmatpush2.msra.mxu0 0.0
      %1577 = vmatprep.subr.mxu0 0.0
      %1578 = vmatpush2.msra.mxu0 0.0
      %1579 = vmatprep.subr.mxu0 0.0
      %1580 = vmatpush2.msra.mxu0 0.0
      %1581 = vmatprep.subr.mxu0 0.0
      %1582 = vmatpush2.msra.mxu0 0.0
      %1583 = vmatprep.subr.mxu0 0.0
      %1584 = vmatpush2.msra.mxu0 0.0
      %1585 = vmatprep.subr.mxu0 0.0
      %1586 = vmatpush2.msra.mxu0 0.0
      %1587 = vmatprep.mubr.f32.mxu0 0.0
      %1588 = vmatmul.mubr.f32.gmra.mxu0 %v1522
      %v1589 = vpop.f32.mrf.mxu0
      %v1590 = vadd.f32 0.0, %v1589
      %v1591 = vpop.f32.mrf.mxu0
      %1592 = vdwg.mxu0
      %v1593 = vmul.f32 %v1590, 0.00390625
      %v1594 = vlaneseq
      %v1595 = vshrl.u32 %v1594, 7
      %v1596 = vsub.s32 0, %v1595
      %v1597 = vrot.slane %v1593, %v1596
      %v1598 = vsub.f32 %v1514, %v1597
      %v1599 = vsub.f32 %v1515, %v1597
      %v1600 = vmul.f32 %v1598, %v1598
      %v1601 = vmul.f32 %v1599, %v1599
      %v1602 = vadd.f32 %v1600, %v1601
      %v1603 = vrot.slane %v1602, 4
      %v1604 = vadd.f32 %v1602, %v1603
      %v1605 = vrot.slane %v1604, 2
      %v1606 = vadd.f32 %v1604, %v1605
      %v1607 = vrot.slane %v1606, 1
      %v1608 = vadd.f32 %v1606, %v1607
      %1609 = vmatprep.subr.mxu0 0.0
      %1610 = vmatpush1.msra.mxu0 %v308
      %1611 = vmatprep.subr.mxu0 0.0
      %1612 = vmatpush1.msra.mxu0 %v307
      %1613 = vmatprep.subr.mxu0 0.0
      %1614 = vmatpush1.msra.mxu0 %v306
      %1615 = vmatprep.subr.mxu0 0.0
      %1616 = vmatpush1.msra.mxu0 %v305
      %1617 = vmatprep.subr.mxu0 0.0
      %1618 = vmatpush1.msra.mxu0 %v304
      %1619 = vmatprep.subr.mxu0 0.0
      %1620 = vmatpush1.msra.mxu0 %v303
      %1621 = vmatprep.subr.mxu0 0.0
      %1622 = vmatpush1.msra.mxu0 %v302
      %1623 = vmatprep.subr.mxu0 0.0
      %1624 = vmatpush1.msra.mxu0 %v301
      %1625 = vmatprep.subr.mxu0 0.0
      %1626 = vmatpush1.msra.mxu0 %v300
      %1627 = vmatprep.subr.mxu0 0.0
      %1628 = vmatpush1.msra.mxu0 %v299
      %1629 = vmatprep.subr.mxu0 0.0
      %1630 = vmatpush1.msra.mxu0 %v298
      %1631 = vmatprep.subr.mxu0 0.0
      %1632 = vmatpush1.msra.mxu0 %v297
      %1633 = vmatprep.subr.mxu0 0.0
      %1634 = vmatpush1.msra.mxu0 %v296
      %1635 = vmatprep.subr.mxu0 0.0
      %1636 = vmatpush1.msra.mxu0 %v295
      %1637 = vmatprep.subr.mxu0 0.0
      %1638 = vmatpush1.msra.mxu0 %v294
      %1639 = vmatprep.subr.mxu0 0.0
      %1640 = vmatpush1.msra.mxu0 %v293
      %1641 = vmatprep.subr.mxu0 0.0
      %1642 = vmatpush2.msra.mxu0 0.0
      %1643 = vmatprep.subr.mxu0 0.0
      %1644 = vmatpush2.msra.mxu0 0.0
      %1645 = vmatprep.subr.mxu0 0.0
      %1646 = vmatpush2.msra.mxu0 0.0
      %1647 = vmatprep.subr.mxu0 0.0
      %1648 = vmatpush2.msra.mxu0 0.0
      %1649 = vmatprep.subr.mxu0 0.0
      %1650 = vmatpush2.msra.mxu0 0.0
      %1651 = vmatprep.subr.mxu0 0.0
      %1652 = vmatpush2.msra.mxu0 0.0
      %1653 = vmatprep.subr.mxu0 0.0
      %1654 = vmatpush2.msra.mxu0 0.0
      %1655 = vmatprep.subr.mxu0 0.0
      %1656 = vmatpush2.msra.mxu0 0.0
      %1657 = vmatprep.subr.mxu0 0.0
      %1658 = vmatpush2.msra.mxu0 0.0
      %1659 = vmatprep.subr.mxu0 0.0
      %1660 = vmatpush2.msra.mxu0 0.0
      %1661 = vmatprep.subr.mxu0 0.0
      %1662 = vmatpush2.msra.mxu0 0.0
      %1663 = vmatprep.subr.mxu0 0.0
      %1664 = vmatpush2.msra.mxu0 0.0
      %1665 = vmatprep.subr.mxu0 0.0
      %1666 = vmatpush2.msra.mxu0 0.0
      %1667 = vmatprep.subr.mxu0 0.0
      %1668 = vmatpush2.msra.mxu0 0.0
      %1669 = vmatprep.subr.mxu0 0.0
      %1670 = vmatpush2.msra.mxu0 0.0
      %1671 = vmatprep.subr.mxu0 0.0
      %1672 = vmatpush2.msra.mxu0 0.0
      %1673 = vmatprep.mubr.f32.mxu0 0.0
      %1674 = vmatmul.mubr.f32.gmra.mxu0 %v1608
      %v1675 = vpop.f32.mrf.mxu0
      %v1676 = vadd.f32 0.0, %v1675
      %v1677 = vpop.f32.mrf.mxu0
      %1678 = vdwg.mxu0
      %v1679 = vmul.f32 %v1676, 0.00390625
      %v1680 = vadd.f32 %v1679, 1e-05
      %v1681 = vrsqrt.pop %v1680
      %v1682 = vlaneseq
      %v1683 = vshrl.u32 %v1682, 7
      %v1684 = vsub.s32 0, %v1683
      %v1685 = vrot.slane %v1681, %v1684
      %v1686 = vmul.f32 %v1598, %v1685
      %v1687 = vmul.f32 %v1599, %v1685
      %vm1688 = vcmp.gt.f32.partialorder %v1686, 0.0
      %vm1689 = vcmp.gt.f32.partialorder %v1687, 0.0
      %v1690 = vmul.f32 %v1686, 0.2
      %v1691 = vmul.f32 %v1687, 0.2
      %v1692 = vsel %vm1688, %v1686, %v1690
      %v1693 = vsel %vm1689, %v1687, %v1691
      %1694 = vst [vmem:[#allocation5 + $0x1] sm:$0xff] %v1692
      %1695 = vst [vmem:[#allocation5 + $0x9] sm:$0xff] %v1693
      %v1696 = vld [vmem:[#allocation5] sm:$0xff]
      %v1697 = vld [vmem:[#allocation5 + $0x8] sm:$0xff]
      %v1698 = vld [vmem:[%s4] sm:$0xff]
      %v1699 = vld [vmem:[%s4 + $0x8] sm:$0xff]
      %v1700 = vld [vmem:[%s4 + $0x10] sm:$0xff]
      %v1701 = vld [vmem:[%s4 + $0x18] sm:$0xff]
      %v1702 = vld [vmem:[%s4 + $0x20] sm:$0xff]
      %v1703 = vld [vmem:[%s4 + $0x28] sm:$0xff]
      %v1704 = vld [vmem:[%s4 + $0x30] sm:$0xff]
      %v1705 = vld [vmem:[%s4 + $0x38] sm:$0xff]
      %v1706 = vld [vmem:[%s4 + $0x40] sm:$0xff]
      %v1707 = vld [vmem:[%s4 + $0x48] sm:$0xff]
      %v1708 = vld [vmem:[%s4 + $0x50] sm:$0xff]
      %v1709 = vld [vmem:[%s4 + $0x58] sm:$0xff]
      %v1710 = vld [vmem:[%s4 + $0x60] sm:$0xff]
      %v1711 = vld [vmem:[%s4 + $0x68] sm:$0xff]
      %v1712 = vld [vmem:[%s4 + $0x70] sm:$0xff]
      %v1713 = vld [vmem:[%s4 + $0x78] sm:$0xff]
      %v1714 = vld [vmem:[#allocation5 + $0x1] sm:$0xff]
      %v1715 = vld [vmem:[#allocation5 + $0x9] sm:$0xff]
      %s1716 = scalar_lea.vmem %s4, 128
      %v1717 = vld [vmem:[%s1716] sm:$0xff]
      %v1718 = vld [vmem:[%s1716 + $0x8] sm:$0xff]
      %v1719 = vld [vmem:[%s1716 + $0x10] sm:$0xff]
      %v1720 = vld [vmem:[%s1716 + $0x18] sm:$0xff]
      %v1721 = vld [vmem:[%s1716 + $0x20] sm:$0xff]
      %v1722 = vld [vmem:[%s1716 + $0x28] sm:$0xff]
      %v1723 = vld [vmem:[%s1716 + $0x30] sm:$0xff]
      %v1724 = vld [vmem:[%s1716 + $0x38] sm:$0xff]
      %v1725 = vld [vmem:[%s1716 + $0x40] sm:$0xff]
      %v1726 = vld [vmem:[%s1716 + $0x48] sm:$0xff]
      %v1727 = vld [vmem:[%s1716 + $0x50] sm:$0xff]
      %v1728 = vld [vmem:[%s1716 + $0x58] sm:$0xff]
      %v1729 = vld [vmem:[%s1716 + $0x60] sm:$0xff]
      %v1730 = vld [vmem:[%s1716 + $0x68] sm:$0xff]
      %v1731 = vld [vmem:[%s1716 + $0x70] sm:$0xff]
      %v1732 = vld [vmem:[%s1716 + $0x78] sm:$0xff]
      %1733 = vmatprep.subr.mxu0 0.0
      %1734 = vmatpush1.msra.mxu0 %v1732
      %1735 = vmatprep.subr.mxu0 0.0
      %1736 = vmatpush1.msra.mxu0 %v1731
      %1737 = vmatprep.subr.mxu0 0.0
      %1738 = vmatpush1.msra.mxu0 %v1730
      %1739 = vmatprep.subr.mxu0 0.0
      %1740 = vmatpush1.msra.mxu0 %v1729
      %1741 = vmatprep.subr.mxu0 0.0
      %1742 = vmatpush1.msra.mxu0 %v1728
      %1743 = vmatprep.subr.mxu0 0.0
      %1744 = vmatpush1.msra.mxu0 %v1727
      %1745 = vmatprep.subr.mxu0 0.0
      %1746 = vmatpush1.msra.mxu0 %v1726
      %1747 = vmatprep.subr.mxu0 0.0
      %1748 = vmatpush1.msra.mxu0 %v1725
      %1749 = vmatprep.subr.mxu0 0.0
      %1750 = vmatpush1.msra.mxu0 %v1724
      %1751 = vmatprep.subr.mxu0 0.0
      %1752 = vmatpush1.msra.mxu0 %v1723
      %1753 = vmatprep.subr.mxu0 0.0
      %1754 = vmatpush1.msra.mxu0 %v1722
      %1755 = vmatprep.subr.mxu0 0.0
      %1756 = vmatpush1.msra.mxu0 %v1721
      %1757 = vmatprep.subr.mxu0 0.0
      %1758 = vmatpush1.msra.mxu0 %v1720
      %1759 = vmatprep.subr.mxu0 0.0
      %1760 = vmatpush1.msra.mxu0 %v1719
      %1761 = vmatprep.subr.mxu0 0.0
      %1762 = vmatpush1.msra.mxu0 %v1718
      %1763 = vmatprep.subr.mxu0 0.0
      %1764 = vmatpush1.msra.mxu0 %v1717
      %1765 = vmatprep.subr.mxu0 0.0
      %1766 = vmatpush2.msra.mxu0 0.0
      %1767 = vmatprep.subr.mxu0 0.0
      %1768 = vmatpush2.msra.mxu0 0.0
      %1769 = vmatprep.subr.mxu0 0.0
      %1770 = vmatpush2.msra.mxu0 0.0
      %1771 = vmatprep.subr.mxu0 0.0
      %1772 = vmatpush2.msra.mxu0 0.0
      %1773 = vmatprep.subr.mxu0 0.0
      %1774 = vmatpush2.msra.mxu0 0.0
      %1775 = vmatprep.subr.mxu0 0.0
      %1776 = vmatpush2.msra.mxu0 0.0
      %1777 = vmatprep.subr.mxu0 0.0
      %1778 = vmatpush2.msra.mxu0 0.0
      %1779 = vmatprep.subr.mxu0 0.0
      %1780 = vmatpush2.msra.mxu0 0.0
      %1781 = vmatprep.subr.mxu0 0.0
      %1782 = vmatpush2.msra.mxu0 0.0
      %1783 = vmatprep.subr.mxu0 0.0
      %1784 = vmatpush2.msra.mxu0 0.0
      %1785 = vmatprep.subr.mxu0 0.0
      %1786 = vmatpush2.msra.mxu0 0.0
      %1787 = vmatprep.subr.mxu0 0.0
      %1788 = vmatpush2.msra.mxu0 0.0
      %1789 = vmatprep.subr.mxu0 0.0
      %1790 = vmatpush2.msra.mxu0 0.0
      %1791 = vmatprep.subr.mxu0 0.0
      %1792 = vmatpush2.msra.mxu0 0.0
      %1793 = vmatprep.subr.mxu0 0.0
      %1794 = vmatpush2.msra.mxu0 0.0
      %1795 = vmatprep.subr.mxu0 0.0
      %1796 = vmatpush2.msra.mxu0 0.0
      %1797 = vmatprep.mubr.f32.mxu0 0.0
      %1798 = vmatmul.mubr.f32.gmra.mxu0 %v1714
      %v1799 = vpop.f32.mrf.mxu0
      %v1800 = vadd.f32 0.0, %v1799
      %v1801 = vpop.f32.mrf.mxu0
      %1802 = vmatprep.mubr.f32.mxu0 0.0
      %1803 = vmatmul.mubr.f32.gmra.mxu0 %v1715
      %v1804 = vpop.f32.mrf.mxu0
      %v1805 = vadd.f32 0.0, %v1804
      %v1806 = vpop.f32.mrf.mxu0
      %1807 = vdwg.mxu0
      %1808 = vmatprep.subr.mxu0 0.0
      %1809 = vmatpush1.msra.mxu0 %v1713
      %1810 = vmatprep.subr.mxu0 0.0
      %1811 = vmatpush1.msra.mxu0 %v1712
      %1812 = vmatprep.subr.mxu0 0.0
      %1813 = vmatpush1.msra.mxu0 %v1711
      %1814 = vmatprep.subr.mxu0 0.0
      %1815 = vmatpush1.msra.mxu0 %v1710
      %1816 = vmatprep.subr.mxu0 0.0
      %1817 = vmatpush1.msra.mxu0 %v1709
      %1818 = vmatprep.subr.mxu0 0.0
      %1819 = vmatpush1.msra.mxu0 %v1708
      %1820 = vmatprep.subr.mxu0 0.0
      %1821 = vmatpush1.msra.mxu0 %v1707
      %1822 = vmatprep.subr.mxu0 0.0
      %1823 = vmatpush1.msra.mxu0 %v1706
      %1824 = vmatprep.subr.mxu0 0.0
      %1825 = vmatpush1.msra.mxu0 %v1705
      %1826 = vmatprep.subr.mxu0 0.0
      %1827 = vmatpush1.msra.mxu0 %v1704
      %1828 = vmatprep.subr.mxu0 0.0
      %1829 = vmatpush1.msra.mxu0 %v1703
      %1830 = vmatprep.subr.mxu0 0.0
      %1831 = vmatpush1.msra.mxu0 %v1702
      %1832 = vmatprep.subr.mxu0 0.0
      %1833 = vmatpush1.msra.mxu0 %v1701
      %1834 = vmatprep.subr.mxu0 0.0
      %1835 = vmatpush1.msra.mxu0 %v1700
      %1836 = vmatprep.subr.mxu0 0.0
      %1837 = vmatpush1.msra.mxu0 %v1699
      %1838 = vmatprep.subr.mxu0 0.0
      %1839 = vmatpush1.msra.mxu0 %v1698
      %1840 = vmatprep.subr.mxu0 0.0
      %1841 = vmatpush2.msra.mxu0 0.0
      %1842 = vmatprep.subr.mxu0 0.0
      %1843 = vmatpush2.msra.mxu0 0.0
      %1844 = vmatprep.subr.mxu0 0.0
      %1845 = vmatpush2.msra.mxu0 0.0
      %1846 = vmatprep.subr.mxu0 0.0
      %1847 = vmatpush2.msra.mxu0 0.0
      %1848 = vmatprep.subr.mxu0 0.0
      %1849 = vmatpush2.msra.mxu0 0.0
      %1850 = vmatprep.subr.mxu0 0.0
      %1851 = vmatpush2.msra.mxu0 0.0
      %1852 = vmatprep.subr.mxu0 0.0
      %1853 = vmatpush2.msra.mxu0 0.0
      %1854 = vmatprep.subr.mxu0 0.0
      %1855 = vmatpush2.msra.mxu0 0.0
      %1856 = vmatprep.subr.mxu0 0.0
      %1857 = vmatpush2.msra.mxu0 0.0
      %1858 = vmatprep.subr.mxu0 0.0
      %1859 = vmatpush2.msra.mxu0 0.0
      %1860 = vmatprep.subr.mxu0 0.0
      %1861 = vmatpush2.msra.mxu0 0.0
      %1862 = vmatprep.subr.mxu0 0.0
      %1863 = vmatpush2.msra.mxu0 0.0
      %1864 = vmatprep.subr.mxu0 0.0
      %1865 = vmatpush2.msra.mxu0 0.0
      %1866 = vmatprep.subr.mxu0 0.0
      %1867 = vmatpush2.msra.mxu0 0.0
      %1868 = vmatprep.subr.mxu0 0.0
      %1869 = vmatpush2.msra.mxu0 0.0
      %1870 = vmatprep.subr.mxu0 0.0
      %1871 = vmatpush2.msra.mxu0 0.0
      %1872 = vmatprep.mubr.f32.mxu0 0.0
      %1873 = vmatmul.mubr.f32.gmra.mxu0 %v1696
      %v1874 = vpop.f32.mrf.mxu0
      %v1875 = vadd.f32 %v1800, %v1874
      %v1876 = vpop.f32.mrf.mxu0
      %1877 = vmatprep.mubr.f32.mxu0 0.0
      %1878 = vmatmul.mubr.f32.gmra.mxu0 %v1697
      %v1879 = vpop.f32.mrf.mxu0
      %v1880 = vadd.f32 %v1805, %v1879
      %v1881 = vpop.f32.mrf.mxu0
      %1882 = vdwg.mxu0
      %v1883 = vld [vmem:[#allocation5 + $0x2] sm:$0xff]
      %v1884 = vld [vmem:[#allocation5 + $0xa] sm:$0xff]
      %s1885 = scalar_lea.vmem %s4, 256
      %v1886 = vld [vmem:[%s1885] sm:$0xff]
      %v1887 = vld [vmem:[%s1885 + $0x8] sm:$0xff]
      %v1888 = vld [vmem:[%s1885 + $0x10] sm:$0xff]
      %v1889 = vld [vmem:[%s1885 + $0x18] sm:$0xff]
      %v1890 = vld [vmem:[%s1885 + $0x20] sm:$0xff]
      %v1891 = vld [vmem:[%s1885 + $0x28] sm:$0xff]
      %v1892 = vld [vmem:[%s1885 + $0x30] sm:$0xff]
      %v1893 = vld [vmem:[%s1885 + $0x38] sm:$0xff]
      %v1894 = vld [vmem:[%s1885 + $0x40] sm:$0xff]
      %v1895 = vld [vmem:[%s1885 + $0x48] sm:$0xff]
      %v1896 = vld [vmem:[%s1885 + $0x50] sm:$0xff]
      %v1897 = vld [vmem:[%s1885 + $0x58] sm:$0xff]
      %v1898 = vld [vmem:[%s1885 + $0x60] sm:$0xff]
      %v1899 = vld [vmem:[%s1885 + $0x68] sm:$0xff]
      %v1900 = vld [vmem:[%s1885 + $0x70] sm:$0xff]
      %v1901 = vld [vmem:[%s1885 + $0x78] sm:$0xff]
      %1902 = vmatprep.subr.mxu0 0.0
      %1903 = vmatpush1.msra.mxu0 %v1901
      %1904 = vmatprep.subr.mxu0 0.0
      %1905 = vmatpush1.msra.mxu0 %v1900
      %1906 = vmatprep.subr.mxu0 0.0
      %1907 = vmatpush1.msra.mxu0 %v1899
      %1908 = vmatprep.subr.mxu0 0.0
      %1909 = vmatpush1.msra.mxu0 %v1898
      %1910 = vmatprep.subr.mxu0 0.0
      %1911 = vmatpush1.msra.mxu0 %v1897
      %1912 = vmatprep.subr.mxu0 0.0
      %1913 = vmatpush1.msra.mxu0 %v1896
      %1914 = vmatprep.subr.mxu0 0.0
      %1915 = vmatpush1.msra.mxu0 %v1895
      %1916 = vmatprep.subr.mxu0 0.0
      %1917 = vmatpush1.msra.mxu0 %v1894
      %1918 = vmatprep.subr.mxu0 0.0
      %1919 = vmatpush1.msra.mxu0 %v1893
      %1920 = vmatprep.subr.mxu0 0.0
      %1921 = vmatpush1.msra.mxu0 %v1892
      %1922 = vmatprep.subr.mxu0 0.0
      %1923 = vmatpush1.msra.mxu0 %v1891
      %1924 = vmatprep.subr.mxu0 0.0
      %1925 = vmatpush1.msra.mxu0 %v1890
      %1926 = vmatprep.subr.mxu0 0.0
      %1927 = vmatpush1.msra.mxu0 %v1889
      %1928 = vmatprep.subr.mxu0 0.0
      %1929 = vmatpush1.msra.mxu0 %v1888
      %1930 = vmatprep.subr.mxu0 0.0
      %1931 = vmatpush1.msra.mxu0 %v1887
      %1932 = vmatprep.subr.mxu0 0.0
      %1933 = vmatpush1.msra.mxu0 %v1886
      %1934 = vmatprep.subr.mxu0 0.0
      %1935 = vmatpush2.msra.mxu0 0.0
      %1936 = vmatprep.subr.mxu0 0.0
      %1937 = vmatpush2.msra.mxu0 0.0
      %1938 = vmatprep.subr.mxu0 0.0
      %1939 = vmatpush2.msra.mxu0 0.0
      %1940 = vmatprep.subr.mxu0 0.0
      %1941 = vmatpush2.msra.mxu0 0.0
      %1942 = vmatprep.subr.mxu0 0.0
      %1943 = vmatpush2.msra.mxu0 0.0
      %1944 = vmatprep.subr.mxu0 0.0
      %1945 = vmatpush2.msra.mxu0 0.0
      %1946 = vmatprep.subr.mxu0 0.0
      %1947 = vmatpush2.msra.mxu0 0.0
      %1948 = vmatprep.subr.mxu0 0.0
      %1949 = vmatpush2.msra.mxu0 0.0
      %1950 = vmatprep.subr.mxu0 0.0
      %1951 = vmatpush2.msra.mxu0 0.0
      %1952 = vmatprep.subr.mxu0 0.0
      %1953 = vmatpush2.msra.mxu0 0.0
      %1954 = vmatprep.subr.mxu0 0.0
      %1955 = vmatpush2.msra.mxu0 0.0
      %1956 = vmatprep.subr.mxu0 0.0
      %1957 = vmatpush2.msra.mxu0 0.0
      %1958 = vmatprep.subr.mxu0 0.0
      %1959 = vmatpush2.msra.mxu0 0.0
      %1960 = vmatprep.subr.mxu0 0.0
      %1961 = vmatpush2.msra.mxu0 0.0
      %1962 = vmatprep.subr.mxu0 0.0
      %1963 = vmatpush2.msra.mxu0 0.0
      %1964 = vmatprep.subr.mxu0 0.0
      %1965 = vmatpush2.msra.mxu0 0.0
      %1966 = vmatprep.mubr.f32.mxu0 0.0
      %1967 = vmatmul.mubr.f32.gmra.mxu0 %v1883
      %v1968 = vpop.f32.mrf.mxu0
      %v1969 = vadd.f32 0.0, %v1968
      %v1970 = vpop.f32.mrf.mxu0
      %1971 = vmatprep.mubr.f32.mxu0 0.0
      %1972 = vmatmul.mubr.f32.gmra.mxu0 %v1884
      %v1973 = vpop.f32.mrf.mxu0
      %v1974 = vadd.f32 0.0, %v1973
      %v1975 = vpop.f32.mrf.mxu0
      %1976 = vdwg.mxu0
      %v1977 = vadd.f32 %v1875, %v1969
      %v1978 = vadd.f32 %v1880, %v1974
      %v1979 = vadd.f32 %v1977, %v1978
      %v1980 = vrot.slane %v1979, 4
      %v1981 = vadd.f32 %v1979, %v1980
      %v1982 = vrot.slane %v1981, 2
      %v1983 = vadd.f32 %v1981, %v1982
      %v1984 = vrot.slane %v1983, 1
      %v1985 = vadd.f32 %v1983, %v1984
      %1986 = vmatprep.subr.mxu0 0.0
      %1987 = vmatpush1.msra.mxu0 %v308
      %1988 = vmatprep.subr.mxu0 0.0
      %1989 = vmatpush1.msra.mxu0 %v307
      %1990 = vmatprep.subr.mxu0 0.0
      %1991 = vmatpush1.msra.mxu0 %v306
      %1992 = vmatprep.subr.mxu0 0.0
      %1993 = vmatpush1.msra.mxu0 %v305
      %1994 = vmatprep.subr.mxu0 0.0
      %1995 = vmatpush1.msra.mxu0 %v304
      %1996 = vmatprep.subr.mxu0 0.0
      %1997 = vmatpush1.msra.mxu0 %v303
      %1998 = vmatprep.subr.mxu0 0.0
      %1999 = vmatpush1.msra.mxu0 %v302
      %2000 = vmatprep.subr.mxu0 0.0
      %2001 = vmatpush1.msra.mxu0 %v301
      %2002 = vmatprep.subr.mxu0 0.0
      %2003 = vmatpush1.msra.mxu0 %v300
      %2004 = vmatprep.subr.mxu0 0.0
      %2005 = vmatpush1.msra.mxu0 %v299
      %2006 = vmatprep.subr.mxu0 0.0
      %2007 = vmatpush1.msra.mxu0 %v298
      %2008 = vmatprep.subr.mxu0 0.0
      %2009 = vmatpush1.msra.mxu0 %v297
      %2010 = vmatprep.subr.mxu0 0.0
      %2011 = vmatpush1.msra.mxu0 %v296
      %2012 = vmatprep.subr.mxu0 0.0
      %2013 = vmatpush1.msra.mxu0 %v295
      %2014 = vmatprep.subr.mxu0 0.0
      %2015 = vmatpush1.msra.mxu0 %v294
      %2016 = vmatprep.subr.mxu0 0.0
      %2017 = vmatpush1.msra.mxu0 %v293
      %2018 = vmatprep.subr.mxu0 0.0
      %2019 = vmatpush2.msra.mxu0 0.0
      %2020 = vmatprep.subr.mxu0 0.0
      %2021 = vmatpush2.msra.mxu0 0.0
      %2022 = vmatprep.subr.mxu0 0.0
      %2023 = vmatpush2.msra.mxu0 0.0
      %2024 = vmatprep.subr.mxu0 0.0
      %2025 = vmatpush2.msra.mxu0 0.0
      %2026 = vmatprep.subr.mxu0 0.0
      %2027 = vmatpush2.msra.mxu0 0.0
      %2028 = vmatprep.subr.mxu0 0.0
      %2029 = vmatpush2.msra.mxu0 0.0
      %2030 = vmatprep.subr.mxu0 0.0
      %2031 = vmatpush2.msra.mxu0 0.0
      %2032 = vmatprep.subr.mxu0 0.0
      %2033 = vmatpush2.msra.mxu0 0.0
      %2034 = vmatprep.subr.mxu0 0.0
      %2035 = vmatpush2.msra.mxu0 0.0
      %2036 = vmatprep.subr.mxu0 0.0
      %2037 = vmatpush2.msra.mxu0 0.0
      %2038 = vmatprep.subr.mxu0 0.0
      %2039 = vmatpush2.msra.mxu0 0.0
      %2040 = vmatprep.subr.mxu0 0.0
      %2041 = vmatpush2.msra.mxu0 0.0
      %2042 = vmatprep.subr.mxu0 0.0
      %2043 = vmatpush2.msra.mxu0 0.0
      %2044 = vmatprep.subr.mxu0 0.0
      %2045 = vmatpush2.msra.mxu0 0.0
      %2046 = vmatprep.subr.mxu0 0.0
      %2047 = vmatpush2.msra.mxu0 0.0
      %2048 = vmatprep.subr.mxu0 0.0
      %2049 = vmatpush2.msra.mxu0 0.0
      %2050 = vmatprep.mubr.f32.mxu0 0.0
      %2051 = vmatmul.mubr.f32.gmra.mxu0 %v1985
      %v2052 = vpop.f32.mrf.mxu0
      %v2053 = vadd.f32 0.0, %v2052
      %v2054 = vpop.f32.mrf.mxu0
      %2055 = vdwg.mxu0
      %v2056 = vmul.f32 %v2053, 0.00390625
      %v2057 = vlaneseq
      %v2058 = vshrl.u32 %v2057, 7
      %v2059 = vsub.s32 0, %v2058
      %v2060 = vrot.slane %v2056, %v2059
      %v2061 = vsub.f32 %v1977, %v2060
      %v2062 = vsub.f32 %v1978, %v2060
      %v2063 = vmul.f32 %v2061, %v2061
      %v2064 = vmul.f32 %v2062, %v2062
      %v2065 = vadd.f32 %v2063, %v2064
      %v2066 = vrot.slane %v2065, 4
      %v2067 = vadd.f32 %v2065, %v2066
      %v2068 = vrot.slane %v2067, 2
      %v2069 = vadd.f32 %v2067, %v2068
      %v2070 = vrot.slane %v2069, 1
      %v2071 = vadd.f32 %v2069, %v2070
      %2072 = vmatprep.subr.mxu0 0.0
      %2073 = vmatpush1.msra.mxu0 %v308
      %2074 = vmatprep.subr.mxu0 0.0
      %2075 = vmatpush1.msra.mxu0 %v307
      %2076 = vmatprep.subr.mxu0 0.0
      %2077 = vmatpush1.msra.mxu0 %v306
      %2078 = vmatprep.subr.mxu0 0.0
      %2079 = vmatpush1.msra.mxu0 %v305
      %2080 = vmatprep.subr.mxu0 0.0
      %2081 = vmatpush1.msra.mxu0 %v304
      %2082 = vmatprep.subr.mxu0 0.0
      %2083 = vmatpush1.msra.mxu0 %v303
      %2084 = vmatprep.subr.mxu0 0.0
      %2085 = vmatpush1.msra.mxu0 %v302
      %2086 = vmatprep.subr.mxu0 0.0
      %2087 = vmatpush1.msra.mxu0 %v301
      %2088 = vmatprep.subr.mxu0 0.0
      %2089 = vmatpush1.msra.mxu0 %v300
      %2090 = vmatprep.subr.mxu0 0.0
      %2091 = vmatpush1.msra.mxu0 %v299
      %2092 = vmatprep.subr.mxu0 0.0
      %2093 = vmatpush1.msra.mxu0 %v298
      %2094 = vmatprep.subr.mxu0 0.0
      %2095 = vmatpush1.msra.mxu0 %v297
      %2096 = vmatprep.subr.mxu0 0.0
      %2097 = vmatpush1.msra.mxu0 %v296
      %2098 = vmatprep.subr.mxu0 0.0
      %2099 = vmatpush1.msra.mxu0 %v295
      %2100 = vmatprep.subr.mxu0 0.0
      %2101 = vmatpush1.msra.mxu0 %v294
      %2102 = vmatprep.subr.mxu0 0.0
      %2103 = vmatpush1.msra.mxu0 %v293
      %2104 = vmatprep.subr.mxu0 0.0
      %2105 = vmatpush2.msra.mxu0 0.0
      %2106 = vmatprep.subr.mxu0 0.0
      %2107 = vmatpush2.msra.mxu0 0.0
      %2108 = vmatprep.subr.mxu0 0.0
      %2109 = vmatpush2.msra.mxu0 0.0
      %2110 = vmatprep.subr.mxu0 0.0
      %2111 = vmatpush2.msra.mxu0 0.0
      %2112 = vmatprep.subr.mxu0 0.0
      %2113 = vmatpush2.msra.mxu0 0.0
      %2114 = vmatprep.subr.mxu0 0.0
      %2115 = vmatpush2.msra.mxu0 0.0
      %2116 = vmatprep.subr.mxu0 0.0
      %2117 = vmatpush2.msra.mxu0 0.0
      %2118 = vmatprep.subr.mxu0 0.0
      %2119 = vmatpush2.msra.mxu0 0.0
      %2120 = vmatprep.subr.mxu0 0.0
      %2121 = vmatpush2.msra.mxu0 0.0
      %2122 = vmatprep.subr.mxu0 0.0
      %2123 = vmatpush2.msra.mxu0 0.0
      %2124 = vmatprep.subr.mxu0 0.0
      %2125 = vmatpush2.msra.mxu0 0.0
      %2126 = vmatprep.subr.mxu0 0.0
      %2127 = vmatpush2.msra.mxu0 0.0
      %2128 = vmatprep.subr.mxu0 0.0
      %2129 = vmatpush2.msra.mxu0 0.0
      %2130 = vmatprep.subr.mxu0 0.0
      %2131 = vmatpush2.msra.mxu0 0.0
      %2132 = vmatprep.subr.mxu0 0.0
      %2133 = vmatpush2.msra.mxu0 0.0
      %2134 = vmatprep.subr.mxu0 0.0
      %2135 = vmatpush2.msra.mxu0 0.0
      %2136 = vmatprep.mubr.f32.mxu0 0.0
      %2137 = vmatmul.mubr.f32.gmra.mxu0 %v2071
      %v2138 = vpop.f32.mrf.mxu0
      %v2139 = vadd.f32 0.0, %v2138
      %v2140 = vpop.f32.mrf.mxu0
      %2141 = vdwg.mxu0
      %v2142 = vmul.f32 %v2139, 0.00390625
      %v2143 = vadd.f32 %v2142, 1e-05
      %v2144 = vrsqrt.pop %v2143
      %v2145 = vlaneseq
      %v2146 = vshrl.u32 %v2145, 7
      %v2147 = vsub.s32 0, %v2146
      %v2148 = vrot.slane %v2144, %v2147
      %v2149 = vmul.f32 %v2061, %v2148
      %v2150 = vmul.f32 %v2062, %v2148
      %v2151 = vadd.f32 %v766, %v2149
      %v2152 = vadd.f32 %v767, %v2150
      %2153 = vst [vmem:[#allocation4 + $0x1] sm:$0xff] %v2151
      %2154 = vst [vmem:[#allocation4 + $0x9] sm:$0xff] %v2152
      %v2155 = vld [vmem:[#allocation4] sm:$0xff]
      %v2156 = vld [vmem:[#allocation4 + $0x8] sm:$0xff]
      %v2157 = vld [vmem:[%s5] sm:$0xff]
      %v2158 = vld [vmem:[%s5 + $0x8] sm:$0xff]
      %v2159 = vld [vmem:[%s5 + $0x10] sm:$0xff]
      %v2160 = vld [vmem:[%s5 + $0x18] sm:$0xff]
      %v2161 = vld [vmem:[%s5 + $0x20] sm:$0xff]
      %v2162 = vld [vmem:[%s5 + $0x28] sm:$0xff]
      %v2163 = vld [vmem:[%s5 + $0x30] sm:$0xff]
      %v2164 = vld [vmem:[%s5 + $0x38] sm:$0xff]
      %v2165 = vld [vmem:[%s5 + $0x40] sm:$0xff]
      %v2166 = vld [vmem:[%s5 + $0x48] sm:$0xff]
      %v2167 = vld [vmem:[%s5 + $0x50] sm:$0xff]
      %v2168 = vld [vmem:[%s5 + $0x58] sm:$0xff]
      %v2169 = vld [vmem:[%s5 + $0x60] sm:$0xff]
      %v2170 = vld [vmem:[%s5 + $0x68] sm:$0xff]
      %v2171 = vld [vmem:[%s5 + $0x70] sm:$0xff]
      %v2172 = vld [vmem:[%s5 + $0x78] sm:$0xff]
      %v2173 = vld [vmem:[#allocation4 + $0x1] sm:$0xff]
      %v2174 = vld [vmem:[#allocation4 + $0x9] sm:$0xff]
      %s2175 = scalar_lea.vmem %s5, 128
      %v2176 = vld [vmem:[%s2175] sm:$0xff]
      %v2177 = vld [vmem:[%s2175 + $0x8] sm:$0xff]
      %v2178 = vld [vmem:[%s2175 + $0x10] sm:$0xff]
      %v2179 = vld [vmem:[%s2175 + $0x18] sm:$0xff]
      %v2180 = vld [vmem:[%s2175 + $0x20] sm:$0xff]
      %v2181 = vld [vmem:[%s2175 + $0x28] sm:$0xff]
      %v2182 = vld [vmem:[%s2175 + $0x30] sm:$0xff]
      %v2183 = vld [vmem:[%s2175 + $0x38] sm:$0xff]
      %v2184 = vld [vmem:[%s2175 + $0x40] sm:$0xff]
      %v2185 = vld [vmem:[%s2175 + $0x48] sm:$0xff]
      %v2186 = vld [vmem:[%s2175 + $0x50] sm:$0xff]
      %v2187 = vld [vmem:[%s2175 + $0x58] sm:$0xff]
      %v2188 = vld [vmem:[%s2175 + $0x60] sm:$0xff]
      %v2189 = vld [vmem:[%s2175 + $0x68] sm:$0xff]
      %v2190 = vld [vmem:[%s2175 + $0x70] sm:$0xff]
      %v2191 = vld [vmem:[%s2175 + $0x78] sm:$0xff]
      %2192 = vmatprep.subr.mxu0 0.0
      %2193 = vmatpush1.msra.mxu0 %v2191
      %2194 = vmatprep.subr.mxu0 0.0
      %2195 = vmatpush1.msra.mxu0 %v2190
      %2196 = vmatprep.subr.mxu0 0.0
      %2197 = vmatpush1.msra.mxu0 %v2189
      %2198 = vmatprep.subr.mxu0 0.0
      %2199 = vmatpush1.msra.mxu0 %v2188
      %2200 = vmatprep.subr.mxu0 0.0
      %2201 = vmatpush1.msra.mxu0 %v2187
      %2202 = vmatprep.subr.mxu0 0.0
      %2203 = vmatpush1.msra.mxu0 %v2186
      %2204 = vmatprep.subr.mxu0 0.0
      %2205 = vmatpush1.msra.mxu0 %v2185
      %2206 = vmatprep.subr.mxu0 0.0
      %2207 = vmatpush1.msra.mxu0 %v2184
      %2208 = vmatprep.subr.mxu0 0.0
      %2209 = vmatpush1.msra.mxu0 %v2183
      %2210 = vmatprep.subr.mxu0 0.0
      %2211 = vmatpush1.msra.mxu0 %v2182
      %2212 = vmatprep.subr.mxu0 0.0
      %2213 = vmatpush1.msra.mxu0 %v2181
      %2214 = vmatprep.subr.mxu0 0.0
      %2215 = vmatpush1.msra.mxu0 %v2180
      %2216 = vmatprep.subr.mxu0 0.0
      %2217 = vmatpush1.msra.mxu0 %v2179
      %2218 = vmatprep.subr.mxu0 0.0
      %2219 = vmatpush1.msra.mxu0 %v2178
      %2220 = vmatprep.subr.mxu0 0.0
      %2221 = vmatpush1.msra.mxu0 %v2177
      %2222 = vmatprep.subr.mxu0 0.0
      %2223 = vmatpush1.msra.mxu0 %v2176
      %2224 = vmatprep.subr.mxu0 0.0
      %2225 = vmatpush2.msra.mxu0 0.0
      %2226 = vmatprep.subr.mxu0 0.0
      %2227 = vmatpush2.msra.mxu0 0.0
      %2228 = vmatprep.subr.mxu0 0.0
      %2229 = vmatpush2.msra.mxu0 0.0
      %2230 = vmatprep.subr.mxu0 0.0
      %2231 = vmatpush2.msra.mxu0 0.0
      %2232 = vmatprep.subr.mxu0 0.0
      %2233 = vmatpush2.msra.mxu0 0.0
      %2234 = vmatprep.subr.mxu0 0.0
      %2235 = vmatpush2.msra.mxu0 0.0
      %2236 = vmatprep.subr.mxu0 0.0
      %2237 = vmatpush2.msra.mxu0 0.0
      %2238 = vmatprep.subr.mxu0 0.0
      %2239 = vmatpush2.msra.mxu0 0.0
      %2240 = vmatprep.subr.mxu0 0.0
      %2241 = vmatpush2.msra.mxu0 0.0
      %2242 = vmatprep.subr.mxu0 0.0
      %2243 = vmatpush2.msra.mxu0 0.0
      %2244 = vmatprep.subr.mxu0 0.0
      %2245 = vmatpush2.msra.mxu0 0.0
      %2246 = vmatprep.subr.mxu0 0.0
      %2247 = vmatpush2.msra.mxu0 0.0
      %2248 = vmatprep.subr.mxu0 0.0
      %2249 = vmatpush2.msra.mxu0 0.0
      %2250 = vmatprep.subr.mxu0 0.0
      %2251 = vmatpush2.msra.mxu0 0.0
      %2252 = vmatprep.subr.mxu0 0.0
      %2253 = vmatpush2.msra.mxu0 0.0
      %2254 = vmatprep.subr.mxu0 0.0
      %2255 = vmatpush2.msra.mxu0 0.0
      %2256 = vmatprep.mubr.f32.mxu0 0.0
      %2257 = vmatmul.mubr.f32.gmra.mxu0 %v2173
      %v2258 = vpop.f32.mrf.mxu0
      %v2259 = vadd.f32 0.0, %v2258
      %v2260 = vpop.f32.mrf.mxu0
      %2261 = vmatprep.mubr.f32.mxu0 0.0
      %2262 = vmatmul.mubr.f32.gmra.mxu0 %v2174
      %v2263 = vpop.f32.mrf.mxu0
      %v2264 = vadd.f32 0.0, %v2263
      %v2265 = vpop.f32.mrf.mxu0
      %2266 = vdwg.mxu0
      %2267 = vmatprep.subr.mxu0 0.0
      %2268 = vmatpush1.msra.mxu0 %v2172
      %2269 = vmatprep.subr.mxu0 0.0
      %2270 = vmatpush1.msra.mxu0 %v2171
      %2271 = vmatprep.subr.mxu0 0.0
      %2272 = vmatpush1.msra.mxu0 %v2170
      %2273 = vmatprep.subr.mxu0 0.0
      %2274 = vmatpush1.msra.mxu0 %v2169
      %2275 = vmatprep.subr.mxu0 0.0
      %2276 = vmatpush1.msra.mxu0 %v2168
      %2277 = vmatprep.subr.mxu0 0.0
      %2278 = vmatpush1.msra.mxu0 %v2167
      %2279 = vmatprep.subr.mxu0 0.0
      %2280 = vmatpush1.msra.mxu0 %v2166
      %2281 = vmatprep.subr.mxu0 0.0
      %2282 = vmatpush1.msra.mxu0 %v2165
      %2283 = vmatprep.subr.mxu0 0.0
      %2284 = vmatpush1.msra.mxu0 %v2164
      %2285 = vmatprep.subr.mxu0 0.0
      %2286 = vmatpush1.msra.mxu0 %v2163
      %2287 = vmatprep.subr.mxu0 0.0
      %2288 = vmatpush1.msra.mxu0 %v2162
      %2289 = vmatprep.subr.mxu0 0.0
      %2290 = vmatpush1.msra.mxu0 %v2161
      %2291 = vmatprep.subr.mxu0 0.0
      %2292 = vmatpush1.msra.mxu0 %v2160
      %2293 = vmatprep.subr.mxu0 0.0
      %2294 = vmatpush1.msra.mxu0 %v2159
      %2295 = vmatprep.subr.mxu0 0.0
      %2296 = vmatpush1.msra.mxu0 %v2158
      %2297 = vmatprep.subr.mxu0 0.0
      %2298 = vmatpush1.msra.mxu0 %v2157
      %2299 = vmatprep.subr.mxu0 0.0
      %2300 = vmatpush2.msra.mxu0 0.0
      %2301 = vmatprep.subr.mxu0 0.0
      %2302 = vmatpush2.msra.mxu0 0.0
      %2303 = vmatprep.subr.mxu0 0.0
      %2304 = vmatpush2.msra.mxu0 0.0
      %2305 = vmatprep.subr.mxu0 0.0
      %2306 = vmatpush2.msra.mxu0 0.0
      %2307 = vmatprep.subr.mxu0 0.0
      %2308 = vmatpush2.msra.mxu0 0.0
      %2309 = vmatprep.subr.mxu0 0.0
      %2310 = vmatpush2.msra.mxu0 0.0
      %2311 = vmatprep.subr.mxu0 0.0
      %2312 = vmatpush2.msra.mxu0 0.0
      %2313 = vmatprep.subr.mxu0 0.0
      %2314 = vmatpush2.msra.mxu0 0.0
      %2315 = vmatprep.subr.mxu0 0.0
      %2316 = vmatpush2.msra.mxu0 0.0
      %2317 = vmatprep.subr.mxu0 0.0
      %2318 = vmatpush2.msra.mxu0 0.0
      %2319 = vmatprep.subr.mxu0 0.0
      %2320 = vmatpush2.msra.mxu0 0.0
      %2321 = vmatprep.subr.mxu0 0.0
      %2322 = vmatpush2.msra.mxu0 0.0
      %2323 = vmatprep.subr.mxu0 0.0
      %2324 = vmatpush2.msra.mxu0 0.0
      %2325 = vmatprep.subr.mxu0 0.0
      %2326 = vmatpush2.msra.mxu0 0.0
      %2327 = vmatprep.subr.mxu0 0.0
      %2328 = vmatpush2.msra.mxu0 0.0
      %2329 = vmatprep.subr.mxu0 0.0
      %2330 = vmatpush2.msra.mxu0 0.0
      %2331 = vmatprep.mubr.f32.mxu0 0.0
      %2332 = vmatmul.mubr.f32.gmra.mxu0 %v2155
      %v2333 = vpop.f32.mrf.mxu0
      %v2334 = vadd.f32 %v2259, %v2333
      %v2335 = vpop.f32.mrf.mxu0
      %2336 = vmatprep.mubr.f32.mxu0 0.0
      %2337 = vmatmul.mubr.f32.gmra.mxu0 %v2156
      %v2338 = vpop.f32.mrf.mxu0
      %v2339 = vadd.f32 %v2264, %v2338
      %v2340 = vpop.f32.mrf.mxu0
      %2341 = vdwg.mxu0
      %v2342 = vld [vmem:[#allocation4 + $0x2] sm:$0xff]
      %v2343 = vld [vmem:[#allocation4 + $0xa] sm:$0xff]
      %s2344 = scalar_lea.vmem %s5, 256
      %v2345 = vld [vmem:[%s2344] sm:$0xff]
      %v2346 = vld [vmem:[%s2344 + $0x8] sm:$0xff]
      %v2347 = vld [vmem:[%s2344 + $0x10] sm:$0xff]
      %v2348 = vld [vmem:[%s2344 + $0x18] sm:$0xff]
      %v2349 = vld [vmem:[%s2344 + $0x20] sm:$0xff]
      %v2350 = vld [vmem:[%s2344 + $0x28] sm:$0xff]
      %v2351 = vld [vmem:[%s2344 + $0x30] sm:$0xff]
      %v2352 = vld [vmem:[%s2344 + $0x38] sm:$0xff]
      %v2353 = vld [vmem:[%s2344 + $0x40] sm:$0xff]
      %v2354 = vld [vmem:[%s2344 + $0x48] sm:$0xff]
      %v2355 = vld [vmem:[%s2344 + $0x50] sm:$0xff]
      %v2356 = vld [vmem:[%s2344 + $0x58] sm:$0xff]
      %v2357 = vld [vmem:[%s2344 + $0x60] sm:$0xff]
      %v2358 = vld [vmem:[%s2344 + $0x68] sm:$0xff]
      %v2359 = vld [vmem:[%s2344 + $0x70] sm:$0xff]
      %v2360 = vld [vmem:[%s2344 + $0x78] sm:$0xff]
      %2361 = vmatprep.subr.mxu0 0.0
      %2362 = vmatpush1.msra.mxu0 %v2360
      %2363 = vmatprep.subr.mxu0 0.0
      %2364 = vmatpush1.msra.mxu0 %v2359
      %2365 = vmatprep.subr.mxu0 0.0
      %2366 = vmatpush1.msra.mxu0 %v2358
      %2367 = vmatprep.subr.mxu0 0.0
      %2368 = vmatpush1.msra.mxu0 %v2357
      %2369 = vmatprep.subr.mxu0 0.0
      %2370 = vmatpush1.msra.mxu0 %v2356
      %2371 = vmatprep.subr.mxu0 0.0
      %2372 = vmatpush1.msra.mxu0 %v2355
      %2373 = vmatprep.subr.mxu0 0.0
      %2374 = vmatpush1.msra.mxu0 %v2354
      %2375 = vmatprep.subr.mxu0 0.0
      %2376 = vmatpush1.msra.mxu0 %v2353
      %2377 = vmatprep.subr.mxu0 0.0
      %2378 = vmatpush1.msra.mxu0 %v2352
      %2379 = vmatprep.subr.mxu0 0.0
      %2380 = vmatpush1.msra.mxu0 %v2351
      %2381 = vmatprep.subr.mxu0 0.0
      %2382 = vmatpush1.msra.mxu0 %v2350
      %2383 = vmatprep.subr.mxu0 0.0
      %2384 = vmatpush1.msra.mxu0 %v2349
      %2385 = vmatprep.subr.mxu0 0.0
      %2386 = vmatpush1.msra.mxu0 %v2348
      %2387 = vmatprep.subr.mxu0 0.0
      %2388 = vmatpush1.msra.mxu0 %v2347
      %2389 = vmatprep.subr.mxu0 0.0
      %2390 = vmatpush1.msra.mxu0 %v2346
      %2391 = vmatprep.subr.mxu0 0.0
      %2392 = vmatpush1.msra.mxu0 %v2345
      %2393 = vmatprep.subr.mxu0 0.0
      %2394 = vmatpush2.msra.mxu0 0.0
      %2395 = vmatprep.subr.mxu0 0.0
      %2396 = vmatpush2.msra.mxu0 0.0
      %2397 = vmatprep.subr.mxu0 0.0
      %2398 = vmatpush2.msra.mxu0 0.0
      %2399 = vmatprep.subr.mxu0 0.0
      %2400 = vmatpush2.msra.mxu0 0.0
      %2401 = vmatprep.subr.mxu0 0.0
      %2402 = vmatpush2.msra.mxu0 0.0
      %2403 = vmatprep.subr.mxu0 0.0
      %2404 = vmatpush2.msra.mxu0 0.0
      %2405 = vmatprep.subr.mxu0 0.0
      %2406 = vmatpush2.msra.mxu0 0.0
      %2407 = vmatprep.subr.mxu0 0.0
      %2408 = vmatpush2.msra.mxu0 0.0
      %2409 = vmatprep.subr.mxu0 0.0
      %2410 = vmatpush2.msra.mxu0 0.0
      %2411 = vmatprep.subr.mxu0 0.0
      %2412 = vmatpush2.msra.mxu0 0.0
      %2413 = vmatprep.subr.mxu0 0.0
      %2414 = vmatpush2.msra.mxu0 0.0
      %2415 = vmatprep.subr.mxu0 0.0
      %2416 = vmatpush2.msra.mxu0 0.0
      %2417 = vmatprep.subr.mxu0 0.0
      %2418 = vmatpush2.msra.mxu0 0.0
      %2419 = vmatprep.subr.mxu0 0.0
      %2420 = vmatpush2.msra.mxu0 0.0
      %2421 = vmatprep.subr.mxu0 0.0
      %2422 = vmatpush2.msra.mxu0 0.0
      %2423 = vmatprep.subr.mxu0 0.0
      %2424 = vmatpush2.msra.mxu0 0.0
      %2425 = vmatprep.mubr.f32.mxu0 0.0
      %2426 = vmatmul.mubr.f32.gmra.mxu0 %v2342
      %v2427 = vpop.f32.mrf.mxu0
      %v2428 = vadd.f32 0.0, %v2427
      %v2429 = vpop.f32.mrf.mxu0
      %2430 = vmatprep.mubr.f32.mxu0 0.0
      %2431 = vmatmul.mubr.f32.gmra.mxu0 %v2343
      %v2432 = vpop.f32.mrf.mxu0
      %v2433 = vadd.f32 0.0, %v2432
      %v2434 = vpop.f32.mrf.mxu0
      %2435 = vdwg.mxu0
      %v2436 = vadd.f32 %v2334, %v2428
      %v2437 = vadd.f32 %v2339, %v2433
      %v2438 = vadd.f32 %v2436, %v2437
      %v2439 = vrot.slane %v2438, 4
      %v2440 = vadd.f32 %v2438, %v2439
      %v2441 = vrot.slane %v2440, 2
      %v2442 = vadd.f32 %v2440, %v2441
      %v2443 = vrot.slane %v2442, 1
      %v2444 = vadd.f32 %v2442, %v2443
      %2445 = vmatprep.subr.mxu0 0.0
      %2446 = vmatpush1.msra.mxu0 %v308
      %2447 = vmatprep.subr.mxu0 0.0
      %2448 = vmatpush1.msra.mxu0 %v307
      %2449 = vmatprep.subr.mxu0 0.0
      %2450 = vmatpush1.msra.mxu0 %v306
      %2451 = vmatprep.subr.mxu0 0.0
      %2452 = vmatpush1.msra.mxu0 %v305
      %2453 = vmatprep.subr.mxu0 0.0
      %2454 = vmatpush1.msra.mxu0 %v304
      %2455 = vmatprep.subr.mxu0 0.0
      %2456 = vmatpush1.msra.mxu0 %v303
      %2457 = vmatprep.subr.mxu0 0.0
      %2458 = vmatpush1.msra.mxu0 %v302
      %2459 = vmatprep.subr.mxu0 0.0
      %2460 = vmatpush1.msra.mxu0 %v301
      %2461 = vmatprep.subr.mxu0 0.0
      %2462 = vmatpush1.msra.mxu0 %v300
      %2463 = vmatprep.subr.mxu0 0.0
      %2464 = vmatpush1.msra.mxu0 %v299
      %2465 = vmatprep.subr.mxu0 0.0
      %2466 = vmatpush1.msra.mxu0 %v298
      %2467 = vmatprep.subr.mxu0 0.0
      %2468 = vmatpush1.msra.mxu0 %v297
      %2469 = vmatprep.subr.mxu0 0.0
      %2470 = vmatpush1.msra.mxu0 %v296
      %2471 = vmatprep.subr.mxu0 0.0
      %2472 = vmatpush1.msra.mxu0 %v295
      %2473 = vmatprep.subr.mxu0 0.0
      %2474 = vmatpush1.msra.mxu0 %v294
      %2475 = vmatprep.subr.mxu0 0.0
      %2476 = vmatpush1.msra.mxu0 %v293
      %2477 = vmatprep.subr.mxu0 0.0
      %2478 = vmatpush2.msra.mxu0 0.0
      %2479 = vmatprep.subr.mxu0 0.0
      %2480 = vmatpush2.msra.mxu0 0.0
      %2481 = vmatprep.subr.mxu0 0.0
      %2482 = vmatpush2.msra.mxu0 0.0
      %2483 = vmatprep.subr.mxu0 0.0
      %2484 = vmatpush2.msra.mxu0 0.0
      %2485 = vmatprep.subr.mxu0 0.0
      %2486 = vmatpush2.msra.mxu0 0.0
      %2487 = vmatprep.subr.mxu0 0.0
      %2488 = vmatpush2.msra.mxu0 0.0
      %2489 = vmatprep.subr.mxu0 0.0
      %2490 = vmatpush2.msra.mxu0 0.0
      %2491 = vmatprep.subr.mxu0 0.0
      %2492 = vmatpush2.msra.mxu0 0.0
      %2493 = vmatprep.subr.mxu0 0.0
      %2494 = vmatpush2.msra.mxu0 0.0
      %2495 = vmatprep.subr.mxu0 0.0
      %2496 = vmatpush2.msra.mxu0 0.0
      %2497 = vmatprep.subr.mxu0 0.0
      %2498 = vmatpush2.msra.mxu0 0.0
      %2499 = vmatprep.subr.mxu0 0.0
      %2500 = vmatpush2.msra.mxu0 0.0
      %2501 = vmatprep.subr.mxu0 0.0
      %2502 = vmatpush2.msra.mxu0 0.0
      %2503 = vmatprep.subr.mxu0 0.0
      %2504 = vmatpush2.msra.mxu0 0.0
      %2505 = vmatprep.subr.mxu0 0.0
      %2506 = vmatpush2.msra.mxu0 0.0
      %2507 = vmatprep.subr.mxu0 0.0
      %2508 = vmatpush2.msra.mxu0 0.0
      %2509 = vmatprep.mubr.f32.mxu0 0.0
      %2510 = vmatmul.mubr.f32.gmra.mxu0 %v2444
      %v2511 = vpop.f32.mrf.mxu0
      %v2512 = vadd.f32 0.0, %v2511
      %v2513 = vpop.f32.mrf.mxu0
      %2514 = vdwg.mxu0
      %v2515 = vmul.f32 %v2512, 0.00390625
      %v2516 = vlaneseq
      %v2517 = vshrl.u32 %v2516, 7
      %v2518 = vsub.s32 0, %v2517
      %v2519 = vrot.slane %v2515, %v2518
      %v2520 = vsub.f32 %v2436, %v2519
      %v2521 = vsub.f32 %v2437, %v2519
      %v2522 = vmul.f32 %v2520, %v2520
      %v2523 = vmul.f32 %v2521, %v2521
      %v2524 = vadd.f32 %v2522, %v2523
      %v2525 = vrot.slane %v2524, 4
      %v2526 = vadd.f32 %v2524, %v2525
      %v2527 = vrot.slane %v2526, 2
      %v2528 = vadd.f32 %v2526, %v2527
      %v2529 = vrot.slane %v2528, 1
      %v2530 = vadd.f32 %v2528, %v2529
      %2531 = vmatprep.subr.mxu0 0.0
      %2532 = vmatpush1.msra.mxu0 %v308
      %2533 = vmatprep.subr.mxu0 0.0
      %2534 = vmatpush1.msra.mxu0 %v307
      %2535 = vmatprep.subr.mxu0 0.0
      %2536 = vmatpush1.msra.mxu0 %v306
      %2537 = vmatprep.subr.mxu0 0.0
      %2538 = vmatpush1.msra.mxu0 %v305
      %2539 = vmatprep.subr.mxu0 0.0
      %2540 = vmatpush1.msra.mxu0 %v304
      %2541 = vmatprep.subr.mxu0 0.0
      %2542 = vmatpush1.msra.mxu0 %v303
      %2543 = vmatprep.subr.mxu0 0.0
      %2544 = vmatpush1.msra.mxu0 %v302
      %2545 = vmatprep.subr.mxu0 0.0
      %2546 = vmatpush1.msra.mxu0 %v301
      %2547 = vmatprep.subr.mxu0 0.0
      %2548 = vmatpush1.msra.mxu0 %v300
      %2549 = vmatprep.subr.mxu0 0.0
      %2550 = vmatpush1.msra.mxu0 %v299
      %2551 = vmatprep.subr.mxu0 0.0
      %2552 = vmatpush1.msra.mxu0 %v298
      %2553 = vmatprep.subr.mxu0 0.0
      %2554 = vmatpush1.msra.mxu0 %v297
      %2555 = vmatprep.subr.mxu0 0.0
      %2556 = vmatpush1.msra.mxu0 %v296
      %2557 = vmatprep.subr.mxu0 0.0
      %2558 = vmatpush1.msra.mxu0 %v295
      %2559 = vmatprep.subr.mxu0 0.0
      %2560 = vmatpush1.msra.mxu0 %v294
      %2561 = vmatprep.subr.mxu0 0.0
      %2562 = vmatpush1.msra.mxu0 %v293
      %2563 = vmatprep.subr.mxu0 0.0
      %2564 = vmatpush2.msra.mxu0 0.0
      %2565 = vmatprep.subr.mxu0 0.0
      %2566 = vmatpush2.msra.mxu0 0.0
      %2567 = vmatprep.subr.mxu0 0.0
      %2568 = vmatpush2.msra.mxu0 0.0
      %2569 = vmatprep.subr.mxu0 0.0
      %2570 = vmatpush2.msra.mxu0 0.0
      %2571 = vmatprep.subr.mxu0 0.0
      %2572 = vmatpush2.msra.mxu0 0.0
      %2573 = vmatprep.subr.mxu0 0.0
      %2574 = vmatpush2.msra.mxu0 0.0
      %2575 = vmatprep.subr.mxu0 0.0
      %2576 = vmatpush2.msra.mxu0 0.0
      %2577 = vmatprep.subr.mxu0 0.0
      %2578 = vmatpush2.msra.mxu0 0.0
      %2579 = vmatprep.subr.mxu0 0.0
      %2580 = vmatpush2.msra.mxu0 0.0
      %2581 = vmatprep.subr.mxu0 0.0
      %2582 = vmatpush2.msra.mxu0 0.0
      %2583 = vmatprep.subr.mxu0 0.0
      %2584 = vmatpush2.msra.mxu0 0.0
      %2585 = vmatprep.subr.mxu0 0.0
      %2586 = vmatpush2.msra.mxu0 0.0
      %2587 = vmatprep.subr.mxu0 0.0
      %2588 = vmatpush2.msra.mxu0 0.0
      %2589 = vmatprep.subr.mxu0 0.0
      %2590 = vmatpush2.msra.mxu0 0.0
      %2591 = vmatprep.subr.mxu0 0.0
      %2592 = vmatpush2.msra.mxu0 0.0
      %2593 = vmatprep.subr.mxu0 0.0
      %2594 = vmatpush2.msra.mxu0 0.0
      %2595 = vmatprep.mubr.f32.mxu0 0.0
      %2596 = vmatmul.mubr.f32.gmra.mxu0 %v2530
      %v2597 = vpop.f32.mrf.mxu0
      %v2598 = vadd.f32 0.0, %v2597
      %v2599 = vpop.f32.mrf.mxu0
      %2600 = vdwg.mxu0
      %v2601 = vmul.f32 %v2598, 0.00390625
      %v2602 = vadd.f32 %v2601, 1e-05
      %v2603 = vrsqrt.pop %v2602
      %v2604 = vlaneseq
      %v2605 = vshrl.u32 %v2604, 7
      %v2606 = vsub.s32 0, %v2605
      %v2607 = vrot.slane %v2603, %v2606
      %v2608 = vmul.f32 %v2520, %v2607
      %v2609 = vmul.f32 %v2521, %v2607
      %vm2610 = vcmp.gt.f32.partialorder %v2608, 0.0
      %vm2611 = vcmp.gt.f32.partialorder %v2609, 0.0
      %v2612 = vmul.f32 %v2608, 0.2
      %v2613 = vmul.f32 %v2609, 0.2
      %v2614 = vsel %vm2610, %v2608, %v2612
      %v2615 = vsel %vm2611, %v2609, %v2613
      %2616 = vst [vmem:[%s278] sm:$0xff] %v2614
      %2617 = vst [vmem:[%s278 + $0x8] sm:$0xff] %v2615
      %p2618 = scmp.lt.s32.totalorder %s18, 1
      %s2619 = scalar_select %p2618, %s18, 1
      %s2620 = smul.addr %s2619, 2
      %s2621 = smul.addr %s2620, 8
      %s2622 = scalar_lea.vmem %s7, %s2621
      // Predicated region
      $region49: #{conv_residual_conv.1} parent=47 // pred_check
        %p2623 = pneg %p188
      $region50: #{conv_residual_conv.1} parent=47 // pred_check_branch
        %2625 = sbr.rel (%p2623) target = $region52
      $region51: #{conv_residual_conv.1} parent=47 // pred_region
        _
      $region52: #{conv_residual_conv.1} parent=47 // pred_fallthru
        _
    $region48: #{conv_residual_conv.1} parent=5 // pred_fallthru
      _
    %p2626 = scmp.le.s32.totalorder 2, %s13
    // Predicated region
    $region53: #{conv_residual_conv.1} parent=5 // pred_check
      %p2627 = pneg %p2626
    $region54: #{conv_residual_conv.1} parent=5 // pred_check_branch
      %2629 = sbr.rel (%p2627) target = $region56
    $region55: #{conv_residual_conv.1} parent=5 // pred_region
      %s2630 = ssub.s32 %s13, 2
      // Predicated region
      $region57: #{conv_residual_conv.1} parent=55 // pred_check
        %p2631 = pneg %p194
      $region58: #{conv_residual_conv.1} parent=55 // pred_check_branch
        %2633 = sbr.rel (%p2631) target = $region60
      $region59: #{conv_residual_conv.1} parent=55 // pred_region
        %p2634 = scmp.lt.s32.totalorder %s19, 1
        %s2635 = scalar_select %p2634, %s19, 1
        %s2636 = smul.addr %s2635, 2
        %s2637 = smul.addr %s2636, 8
        %s2638 = scalar_lea.vmem %s7, %s2637
      $region60: #{conv_residual_conv.1} parent=55 // pred_fallthru
        _
    $region56: #{conv_residual_conv.1} parent=5 // pred_fallthru
      _
  $region6: #{conv_residual_conv.1} parent=0 // loop_footer
    %s17 = sadd.s32 1, %s13
  $region7: #{conv_residual_conv.1} parent=0 // loop_footer_branch
    %12 = sbr.rel target = $region3
  $region8: #{conv_residual_conv.1} parent=0 // loop_exit
    _

</llo_original>
